<compile_context>
chip_gen: v5e
topology: v5e:2x2
jax: 0.10.0
libtpu: 0.0.40
codegen_flags: <defaults>
</compile_context>

<pallas_src>
import jax
import jax.numpy as jnp
from jax.experimental import pallas as pl
from jax.experimental.pallas import tpu as pltpu

BN_EPS = 1e-3


def _mul_conv_bn_kernel(scale_ref, x_ref, w_ref, gamma_ref, beta_ref, o_ref):
    # Broadcast multiply on x: (Cin, M) * (Cin, 1)  (VPU lane broadcast).
    xs = x_ref[...] * scale_ref[...]

    # 1x1 conv as an MXU matmul with the weight in its native (Cout, Cin)
    # layout (no transposed weight copy):
    #   (Cout_blk, Cin) @ (Cin, M) -> (Cout_blk, M), f32 accumulation.
    y = jnp.dot(w_ref[...], xs, preferred_element_type=jnp.float32)

    # BatchNorm2d forward with training batch stats: per-output-channel
    # moments over M = N*H*W (lane-axis XLU reductions).  Two-pass variance
    # (centered) for numerical robustness; biased variance as used by the
    # forward normalization.  gamma/beta folded into one scale/shift.
    inv_m = 1.0 / y.shape[1]
    mean = jnp.sum(y, axis=1, keepdims=True) * inv_m              # (Cout_blk, 1)
    d = y - mean
    var = jnp.sum(d * d, axis=1, keepdims=True) * inv_m           # (Cout_blk, 1)
    a = gamma_ref[...] * jax.lax.rsqrt(var + BN_EPS)              # (Cout_blk, 1)
    o_ref[...] = (d * a + beta_ref[...]).astype(o_ref.dtype)


def mul_conv_bn(x553, x548, w, gamma, beta, *, cout_block=None):
    """x553: (1,Cin,1,1), x548: (N,Cin,H,W), w: (Cout,Cin,1,1), gamma/beta: (Cout,)."""
    n, cin, h, wd = x548.shape
    cout = w.shape[0]
    m = n * h * wd

    # Channels-first 2-D views.  For N == 1 these transposes only move a
    # size-1 dimension, so XLA lowers them as free reshapes (no data movement).
    x_cm = jnp.transpose(x548, (1, 0, 2, 3)).reshape(cin, m)   # (Cin, M)
    scale_c = x553.reshape(cin, 1)                             # (Cin, 1)
    w2d = w.reshape(cout, cin)                                 # (Cout, Cin) — no .T
    gamma2d = gamma.reshape(cout, 1)                           # (Cout, 1)
    beta2d = beta.reshape(cout, 1)                             # (Cout, 1)

    if cout_block is None:
        # Split Cout into 2 sublane-aligned blocks: megacore parallelism on
        # v7x, DMA/compute overlap on single-TC chips.  Last block is partial
        # (masked) when cout is not a multiple of the block.
        cout_block = max(8, ((cout + 1) // 2 + 7) // 8 * 8)
    n_blocks = pl.cdiv(cout, cout_block)

    flops = 2 * cout * cin * m
    bytes_accessed = 4 * (cin * m + cin + cout * cin + 2 * cout + cout * m)

    out_cm = pl.pallas_call(
        _mul_conv_bn_kernel,
        out_shape=jax.ShapeDtypeStruct((cout, m), jnp.float32),
        grid=(n_blocks,),
        in_specs=[
            pl.BlockSpec((cin, 1), lambda i: (0, 0)),           # scale  (Cin, 1)
            pl.BlockSpec((cin, m), lambda i: (0, 0)),           # x      (Cin, M)
            pl.BlockSpec((cout_block, cin), lambda i: (i, 0)),  # weight (Cout_blk, Cin)
            pl.BlockSpec((cout_block, 1), lambda i: (i, 0)),    # gamma  (Cout_blk, 1)
            pl.BlockSpec((cout_block, 1), lambda i: (i, 0)),    # beta   (Cout_blk, 1)
        ],
        out_specs=pl.BlockSpec((cout_block, m), lambda i: (i, 0)),
        compiler_params=pltpu.CompilerParams(
            dimension_semantics=("parallel",)),
        cost_estimate=pl.CostEstimate(
            flops=flops, transcendentals=cout, bytes_accessed=bytes_accessed),
    )(scale_c, x_cm, w2d, gamma2d, beta2d)

    # (Cout, M) -> (N, Cout, H, W).  For N == 1 this is again a free reshape.
    return jnp.transpose(out_cm.reshape(cout, n, h, wd), (1, 0, 2, 3))


def _reference(x553, x548, w, gamma, beta):
    """Pure-JAX reference mirroring the PyTorch forward (train-mode BN)."""
    x = x553 * x548
    n, cin, h, wd = x548.shape
    cout = w.shape[0]
    x2d = jnp.transpose(x, (0, 2, 3, 1)).reshape(-1, cin)
    y = jnp.dot(x2d, w.reshape(cout, cin).T, preferred_element_type=jnp.float32)
    mean = jnp.mean(y, axis=0, keepdims=True)
    var = jnp.mean((y - mean) ** 2, axis=0, keepdims=True)
    out = (y - mean) / jnp.sqrt(var + BN_EPS) * gamma[None, :] + beta[None, :]
    return jnp.transpose(out.reshape(n, h, wd, cout), (0, 3, 1, 2))


if __name__ == "__main__":
    N, CIN, H, W = 1, 2064, 7, 7
    COUT = 344

    key = jax.random.PRNGKey(0)
    k1, k2, k3, k4, k5 = jax.random.split(key, 5)

    x548 = jax.random.normal(k1, (N, CIN, H, W), dtype=jnp.float32)
    x553 = jax.random.normal(k2, (1, CIN, 1, 1), dtype=jnp.float32)

    # Deterministic parameter init (synthetic, not a checkpoint load).
    w = jax.random.normal(k3, (COUT, CIN, 1, 1), dtype=jnp.float32) * 0.02
    gamma = 1.0 + 0.1 * jax.random.normal(k4, (COUT,), dtype=jnp.float32)
    beta = 0.1 * jax.random.normal(k5, (COUT,), dtype=jnp.float32)

    out = mul_conv_bn(x553, x548, w, gamma, beta)
    out = jax.block_until_ready(out)

    ref = _reference(x553, x548, w, gamma, beta)
    assert out.shape == (N, COUT, H, W), out.shape
    assert jnp.allclose(out, ref, atol=1e-3, rtol=1e-3), float(
        jnp.max(jnp.abs(out - ref))
    )

    print("KERNEL_OK")
</pallas_src>

<mosaic_0001>
module attributes {stable_mosaic.version = 11 : i64} {
  func.func @_mul_conv_bn_kernel(%arg0: i32, %arg1: memref<2064x1xf32, #tpu.memory_space<vmem>>, %arg2: memref<2064x49xf32, #tpu.memory_space<vmem>>, %arg3: memref<176x2064xf32, #tpu.memory_space<vmem>>, %arg4: memref<176x1xf32, #tpu.memory_space<vmem>>, %arg5: memref<176x1xf32, #tpu.memory_space<vmem>>, %arg6: memref<176x49xf32, #tpu.memory_space<vmem>>) attributes {dimension_semantics = [#tpu.dimension_semantics<parallel>], iteration_bounds = array<i64: 2>, scalar_prefetch = 0 : i64, scratch_operands = 0 : i64, tpu.core_type = #tpu.core_type<tc>, window_params = [{pipeline_mode = #tpu.pipeline_mode<synchronous>, transform_indices = @transform_0, window_bounds = array<i64: 2064, 1>}, {pipeline_mode = #tpu.pipeline_mode<synchronous>, transform_indices = @transform_1, window_bounds = array<i64: 2064, 49>}, {transform_indices = @transform_2, window_bounds = array<i64: 176, 2064>}, {transform_indices = @transform_3, window_bounds = array<i64: 176, 1>}, {transform_indices = @transform_4, window_bounds = array<i64: 176, 1>}, {transform_indices = @transform_5, window_bounds = array<i64: 176, 49>}]} {
    %c0 = arith.constant 0 : index
    %c0_0 = arith.constant 0 : index
    %0 = vector.load %arg2[%c0, %c0_0] : memref<2064x49xf32, #tpu.memory_space<vmem>>, vector<2064x49xf32>
    %c0_1 = arith.constant 0 : index
    %c0_2 = arith.constant 0 : index
    %1 = vector.load %arg1[%c0_1, %c0_2] : memref<2064x1xf32, #tpu.memory_space<vmem>>, vector<2064x1xf32>
    %2 = vector.broadcast %1 : vector<2064x1xf32> to vector<2064x49xf32>
    %3 = arith.mulf %0, %2 : vector<2064x49xf32>
    %c0_3 = arith.constant 0 : index
    %c0_4 = arith.constant 0 : index
    %4 = vector.load %arg3[%c0_3, %c0_4] : memref<176x2064xf32, #tpu.memory_space<vmem>>, vector<176x2064xf32>
    %cst = arith.constant dense<0.000000e+00> : vector<176x49xf32>
    %5 = tpu.matmul %4, %3, %cst {dimension_numbers = #tpu.dot_dimension_numbers<[1], [0], [0], [1], [0, 0, 1, 1], [], []>} : vector<176x2064xf32>, vector<2064x49xf32>, vector<176x49xf32> -> vector<176x49xf32>
    %cst_5 = arith.constant dense<0.000000e+00> : vector<176xf32>
    %6 = vector.multi_reduction <add>, %5, %cst_5 [1] : vector<176x49xf32> to vector<176xf32>
    %7 = vector.shape_cast %6 : vector<176xf32> to vector<176x1xf32>
    %cst_6 = arith.constant 0.0204081628 : f32
    %8 = vector.broadcast %cst_6 : f32 to vector<176x1xf32>
    %9 = arith.mulf %7, %8 : vector<176x1xf32>
    %10 = vector.broadcast %9 : vector<176x1xf32> to vector<176x49xf32>
    %11 = arith.subf %5, %10 : vector<176x49xf32>
    %12 = arith.mulf %11, %11 : vector<176x49xf32>
    %cst_7 = arith.constant dense<0.000000e+00> : vector<176xf32>
    %13 = vector.multi_reduction <add>, %12, %cst_7 [1] : vector<176x49xf32> to vector<176xf32>
    %14 = vector.shape_cast %13 : vector<176xf32> to vector<176x1xf32>
    %cst_8 = arith.constant 0.0204081628 : f32
    %15 = vector.broadcast %cst_8 : f32 to vector<176x1xf32>
    %16 = arith.mulf %14, %15 : vector<176x1xf32>
    %c0_9 = arith.constant 0 : index
    %c0_10 = arith.constant 0 : index
    %17 = vector.load %arg4[%c0_9, %c0_10] : memref<176x1xf32, #tpu.memory_space<vmem>>, vector<176x1xf32>
    %cst_11 = arith.constant 1.000000e-03 : f32
    %18 = vector.broadcast %cst_11 : f32 to vector<176x1xf32>
    %19 = arith.addf %16, %18 : vector<176x1xf32>
    %20 = math.rsqrt %19 : vector<176x1xf32>
    %21 = arith.mulf %17, %20 : vector<176x1xf32>
    %22 = vector.broadcast %21 : vector<176x1xf32> to vector<176x49xf32>
    %23 = arith.mulf %11, %22 : vector<176x49xf32>
    %c0_12 = arith.constant 0 : index
    %c0_13 = arith.constant 0 : index
    %24 = vector.load %arg5[%c0_12, %c0_13] : memref<176x1xf32, #tpu.memory_space<vmem>>, vector<176x1xf32>
    %25 = vector.broadcast %24 : vector<176x1xf32> to vector<176x49xf32>
    %26 = arith.addf %23, %25 : vector<176x49xf32>
    %c0_14 = arith.constant 0 : index
    %c0_15 = arith.constant 0 : index
    %27 = vector.load %arg6[%c0_14, %c0_15] : memref<176x49xf32, #tpu.memory_space<vmem>>, vector<176x49xf32>
    tpu.vector_store %arg6[%c0_14, %c0_15], %26 {strides = array<i32>} : memref<176x49xf32, #tpu.memory_space<vmem>>, vector<176x49xf32>,
    return
  }
  func.func @transform_0(%arg0: i32) -> (i32, i32) {
    %c0_i32 = arith.constant 0 : i32
    %c0_i32_0 = arith.constant 0 : i32
    %c0_i32_1 = arith.constant 0 : i32
    return %c0_i32, %c0_i32_0 : i32, i32
  }
  func.func @transform_1(%arg0: i32) -> (i32, i32) {
    %c0_i32 = arith.constant 0 : i32
    %c0_i32_0 = arith.constant 0 : i32
    %c0_i32_1 = arith.constant 0 : i32
    return %c0_i32, %c0_i32_0 : i32, i32
  }
  func.func @transform_2(%arg0: i32) -> (i32, i32) {
    %c0_i32 = arith.constant 0 : i32
    %c0_i32_0 = arith.constant 0 : i32
    return %arg0, %c0_i32 : i32, i32
  }
  func.func @transform_3(%arg0: i32) -> (i32, i32) {
    %c0_i32 = arith.constant 0 : i32
    %c0_i32_0 = arith.constant 0 : i32
    return %arg0, %c0_i32 : i32, i32
  }
  func.func @transform_4(%arg0: i32) -> (i32, i32) {
    %c0_i32 = arith.constant 0 : i32
    %c0_i32_0 = arith.constant 0 : i32
    return %arg0, %c0_i32 : i32, i32
  }
  func.func @transform_5(%arg0: i32) -> (i32, i32) {
    %c0_i32 = arith.constant 0 : i32
    %c0_i32_0 = arith.constant 0 : i32
    return %arg0, %c0_i32 : i32, i32
  }
}

</mosaic_0001>

<llo_original>
// kernel: tpu_custom_call.1
$region0: #{tpu_custom_call.1}
  #allocation0 [shape = 'u32[]', space=smem, size = 0x4, offset = 0x4, fixed_abs, tag = 'smem constant byte address 0x4 - core index']
  #allocation1 [shape = 'u32[72,128]{1,0:T(1,128)}', space=vmem, size = 0x9000, scoped, tag = 'internal scratch']
  %s0 = inlined_call_operand.vmem [shape: f32[2064,1], index: 0, kind: input, shape index: {}]
  %s1 = inlined_call_operand.vmem [shape: f32[2064,49], index: 1, kind: input, shape index: {}]
  %s2 = inlined_call_operand.hbm [shape: f32[344,2064], index: 2, kind: input, shape index: {}]
  %s3 = inlined_call_operand.vmem [shape: f32[344,1], index: 3, kind: input, shape index: {}]
  %s4 = inlined_call_operand.vmem [shape: f32[344,1], index: 4, kind: input, shape index: {}]
  %s5 = inlined_call_operand.vmem [shape: f32[344,49], index: 5, kind: output, shape index: {}]
  %s6 = sld [smem:[#allocation0]]
  $region105: #{tpu_custom_call.1} parent=0
    _
  %s8 = ssub.s32 1, %s6
  %s9 = scalar_select 0, %s8, %s6
  $region1: #{tpu_custom_call.1} parent=0
    #allocation2 [shape = 'u8[3063808]{0}', space=vmem, size = 0x2ec000, scoped, tag = 'input window, operand 2']
    #allocation3 [shape = 's32[2]{0}', space=sflag, size = 0x8, scoped, tag = 'scoped memory for tpu_custom_call.1']
    #allocation4 [shape = 'u8[180224]{0}', space=vmem, size = 0x2c000, scoped, tag = 'output window, operand 0']
    %10 = vsyncpa [#allocation3], 0
    %s11 = scalar_lea.sflag [#allocation3], 1
    %12 = vsyncpa %s11, 0
    loop: start=0, step=1, limit=4
    $region2: #{tpu_custom_call.1} parent=1 // loop_pre_header
      _
    $region3: #{tpu_custom_call.1} parent=1 // loop_header
      %s14 = sphi 0, %s18
      %p15 = scmp.ge.s32.totalorder %s14, 4
      %s22 = sphi 0, %s22
      %s24 = sphi 0, %s22
      %s25 = sphi 0, %s24
      %s39 = sphi 0, %s25
      %s43 = sphi 0, %s43
      %s45 = sphi 0, %s43
      %s46 = sphi 0, %s45
      %s60 = sphi 0, %s46
      %s66 = sphi 0, %s68
      %s69 = sphi 0, %s66
      %s70 = sphi 0, %s69
      %s86 = sphi 0, %s70
      %s92 = sphi 0, %s94
      %s95 = sphi 0, %s92
      %s96 = sphi 0, %s95
      %s112 = sphi 0, %s96
      %s118 = sphi 0, %s120
      %s121 = sphi 0, %s118
      %s122 = sphi 0, %s121
      %s138 = sphi 0, %s122
      %s144 = sphi 0, %s146
      %s147 = sphi 0, %s144
      %s148 = sphi 0, %s147
      %s164 = sphi 0, %s148
    $region4: #{tpu_custom_call.1} parent=1 // loop_header_branch
      %17 = sbr.rel (%p15) target = $region8
    $region5: #{tpu_custom_call.1} parent=1 // loop_body
      %s19 = ssub.s32 %s14, 1
      %s20 = ssub.s32 %s14, 2
      %s21 = sadd.s32 %s14, 1
      %s23 = sadd.s32 %s22, 1
      %p26 = scmp.eq.s32.totalorder %s14, 1
      %p27 = scmp.ne.s32.totalorder %s22, %s24
      %p28 = scmp.eq.s32.totalorder %s14, 0
      %p29 = por %p27, %p28
      %p30 = scmp.ne.s32.totalorder %s22, %s24
      %p31 = scmp.eq.s32.totalorder %s19, 1
      %p32 = por %p30, %p31
      %p33 = scmp.ne.s32.totalorder %s24, %s25
      %p34 = scmp.eq.s32.totalorder %s19, 0
      %p35 = por %p33, %p34
      %p36 = scmp.ne.s32.totalorder %s24, %s25
      %p37 = scmp.eq.s32.totalorder %s20, 1
      %p38 = por %p36, %p37
      %p40 = scmp.ne.s32.totalorder %s25, %s39
      %p41 = scmp.eq.s32.totalorder %s20, 0
      %p42 = por %p40, %p41
      %s44 = sadd.s32 %s43, 1
      %p47 = scmp.eq.s32.totalorder %s14, 1
      %p48 = scmp.ne.s32.totalorder %s43, %s45
      %p49 = scmp.eq.s32.totalorder %s14, 0
      %p50 = por %p48, %p49
      %p51 = scmp.ne.s32.totalorder %s43, %s45
      %p52 = scmp.eq.s32.totalorder %s19, 1
      %p53 = por %p51, %p52
      %p54 = scmp.ne.s32.totalorder %s45, %s46
      %p55 = scmp.eq.s32.totalorder %s19, 0
      %p56 = por %p54, %p55
      %p57 = scmp.ne.s32.totalorder %s45, %s46
      %p58 = scmp.eq.s32.totalorder %s20, 1
      %p59 = por %p57, %p58
      %p61 = scmp.ne.s32.totalorder %s46, %s60
      %p62 = scmp.eq.s32.totalorder %s20, 0
      %p63 = por %p61, %p62
      %s64 = ssub.s32 %s14, %s21
      %p65 = scmp.eq.s32.totalorder %s64, 0
      %s67 = sadd.s32 %s66, 1
      %s68 = scalar_select %p65, %s66, %s67
      %p71 = pneg %p65
      %p72 = scmp.eq.s32.totalorder %s14, 1
      %p73 = por %p71, %p72
      %p74 = scmp.ne.s32.totalorder %s66, %s69
      %p75 = scmp.eq.s32.totalorder %s14, 0
      %p76 = por %p74, %p75
      %p77 = scmp.ne.s32.totalorder %s66, %s69
      %p78 = scmp.eq.s32.totalorder %s19, 1
      %p79 = por %p77, %p78
      %p80 = scmp.ne.s32.totalorder %s69, %s70
      %p81 = scmp.eq.s32.totalorder %s19, 0
      %p82 = por %p80, %p81
      %p83 = scmp.ne.s32.totalorder %s69, %s70
      %p84 = scmp.eq.s32.totalorder %s20, 1
      %p85 = por %p83, %p84
      %p87 = scmp.ne.s32.totalorder %s70, %s86
      %p88 = scmp.eq.s32.totalorder %s20, 0
      %p89 = por %p87, %p88
      %s90 = ssub.s32 %s14, %s21
      %p91 = scmp.eq.s32.totalorder %s90, 0
      %s93 = sadd.s32 %s92, 1
      %s94 = scalar_select %p91, %s92, %s93
      %p97 = pneg %p91
      %p98 = scmp.eq.s32.totalorder %s14, 1
      %p99 = por %p97, %p98
      %p100 = scmp.ne.s32.totalorder %s92, %s95
      %p101 = scmp.eq.s32.totalorder %s14, 0
      %p102 = por %p100, %p101
      %p103 = scmp.ne.s32.totalorder %s92, %s95
      %p104 = scmp.eq.s32.totalorder %s19, 1
      %p105 = por %p103, %p104
      %p106 = scmp.ne.s32.totalorder %s95, %s96
      %p107 = scmp.eq.s32.totalorder %s19, 0
      %p108 = por %p106, %p107
      %p109 = scmp.ne.s32.totalorder %s95, %s96
      %p110 = scmp.eq.s32.totalorder %s20, 1
      %p111 = por %p109, %p110
      %p113 = scmp.ne.s32.totalorder %s96, %s112
      %p114 = scmp.eq.s32.totalorder %s20, 0
      %p115 = por %p113, %p114
      %s116 = ssub.s32 %s14, %s21
      %p117 = scmp.eq.s32.totalorder %s116, 0
      %s119 = sadd.s32 %s118, 1
      %s120 = scalar_select %p117, %s118, %s119
      %p123 = pneg %p117
      %p124 = scmp.eq.s32.totalorder %s14, 1
      %p125 = por %p123, %p124
      %p126 = scmp.ne.s32.totalorder %s118, %s121
      %p127 = scmp.eq.s32.totalorder %s14, 0
      %p128 = por %p126, %p127
      %p129 = scmp.ne.s32.totalorder %s118, %s121
      %p130 = scmp.eq.s32.totalorder %s19, 1
      %p131 = por %p129, %p130
      %p132 = scmp.ne.s32.totalorder %s121, %s122
      %p133 = scmp.eq.s32.totalorder %s19, 0
      %p134 = por %p132, %p133
      %p135 = scmp.ne.s32.totalorder %s121, %s122
      %p136 = scmp.eq.s32.totalorder %s20, 1
      %p137 = por %p135, %p136
      %p139 = scmp.ne.s32.totalorder %s122, %s138
      %p140 = scmp.eq.s32.totalorder %s20, 0
      %p141 = por %p139, %p140
      %s142 = ssub.s32 %s14, %s21
      %p143 = scmp.eq.s32.totalorder %s142, 0
      %s145 = sadd.s32 %s144, 1
      %s146 = scalar_select %p143, %s144, %s145
      %p149 = pneg %p143
      %p150 = scmp.eq.s32.totalorder %s14, 1
      %p151 = por %p149, %p150
      %p152 = scmp.ne.s32.totalorder %s144, %s147
      %p153 = scmp.eq.s32.totalorder %s14, 0
      %p154 = por %p152, %p153
      %p155 = scmp.ne.s32.totalorder %s144, %s147
      %p156 = scmp.eq.s32.totalorder %s19, 1
      %p157 = por %p155, %p156
      %p158 = scmp.ne.s32.totalorder %s147, %s148
      %p159 = scmp.eq.s32.totalorder %s19, 0
      %p160 = por %p158, %p159
      %p161 = scmp.ne.s32.totalorder %s147, %s148
      %p162 = scmp.eq.s32.totalorder %s20, 1
      %p163 = por %p161, %p162
      %p165 = scmp.ne.s32.totalorder %s148, %s164
      %p166 = scmp.eq.s32.totalorder %s20, 0
      %p167 = por %p165, %p166
      %p168 = scmp.le.s32.totalorder 1, %s14
      %p169 = scmp.lt.s32.totalorder %s14, 3
      %p170 = pnand %p168, %p169
      %p171 = pneg %p170
      // Predicated region
      $region9: #{tpu_custom_call.1} parent=5 // pred_check
        _
      $region10: #{tpu_custom_call.1} parent=5 // pred_check_branch
        %173 = sbr.rel (%p170) target = $region12
      $region11: #{tpu_custom_call.1} parent=5 // pred_region
        %s174 = ssub.s32 %s14, 1
        // Predicated region
        $region13: #{tpu_custom_call.1} parent=11 // pred_check
          %p175 = pneg %p35
        $region14: #{tpu_custom_call.1} parent=11 // pred_check_branch
          %177 = sbr.rel (%p175) target = $region16
        $region15: #{tpu_custom_call.1} parent=11 // pred_region
          _
        $region16: #{tpu_custom_call.1} parent=11 // pred_fallthru
          _
        // Predicated region
        $region17: #{tpu_custom_call.1} parent=11 // pred_check
          %p178 = pneg %p56
        $region18: #{tpu_custom_call.1} parent=11 // pred_check_branch
          %180 = sbr.rel (%p178) target = $region20
        $region19: #{tpu_custom_call.1} parent=11 // pred_region
          _
        $region20: #{tpu_custom_call.1} parent=11 // pred_fallthru
          _
      $region12: #{tpu_custom_call.1} parent=5 // pred_fallthru
        _
      %p181 = scmp.lt.s32.totalorder %s14, 2
      // Predicated region
      $region21: #{tpu_custom_call.1} parent=5 // pred_check
        %p182 = pneg %p181
      $region22: #{tpu_custom_call.1} parent=5 // pred_check_branch
        %184 = sbr.rel (%p182) target = $region24
      $region23: #{tpu_custom_call.1} parent=5 // pred_region
        // Predicated region
        $region25: #{tpu_custom_call.1} parent=23 // pred_check
          %p185 = pneg %p76
        $region26: #{tpu_custom_call.1} parent=23 // pred_check_branch
          %187 = sbr.rel (%p185) target = $region28
        $region27: #{tpu_custom_call.1} parent=23 // pred_region
          %s188 = sand.u32 %s66, 1
          %s189 = scalar_lea.sflag [#allocation3], %s188
          %s190 = sand.u32 %s66, 1
          %s191 = smul.addr %s190, 2992
          %s192 = scalar_lea.vmem [#allocation2], %s191
          %s193 = smul.u32 22, %s14
          %s194 = ssub.s32 43, %s193
          %p195 = scmp.lt.s32.totalorder %s194, 22
          %s196 = scalar_select %p195, %s194, 22
          %s197 = smul.u32 8, %s196
          %s198 = smul.u32 %s197, 17
          %s199 = ssub.s32 2992, %s198
          %s200 = sshll.u32 %s199, 4
          %201 = vsyncadd %s189, %s200
          %p202 = scmp.ne.s32.totalorder 0, %s198
          %s203 = smul.addr %s193, 17
          %s204 = smul.addr %s203, 8
          %s205 = scalar_lea.hbm %s2, %s204
          %s206 = smul.u32 136, %s196
          %s207 = sshll.u32 %s205, 4
          %s208 = int_to_ptr.hbm [resolvable:$true] %s207
          %s209 = sshll.u32 %s192, 4
          %s210 = int_to_ptr.vmem [resolvable:$true] %s209
          %s211 = sshll.u32 %s206, 4
          %215 = dma.hbm_to_vmem [thread:$0]  (%p202), %s208, %s211, %s210, %s189, 2176, 2176, 136
        $region28: #{tpu_custom_call.1} parent=23 // pred_fallthru
          _
        // Predicated region
        $region29: #{tpu_custom_call.1} parent=23 // pred_check
          %p216 = pneg %p102
        $region30: #{tpu_custom_call.1} parent=23 // pred_check_branch
          %218 = sbr.rel (%p216) target = $region32
        $region31: #{tpu_custom_call.1} parent=23 // pred_region
          %s219 = smul.u32 22, %s14
          %s220 = ssub.s32 43, %s219
          %p221 = scmp.lt.s32.totalorder %s220, 22
          %s222 = scalar_select %p221, %s220, 22
          %s223 = smul.u32 8, %s222
          %p224 = scmp.lt.s32.totalorder %s219, 42
          %s225 = scalar_select %p224, %s219, 42
          %s226 = smul.addr %s225, 8
          %s227 = scalar_lea.vmem %s3, %s226
          %s228 = smul.u32 22, %s14
          %s229 = ssub.s32 43, %s228
          %p230 = scmp.lt.s32.totalorder %s229, 22
          %s231 = scalar_select %p230, %s229, 22
          %s232 = smul.u32 8, %s231
        $region32: #{tpu_custom_call.1} parent=23 // pred_fallthru
          _
        // Predicated region
        $region33: #{tpu_custom_call.1} parent=23 // pred_check
          %p233 = pneg %p128
        $region34: #{tpu_custom_call.1} parent=23 // pred_check_branch
          %235 = sbr.rel (%p233) target = $region36
        $region35: #{tpu_custom_call.1} parent=23 // pred_region
          %s236 = smul.u32 22, %s14
          %s237 = ssub.s32 43, %s236
          %p238 = scmp.lt.s32.totalorder %s237, 22
          %s239 = scalar_select %p238, %s237, 22
          %s240 = smul.u32 8, %s239
          %p241 = scmp.lt.s32.totalorder %s236, 42
          %s242 = scalar_select %p241, %s236, 42
          %s243 = smul.addr %s242, 8
          %s244 = scalar_lea.vmem %s4, %s243
          %s245 = smul.u32 22, %s14
          %s246 = ssub.s32 43, %s245
          %p247 = scmp.lt.s32.totalorder %s246, 22
          %s248 = scalar_select %p247, %s246, 22
          %s249 = smul.u32 8, %s248
        $region36: #{tpu_custom_call.1} parent=23 // pred_fallthru
          _
      $region24: #{tpu_custom_call.1} parent=5 // pred_fallthru
        _
      %p250 = scmp.le.s32.totalorder 1, %s14
      %p251 = scmp.lt.s32.totalorder %s14, 3
      %p252 = pnand %p250, %p251
      %p253 = pneg %p252
      // Predicated region
      $region37: #{tpu_custom_call.1} parent=5 // pred_check
        _
      $region38: #{tpu_custom_call.1} parent=5 // pred_check_branch
        %255 = sbr.rel (%p252) target = $region40
      $region39: #{tpu_custom_call.1} parent=5 // pred_region
        %s256 = ssub.s32 %s14, 1
        %s257 = sand.u32 %s69, 1
        %s258 = scalar_lea.sflag [#allocation3], %s257
        %s259 = sand.u32 %s69, 1
        %s260 = smul.addr %s259, 2992
        %s261 = scalar_lea.vmem [#allocation2], %s260
        // Predicated region
        $region41: #{tpu_custom_call.1} parent=39 // pred_check
          %p262 = pneg %p82
        $region42: #{tpu_custom_call.1} parent=39 // pred_check_branch
          %264 = sbr.rel (%p262) target = $region44
        $region43: #{tpu_custom_call.1} parent=39 // pred_region
          %266 = dma.done %s258, 47872
        $region44: #{tpu_custom_call.1} parent=39 // pred_fallthru
          _
        %p267 = pneg %p35
        %p268 = pneg %p32
        %p269 = pneg %p56
        %p270 = pneg %p53
        %s271 = sand.u32 %s69, 1
        %s272 = scalar_lea.sflag [#allocation3], %s271
        %s273 = sand.u32 %s69, 1
        %s274 = smul.addr %s273, 2992
        %s275 = scalar_lea.vmem [#allocation2], %s274
        %p276 = pneg %p82
        %p277 = pneg %p79
        %s278 = smul.u32 22, %s19
        %s279 = ssub.s32 43, %s278
        %p280 = scmp.lt.s32.totalorder %s279, 22
        %s281 = scalar_select %p280, %s279, 22
        %s282 = smul.u32 8, %s281
        %p283 = scmp.lt.s32.totalorder %s278, 42
        %s284 = scalar_select %p283, %s278, 42
        %s285 = smul.addr %s284, 8
        %s286 = scalar_lea.vmem %s3, %s285
        %p287 = pneg %p108
        %p288 = pneg %p105
        %s289 = smul.u32 22, %s19
        %s290 = ssub.s32 43, %s289
        %p291 = scmp.lt.s32.totalorder %s290, 22
        %s292 = scalar_select %p291, %s290, 22
        %s293 = smul.u32 8, %s292
        %p294 = scmp.lt.s32.totalorder %s289, 42
        %s295 = scalar_select %p294, %s289, 42
        %s296 = smul.addr %s295, 8
        %s297 = scalar_lea.vmem %s4, %s296
        %p298 = pneg %p134
        %p299 = pneg %p131
        %p300 = pneg %p160
        %p301 = pneg %p157
        %s302 = sand.u32 %s147, 1
        %s303 = sand.u32 %s147, 1
        %s304 = smul.addr %s303, 176
        %s305 = scalar_lea.vmem [#allocation4], %s304
        %s306 = smul.u32 22, %s19
        %s307 = ssub.s32 43, %s306
        %p308 = scmp.lt.s32.totalorder %s307, 22
        %s309 = scalar_select %p308, %s307, 22
        %s310 = smul.u32 8, %s309
        %s311 = smul.u32 %s310, 17
        %s312 = smul.u32 22, %s19
        %s313 = ssub.s32 43, %s312
        %p314 = scmp.lt.s32.totalorder %s313, 22
        %s315 = scalar_select %p314, %s313, 22
        %s316 = smul.u32 8, %s315
        %p317 = scmp.lt.s32.totalorder %s312, 42
        %s318 = scalar_select %p317, %s312, 42
        %s319 = smul.addr %s318, 8
        %s320 = scalar_lea.vmem %s3, %s319
        %s321 = smul.u32 22, %s19
        %s322 = ssub.s32 43, %s321
        %p323 = scmp.lt.s32.totalorder %s322, 22
        %s324 = scalar_select %p323, %s322, 22
        %s325 = smul.u32 8, %s324
        %s326 = smul.u32 22, %s19
        %s327 = ssub.s32 43, %s326
        %p328 = scmp.lt.s32.totalorder %s327, 22
        %s329 = scalar_select %p328, %s327, 22
        %s330 = smul.u32 8, %s329
        %p331 = scmp.lt.s32.totalorder %s326, 42
        %s332 = scalar_select %p331, %s326, 42
        %s333 = smul.addr %s332, 8
        %s334 = scalar_lea.vmem %s4, %s333
        %s335 = smul.u32 22, %s19
        %s336 = ssub.s32 43, %s335
        %p337 = scmp.lt.s32.totalorder %s336, 22
        %s338 = scalar_select %p337, %s336, 22
        %s339 = smul.u32 8, %s338
        %s340 = smul.u32 22, %s19
        %s341 = ssub.s32 43, %s340
        %p342 = scmp.lt.s32.totalorder %s341, 22
        %s343 = scalar_select %p342, %s341, 22
        %s344 = smul.u32 8, %s343
        %v345 = vld [vmem:[%s1] sm:$0xff]
        %v346 = vld [vmem:[%s1 + $0x8] sm:$0xff]
        %v347 = vld [vmem:[%s1 + $0x10] sm:$0xff]
        %v348 = vld [vmem:[%s1 + $0x18] sm:$0xff]
        %v349 = vld [vmem:[%s1 + $0x20] sm:$0xff]
        %v350 = vld [vmem:[%s1 + $0x28] sm:$0xff]
        %v351 = vld [vmem:[%s1 + $0x30] sm:$0xff]
        %v352 = vld [vmem:[%s1 + $0x38] sm:$0xff]
        %v353 = vld [vmem:[%s1 + $0x40] sm:$0xff]
        %v354 = vld [vmem:[%s1 + $0x48] sm:$0xff]
        %v355 = vld [vmem:[%s1 + $0x50] sm:$0xff]
        %v356 = vld [vmem:[%s1 + $0x58] sm:$0xff]
        %v357 = vld [vmem:[%s1 + $0x60] sm:$0xff]
        %v358 = vld [vmem:[%s1 + $0x68] sm:$0xff]
        %v359 = vld [vmem:[%s1 + $0x70] sm:$0xff]
        %v360 = vld [vmem:[%s1 + $0x78] sm:$0xff]
        %v361 = vld [vmem:[%s1 + $0x80] sm:$0xff]
        %v362 = vld [vmem:[%s1 + $0x88] sm:$0xff]
        %v363 = vld [vmem:[%s1 + $0x90] sm:$0xff]
        %v364 = vld [vmem:[%s1 + $0x98] sm:$0xff]
        %v365 = vld [vmem:[%s1 + $0xa0] sm:$0xff]
        %v366 = vld [vmem:[%s1 + $0xa8] sm:$0xff]
        %v367 = vld [vmem:[%s1 + $0xb0] sm:$0xff]
        %v368 = vld [vmem:[%s1 + $0xb8] sm:$0xff]
        %v369 = vld [vmem:[%s1 + $0xc0] sm:$0xff]
        %v370 = vld [vmem:[%s1 + $0xc8] sm:$0xff]
        %v371 = vld [vmem:[%s1 + $0xd0] sm:$0xff]
        %v372 = vld [vmem:[%s1 + $0xd8] sm:$0xff]
        %v373 = vld [vmem:[%s1 + $0xe0] sm:$0xff]
        %v374 = vld [vmem:[%s1 + $0xe8] sm:$0xff]
        %v375 = vld [vmem:[%s1 + $0xf0] sm:$0xff]
        %v376 = vld [vmem:[%s1 + $0xf8] sm:$0xff]
        %v377 = vld [vmem:[%s1 + $0x100] sm:$0xff]
        %v378 = vld [vmem:[%s1 + $0x108] sm:$0xff]
        %v379 = vld [vmem:[%s1 + $0x110] sm:$0xff]
        %v380 = vld [vmem:[%s1 + $0x118] sm:$0xff]
        %v381 = vld [vmem:[%s1 + $0x120] sm:$0xff]
        %v382 = vld [vmem:[%s1 + $0x128] sm:$0xff]
        %v383 = vld [vmem:[%s1 + $0x130] sm:$0xff]
        %v384 = vld [vmem:[%s1 + $0x138] sm:$0xff]
        %v385 = vld [vmem:[%s1 + $0x140] sm:$0xff]
        %v386 = vld [vmem:[%s1 + $0x148] sm:$0xff]
        %v387 = vld [vmem:[%s1 + $0x150] sm:$0xff]
        %v388 = vld [vmem:[%s1 + $0x158] sm:$0xff]
        %v389 = vld [vmem:[%s1 + $0x160] sm:$0xff]
        %v390 = vld [vmem:[%s1 + $0x168] sm:$0xff]
        %v391 = vld [vmem:[%s1 + $0x170] sm:$0xff]
        %v392 = vld [vmem:[%s1 + $0x178] sm:$0xff]
        %v393 = vld [vmem:[%s1 + $0x180] sm:$0xff]
        %v394 = vld [vmem:[%s1 + $0x188] sm:$0xff]
        %v395 = vld [vmem:[%s1 + $0x190] sm:$0xff]
        %v396 = vld [vmem:[%s1 + $0x198] sm:$0xff]
        %v397 = vld [vmem:[%s1 + $0x1a0] sm:$0xff]
        %v398 = vld [vmem:[%s1 + $0x1a8] sm:$0xff]
        %v399 = vld [vmem:[%s1 + $0x1b0] sm:$0xff]
        %v400 = vld [vmem:[%s1 + $0x1b8] sm:$0xff]
        %v401 = vld [vmem:[%s1 + $0x1c0] sm:$0xff]
        %v402 = vld [vmem:[%s1 + $0x1c8] sm:$0xff]
        %v403 = vld [vmem:[%s1 + $0x1d0] sm:$0xff]
        %v404 = vld [vmem:[%s1 + $0x1d8] sm:$0xff]
        %v405 = vld [vmem:[%s1 + $0x1e0] sm:$0xff]
        %v406 = vld [vmem:[%s1 + $0x1e8] sm:$0xff]
        %v407 = vld [vmem:[%s1 + $0x1f0] sm:$0xff]
        %v408 = vld [vmem:[%s1 + $0x1f8] sm:$0xff]
        %v409 = vld [vmem:[%s1 + $0x200] sm:$0xff]
        %v410 = vld [vmem:[%s1 + $0x208] sm:$0xff]
        %v411 = vld [vmem:[%s1 + $0x210] sm:$0xff]
        %v412 = vld [vmem:[%s1 + $0x218] sm:$0xff]
        %v413 = vld [vmem:[%s1 + $0x220] sm:$0xff]
        %v414 = vld [vmem:[%s1 + $0x228] sm:$0xff]
        %v415 = vld [vmem:[%s1 + $0x230] sm:$0xff]
        %v416 = vld [vmem:[%s1 + $0x238] sm:$0xff]
        %v417 = vld [vmem:[%s1 + $0x240] sm:$0xff]
        %v418 = vld [vmem:[%s1 + $0x248] sm:$0xff]
        %v419 = vld [vmem:[%s1 + $0x250] sm:$0xff]
        %v420 = vld [vmem:[%s1 + $0x258] sm:$0xff]
        %v421 = vld [vmem:[%s1 + $0x260] sm:$0xff]
        %v422 = vld [vmem:[%s1 + $0x268] sm:$0xff]
        %v423 = vld [vmem:[%s1 + $0x270] sm:$0xff]
        %v424 = vld [vmem:[%s1 + $0x278] sm:$0xff]
        %v425 = vld [vmem:[%s1 + $0x280] sm:$0xff]
        %v426 = vld [vmem:[%s1 + $0x288] sm:$0xff]
        %v427 = vld [vmem:[%s1 + $0x290] sm:$0xff]
        %v428 = vld [vmem:[%s1 + $0x298] sm:$0xff]
        %v429 = vld [vmem:[%s1 + $0x2a0] sm:$0xff]
        %v430 = vld [vmem:[%s1 + $0x2a8] sm:$0xff]
        %v431 = vld [vmem:[%s1 + $0x2b0] sm:$0xff]
        %v432 = vld [vmem:[%s1 + $0x2b8] sm:$0xff]
        %v433 = vld [vmem:[%s1 + $0x2c0] sm:$0xff]
        %v434 = vld [vmem:[%s1 + $0x2c8] sm:$0xff]
        %v435 = vld [vmem:[%s1 + $0x2d0] sm:$0xff]
        %v436 = vld [vmem:[%s1 + $0x2d8] sm:$0xff]
        %v437 = vld [vmem:[%s1 + $0x2e0] sm:$0xff]
        %v438 = vld [vmem:[%s1 + $0x2e8] sm:$0xff]
        %v439 = vld [vmem:[%s1 + $0x2f0] sm:$0xff]
        %v440 = vld [vmem:[%s1 + $0x2f8] sm:$0xff]
        %v441 = vld [vmem:[%s1 + $0x300] sm:$0xff]
        %v442 = vld [vmem:[%s1 + $0x308] sm:$0xff]
        %v443 = vld [vmem:[%s1 + $0x310] sm:$0xff]
        %v444 = vld [vmem:[%s1 + $0x318] sm:$0xff]
        %v445 = vld [vmem:[%s1 + $0x320] sm:$0xff]
        %v446 = vld [vmem:[%s1 + $0x328] sm:$0xff]
        %v447 = vld [vmem:[%s1 + $0x330] sm:$0xff]
        %v448 = vld [vmem:[%s1 + $0x338] sm:$0xff]
        %v449 = vld [vmem:[%s1 + $0x340] sm:$0xff]
        %v450 = vld [vmem:[%s1 + $0x348] sm:$0xff]
        %v451 = vld [vmem:[%s1 + $0x350] sm:$0xff]
        %v452 = vld [vmem:[%s1 + $0x358] sm:$0xff]
        %v453 = vld [vmem:[%s1 + $0x360] sm:$0xff]
        %v454 = vld [vmem:[%s1 + $0x368] sm:$0xff]
        %v455 = vld [vmem:[%s1 + $0x370] sm:$0xff]
        %v456 = vld [vmem:[%s1 + $0x378] sm:$0xff]
        %v457 = vld [vmem:[%s1 + $0x380] sm:$0xff]
        %v458 = vld [vmem:[%s1 + $0x388] sm:$0xff]
        %v459 = vld [vmem:[%s1 + $0x390] sm:$0xff]
        %v460 = vld [vmem:[%s1 + $0x398] sm:$0xff]
        %v461 = vld [vmem:[%s1 + $0x3a0] sm:$0xff]
        %v462 = vld [vmem:[%s1 + $0x3a8] sm:$0xff]
        %v463 = vld [vmem:[%s1 + $0x3b0] sm:$0xff]
        %v464 = vld [vmem:[%s1 + $0x3b8] sm:$0xff]
        %v465 = vld [vmem:[%s1 + $0x3c0] sm:$0xff]
        %v466 = vld [vmem:[%s1 + $0x3c8] sm:$0xff]
        %v467 = vld [vmem:[%s1 + $0x3d0] sm:$0xff]
        %v468 = vld [vmem:[%s1 + $0x3d8] sm:$0xff]
        %v469 = vld [vmem:[%s1 + $0x3e0] sm:$0xff]
        %v470 = vld [vmem:[%s1 + $0x3e8] sm:$0xff]
        %v471 = vld [vmem:[%s1 + $0x3f0] sm:$0xff]
        %v472 = vld [vmem:[%s1 + $0x3f8] sm:$0xff]
        %v473 = vld [vmem:[%s1 + $0x400] sm:$0xff]
        %v474 = vld [vmem:[%s1 + $0x408] sm:$0xff]
        %v475 = vld [vmem:[%s1 + $0x410] sm:$0xff]
        %v476 = vld [vmem:[%s1 + $0x418] sm:$0xff]
        %v477 = vld [vmem:[%s1 + $0x420] sm:$0xff]
        %v478 = vld [vmem:[%s1 + $0x428] sm:$0xff]
        %v479 = vld [vmem:[%s1 + $0x430] sm:$0xff]
        %v480 = vld [vmem:[%s1 + $0x438] sm:$0xff]
        %v481 = vld [vmem:[%s1 + $0x440] sm:$0xff]
        %v482 = vld [vmem:[%s1 + $0x448] sm:$0xff]
        %v483 = vld [vmem:[%s1 + $0x450] sm:$0xff]
        %v484 = vld [vmem:[%s1 + $0x458] sm:$0xff]
        %v485 = vld [vmem:[%s1 + $0x460] sm:$0xff]
        %v486 = vld [vmem:[%s1 + $0x468] sm:$0xff]
        %v487 = vld [vmem:[%s1 + $0x470] sm:$0xff]
        %v488 = vld [vmem:[%s1 + $0x478] sm:$0xff]
        %v489 = vld [vmem:[%s1 + $0x480] sm:$0xff]
        %v490 = vld [vmem:[%s1 + $0x488] sm:$0xff]
        %v491 = vld [vmem:[%s1 + $0x490] sm:$0xff]
        %v492 = vld [vmem:[%s1 + $0x498] sm:$0xff]
        %v493 = vld [vmem:[%s1 + $0x4a0] sm:$0xff]
        %v494 = vld [vmem:[%s1 + $0x4a8] sm:$0xff]
        %v495 = vld [vmem:[%s1 + $0x4b0] sm:$0xff]
        %v496 = vld [vmem:[%s1 + $0x4b8] sm:$0xff]
        %v497 = vld [vmem:[%s1 + $0x4c0] sm:$0xff]
        %v498 = vld [vmem:[%s1 + $0x4c8] sm:$0xff]
        %v499 = vld [vmem:[%s1 + $0x4d0] sm:$0xff]
        %v500 = vld [vmem:[%s1 + $0x4d8] sm:$0xff]
        %v501 = vld [vmem:[%s1 + $0x4e0] sm:$0xff]
        %v502 = vld [vmem:[%s1 + $0x4e8] sm:$0xff]
        %v503 = vld [vmem:[%s1 + $0x4f0] sm:$0xff]
        %v504 = vld [vmem:[%s1 + $0x4f8] sm:$0xff]
        %v505 = vld [vmem:[%s1 + $0x500] sm:$0xff]
        %v506 = vld [vmem:[%s1 + $0x508] sm:$0xff]
        %v507 = vld [vmem:[%s1 + $0x510] sm:$0xff]
        %v508 = vld [vmem:[%s1 + $0x518] sm:$0xff]
        %v509 = vld [vmem:[%s1 + $0x520] sm:$0xff]
        %v510 = vld [vmem:[%s1 + $0x528] sm:$0xff]
        %v511 = vld [vmem:[%s1 + $0x530] sm:$0xff]
        %v512 = vld [vmem:[%s1 + $0x538] sm:$0xff]
        %v513 = vld [vmem:[%s1 + $0x540] sm:$0xff]
        %v514 = vld [vmem:[%s1 + $0x548] sm:$0xff]
        %v515 = vld [vmem:[%s1 + $0x550] sm:$0xff]
        %v516 = vld [vmem:[%s1 + $0x558] sm:$0xff]
        %v517 = vld [vmem:[%s1 + $0x560] sm:$0xff]
        %v518 = vld [vmem:[%s1 + $0x568] sm:$0xff]
        %v519 = vld [vmem:[%s1 + $0x570] sm:$0xff]
        %v520 = vld [vmem:[%s1 + $0x578] sm:$0xff]
        %v521 = vld [vmem:[%s1 + $0x580] sm:$0xff]
        %v522 = vld [vmem:[%s1 + $0x588] sm:$0xff]
        %v523 = vld [vmem:[%s1 + $0x590] sm:$0xff]
        %v524 = vld [vmem:[%s1 + $0x598] sm:$0xff]
        %v525 = vld [vmem:[%s1 + $0x5a0] sm:$0xff]
        %v526 = vld [vmem:[%s1 + $0x5a8] sm:$0xff]
        %v527 = vld [vmem:[%s1 + $0x5b0] sm:$0xff]
        %v528 = vld [vmem:[%s1 + $0x5b8] sm:$0xff]
        %v529 = vld [vmem:[%s1 + $0x5c0] sm:$0xff]
        %v530 = vld [vmem:[%s1 + $0x5c8] sm:$0xff]
        %v531 = vld [vmem:[%s1 + $0x5d0] sm:$0xff]
        %v532 = vld [vmem:[%s1 + $0x5d8] sm:$0xff]
        %v533 = vld [vmem:[%s1 + $0x5e0] sm:$0xff]
        %v534 = vld [vmem:[%s1 + $0x5e8] sm:$0xff]
        %v535 = vld [vmem:[%s1 + $0x5f0] sm:$0xff]
        %v536 = vld [vmem:[%s1 + $0x5f8] sm:$0xff]
        %v537 = vld [vmem:[%s1 + $0x600] sm:$0xff]
        %v538 = vld [vmem:[%s1 + $0x608] sm:$0xff]
        %v539 = vld [vmem:[%s1 + $0x610] sm:$0xff]
        %v540 = vld [vmem:[%s1 + $0x618] sm:$0xff]
        %v541 = vld [vmem:[%s1 + $0x620] sm:$0xff]
        %v542 = vld [vmem:[%s1 + $0x628] sm:$0xff]
        %v543 = vld [vmem:[%s1 + $0x630] sm:$0xff]
        %v544 = vld [vmem:[%s1 + $0x638] sm:$0xff]
        %v545 = vld [vmem:[%s1 + $0x640] sm:$0xff]
        %v546 = vld [vmem:[%s1 + $0x648] sm:$0xff]
        %v547 = vld [vmem:[%s1 + $0x650] sm:$0xff]
        %v548 = vld [vmem:[%s1 + $0x658] sm:$0xff]
        %v549 = vld [vmem:[%s1 + $0x660] sm:$0xff]
        %v550 = vld [vmem:[%s1 + $0x668] sm:$0xff]
        %v551 = vld [vmem:[%s1 + $0x670] sm:$0xff]
        %v552 = vld [vmem:[%s1 + $0x678] sm:$0xff]
        %v553 = vld [vmem:[%s1 + $0x680] sm:$0xff]
        %v554 = vld [vmem:[%s1 + $0x688] sm:$0xff]
        %v555 = vld [vmem:[%s1 + $0x690] sm:$0xff]
        %v556 = vld [vmem:[%s1 + $0x698] sm:$0xff]
        %v557 = vld [vmem:[%s1 + $0x6a0] sm:$0xff]
        %v558 = vld [vmem:[%s1 + $0x6a8] sm:$0xff]
        %v559 = vld [vmem:[%s1 + $0x6b0] sm:$0xff]
        %v560 = vld [vmem:[%s1 + $0x6b8] sm:$0xff]
        %v561 = vld [vmem:[%s1 + $0x6c0] sm:$0xff]
        %v562 = vld [vmem:[%s1 + $0x6c8] sm:$0xff]
        %v563 = vld [vmem:[%s1 + $0x6d0] sm:$0xff]
        %v564 = vld [vmem:[%s1 + $0x6d8] sm:$0xff]
        %v565 = vld [vmem:[%s1 + $0x6e0] sm:$0xff]
        %v566 = vld [vmem:[%s1 + $0x6e8] sm:$0xff]
        %v567 = vld [vmem:[%s1 + $0x6f0] sm:$0xff]
        %v568 = vld [vmem:[%s1 + $0x6f8] sm:$0xff]
        %v569 = vld [vmem:[%s1 + $0x700] sm:$0xff]
        %v570 = vld [vmem:[%s1 + $0x708] sm:$0xff]
        %v571 = vld [vmem:[%s1 + $0x710] sm:$0xff]
        %v572 = vld [vmem:[%s1 + $0x718] sm:$0xff]
        %v573 = vld [vmem:[%s1 + $0x720] sm:$0xff]
        %v574 = vld [vmem:[%s1 + $0x728] sm:$0xff]
        %v575 = vld [vmem:[%s1 + $0x730] sm:$0xff]
        %v576 = vld [vmem:[%s1 + $0x738] sm:$0xff]
        %v577 = vld [vmem:[%s1 + $0x740] sm:$0xff]
        %v578 = vld [vmem:[%s1 + $0x748] sm:$0xff]
        %v579 = vld [vmem:[%s1 + $0x750] sm:$0xff]
        %v580 = vld [vmem:[%s1 + $0x758] sm:$0xff]
        %v581 = vld [vmem:[%s1 + $0x760] sm:$0xff]
        %v582 = vld [vmem:[%s1 + $0x768] sm:$0xff]
        %v583 = vld [vmem:[%s1 + $0x770] sm:$0xff]
        %v584 = vld [vmem:[%s1 + $0x778] sm:$0xff]
        %v585 = vld [vmem:[%s1 + $0x780] sm:$0xff]
        %v586 = vld [vmem:[%s1 + $0x788] sm:$0xff]
        %v587 = vld [vmem:[%s1 + $0x790] sm:$0xff]
        %v588 = vld [vmem:[%s1 + $0x798] sm:$0xff]
        %v589 = vld [vmem:[%s1 + $0x7a0] sm:$0xff]
        %v590 = vld [vmem:[%s1 + $0x7a8] sm:$0xff]
        %v591 = vld [vmem:[%s1 + $0x7b0] sm:$0xff]
        %v592 = vld [vmem:[%s1 + $0x7b8] sm:$0xff]
        %v593 = vld [vmem:[%s1 + $0x7c0] sm:$0xff]
        %v594 = vld [vmem:[%s1 + $0x7c8] sm:$0xff]
        %v595 = vld [vmem:[%s1 + $0x7d0] sm:$0xff]
        %v596 = vld [vmem:[%s1 + $0x7d8] sm:$0xff]
        %v597 = vld [vmem:[%s1 + $0x7e0] sm:$0xff]
        %v598 = vld [vmem:[%s1 + $0x7e8] sm:$0xff]
        %v599 = vld [vmem:[%s1 + $0x7f0] sm:$0xff]
        %v600 = vld [vmem:[%s1 + $0x7f8] sm:$0xff]
        %v601 = vld [vmem:[%s1 + $0x800] sm:$0xff]
        %v602 = vld [vmem:[%s1 + $0x808] sm:$0xff]
        %v603 = vld [vmem:[%s0] sm:$0xff]
        %v604 = vld [vmem:[%s0 + $0x8] sm:$0xff]
        %v605 = vld [vmem:[%s0 + $0x10] sm:$0xff]
        %v606 = vld [vmem:[%s0 + $0x18] sm:$0xff]
        %v607 = vld [vmem:[%s0 + $0x20] sm:$0xff]
        %v608 = vld [vmem:[%s0 + $0x28] sm:$0xff]
        %v609 = vld [vmem:[%s0 + $0x30] sm:$0xff]
        %v610 = vld [vmem:[%s0 + $0x38] sm:$0xff]
        %v611 = vld [vmem:[%s0 + $0x40] sm:$0xff]
        %v612 = vld [vmem:[%s0 + $0x48] sm:$0xff]
        %v613 = vld [vmem:[%s0 + $0x50] sm:$0xff]
        %v614 = vld [vmem:[%s0 + $0x58] sm:$0xff]
        %v615 = vld [vmem:[%s0 + $0x60] sm:$0xff]
        %v616 = vld [vmem:[%s0 + $0x68] sm:$0xff]
        %v617 = vld [vmem:[%s0 + $0x70] sm:$0xff]
        %v618 = vld [vmem:[%s0 + $0x78] sm:$0xff]
        %v619 = vld [vmem:[%s0 + $0x80] sm:$0xff]
        %v620 = vld [vmem:[%s0 + $0x88] sm:$0xff]
        %v621 = vld [vmem:[%s0 + $0x90] sm:$0xff]
        %v622 = vld [vmem:[%s0 + $0x98] sm:$0xff]
        %v623 = vld [vmem:[%s0 + $0xa0] sm:$0xff]
        %v624 = vld [vmem:[%s0 + $0xa8] sm:$0xff]
        %v625 = vld [vmem:[%s0 + $0xb0] sm:$0xff]
        %v626 = vld [vmem:[%s0 + $0xb8] sm:$0xff]
        %v627 = vld [vmem:[%s0 + $0xc0] sm:$0xff]
        %v628 = vld [vmem:[%s0 + $0xc8] sm:$0xff]
        %v629 = vld [vmem:[%s0 + $0xd0] sm:$0xff]
        %v630 = vld [vmem:[%s0 + $0xd8] sm:$0xff]
        %v631 = vld [vmem:[%s0 + $0xe0] sm:$0xff]
        %v632 = vld [vmem:[%s0 + $0xe8] sm:$0xff]
        %v633 = vld [vmem:[%s0 + $0xf0] sm:$0xff]
        %v634 = vld [vmem:[%s0 + $0xf8] sm:$0xff]
        %v635 = vld [vmem:[%s0 + $0x100] sm:$0xff]
        %v636 = vld [vmem:[%s0 + $0x108] sm:$0xff]
        %v637 = vld [vmem:[%s0 + $0x110] sm:$0xff]
        %v638 = vld [vmem:[%s0 + $0x118] sm:$0xff]
        %v639 = vld [vmem:[%s0 + $0x120] sm:$0xff]
        %v640 = vld [vmem:[%s0 + $0x128] sm:$0xff]
        %v641 = vld [vmem:[%s0 + $0x130] sm:$0xff]
        %v642 = vld [vmem:[%s0 + $0x138] sm:$0xff]
        %v643 = vld [vmem:[%s0 + $0x140] sm:$0xff]
        %v644 = vld [vmem:[%s0 + $0x148] sm:$0xff]
        %v645 = vld [vmem:[%s0 + $0x150] sm:$0xff]
        %v646 = vld [vmem:[%s0 + $0x158] sm:$0xff]
        %v647 = vld [vmem:[%s0 + $0x160] sm:$0xff]
        %v648 = vld [vmem:[%s0 + $0x168] sm:$0xff]
        %v649 = vld [vmem:[%s0 + $0x170] sm:$0xff]
        %v650 = vld [vmem:[%s0 + $0x178] sm:$0xff]
        %v651 = vld [vmem:[%s0 + $0x180] sm:$0xff]
        %v652 = vld [vmem:[%s0 + $0x188] sm:$0xff]
        %v653 = vld [vmem:[%s0 + $0x190] sm:$0xff]
        %v654 = vld [vmem:[%s0 + $0x198] sm:$0xff]
        %v655 = vld [vmem:[%s0 + $0x1a0] sm:$0xff]
        %v656 = vld [vmem:[%s0 + $0x1a8] sm:$0xff]
        %v657 = vld [vmem:[%s0 + $0x1b0] sm:$0xff]
        %v658 = vld [vmem:[%s0 + $0x1b8] sm:$0xff]
        %v659 = vld [vmem:[%s0 + $0x1c0] sm:$0xff]
        %v660 = vld [vmem:[%s0 + $0x1c8] sm:$0xff]
        %v661 = vld [vmem:[%s0 + $0x1d0] sm:$0xff]
        %v662 = vld [vmem:[%s0 + $0x1d8] sm:$0xff]
        %v663 = vld [vmem:[%s0 + $0x1e0] sm:$0xff]
        %v664 = vld [vmem:[%s0 + $0x1e8] sm:$0xff]
        %v665 = vld [vmem:[%s0 + $0x1f0] sm:$0xff]
        %v666 = vld [vmem:[%s0 + $0x1f8] sm:$0xff]
        %v667 = vld [vmem:[%s0 + $0x200] sm:$0xff]
        %v668 = vld [vmem:[%s0 + $0x208] sm:$0xff]
        %v669 = vld [vmem:[%s0 + $0x210] sm:$0xff]
        %v670 = vld [vmem:[%s0 + $0x218] sm:$0xff]
        %v671 = vld [vmem:[%s0 + $0x220] sm:$0xff]
        %v672 = vld [vmem:[%s0 + $0x228] sm:$0xff]
        %v673 = vld [vmem:[%s0 + $0x230] sm:$0xff]
        %v674 = vld [vmem:[%s0 + $0x238] sm:$0xff]
        %v675 = vld [vmem:[%s0 + $0x240] sm:$0xff]
        %v676 = vld [vmem:[%s0 + $0x248] sm:$0xff]
        %v677 = vld [vmem:[%s0 + $0x250] sm:$0xff]
        %v678 = vld [vmem:[%s0 + $0x258] sm:$0xff]
        %v679 = vld [vmem:[%s0 + $0x260] sm:$0xff]
        %v680 = vld [vmem:[%s0 + $0x268] sm:$0xff]
        %v681 = vld [vmem:[%s0 + $0x270] sm:$0xff]
        %v682 = vld [vmem:[%s0 + $0x278] sm:$0xff]
        %v683 = vld [vmem:[%s0 + $0x280] sm:$0xff]
        %v684 = vld [vmem:[%s0 + $0x288] sm:$0xff]
        %v685 = vld [vmem:[%s0 + $0x290] sm:$0xff]
        %v686 = vld [vmem:[%s0 + $0x298] sm:$0xff]
        %v687 = vld [vmem:[%s0 + $0x2a0] sm:$0xff]
        %v688 = vld [vmem:[%s0 + $0x2a8] sm:$0xff]
        %v689 = vld [vmem:[%s0 + $0x2b0] sm:$0xff]
        %v690 = vld [vmem:[%s0 + $0x2b8] sm:$0xff]
        %v691 = vld [vmem:[%s0 + $0x2c0] sm:$0xff]
        %v692 = vld [vmem:[%s0 + $0x2c8] sm:$0xff]
        %v693 = vld [vmem:[%s0 + $0x2d0] sm:$0xff]
        %v694 = vld [vmem:[%s0 + $0x2d8] sm:$0xff]
        %v695 = vld [vmem:[%s0 + $0x2e0] sm:$0xff]
        %v696 = vld [vmem:[%s0 + $0x2e8] sm:$0xff]
        %v697 = vld [vmem:[%s0 + $0x2f0] sm:$0xff]
        %v698 = vld [vmem:[%s0 + $0x2f8] sm:$0xff]
        %v699 = vld [vmem:[%s0 + $0x300] sm:$0xff]
        %v700 = vld [vmem:[%s0 + $0x308] sm:$0xff]
        %v701 = vld [vmem:[%s0 + $0x310] sm:$0xff]
        %v702 = vld [vmem:[%s0 + $0x318] sm:$0xff]
        %v703 = vld [vmem:[%s0 + $0x320] sm:$0xff]
        %v704 = vld [vmem:[%s0 + $0x328] sm:$0xff]
        %v705 = vld [vmem:[%s0 + $0x330] sm:$0xff]
        %v706 = vld [vmem:[%s0 + $0x338] sm:$0xff]
        %v707 = vld [vmem:[%s0 + $0x340] sm:$0xff]
        %v708 = vld [vmem:[%s0 + $0x348] sm:$0xff]
        %v709 = vld [vmem:[%s0 + $0x350] sm:$0xff]
        %v710 = vld [vmem:[%s0 + $0x358] sm:$0xff]
        %v711 = vld [vmem:[%s0 + $0x360] sm:$0xff]
        %v712 = vld [vmem:[%s0 + $0x368] sm:$0xff]
        %v713 = vld [vmem:[%s0 + $0x370] sm:$0xff]
        %v714 = vld [vmem:[%s0 + $0x378] sm:$0xff]
        %v715 = vld [vmem:[%s0 + $0x380] sm:$0xff]
        %v716 = vld [vmem:[%s0 + $0x388] sm:$0xff]
        %v717 = vld [vmem:[%s0 + $0x390] sm:$0xff]
        %v718 = vld [vmem:[%s0 + $0x398] sm:$0xff]
        %v719 = vld [vmem:[%s0 + $0x3a0] sm:$0xff]
        %v720 = vld [vmem:[%s0 + $0x3a8] sm:$0xff]
        %v721 = vld [vmem:[%s0 + $0x3b0] sm:$0xff]
        %v722 = vld [vmem:[%s0 + $0x3b8] sm:$0xff]
        %v723 = vld [vmem:[%s0 + $0x3c0] sm:$0xff]
        %v724 = vld [vmem:[%s0 + $0x3c8] sm:$0xff]
        %v725 = vld [vmem:[%s0 + $0x3d0] sm:$0xff]
        %v726 = vld [vmem:[%s0 + $0x3d8] sm:$0xff]
        %v727 = vld [vmem:[%s0 + $0x3e0] sm:$0xff]
        %v728 = vld [vmem:[%s0 + $0x3e8] sm:$0xff]
        %v729 = vld [vmem:[%s0 + $0x3f0] sm:$0xff]
        %v730 = vld [vmem:[%s0 + $0x3f8] sm:$0xff]
        %v731 = vld [vmem:[%s0 + $0x400] sm:$0xff]
        %v732 = vld [vmem:[%s0 + $0x408] sm:$0xff]
        %v733 = vld [vmem:[%s0 + $0x410] sm:$0xff]
        %v734 = vld [vmem:[%s0 + $0x418] sm:$0xff]
        %v735 = vld [vmem:[%s0 + $0x420] sm:$0xff]
        %v736 = vld [vmem:[%s0 + $0x428] sm:$0xff]
        %v737 = vld [vmem:[%s0 + $0x430] sm:$0xff]
        %v738 = vld [vmem:[%s0 + $0x438] sm:$0xff]
        %v739 = vld [vmem:[%s0 + $0x440] sm:$0xff]
        %v740 = vld [vmem:[%s0 + $0x448] sm:$0xff]
        %v741 = vld [vmem:[%s0 + $0x450] sm:$0xff]
        %v742 = vld [vmem:[%s0 + $0x458] sm:$0xff]
        %v743 = vld [vmem:[%s0 + $0x460] sm:$0xff]
        %v744 = vld [vmem:[%s0 + $0x468] sm:$0xff]
        %v745 = vld [vmem:[%s0 + $0x470] sm:$0xff]
        %v746 = vld [vmem:[%s0 + $0x478] sm:$0xff]
        %v747 = vld [vmem:[%s0 + $0x480] sm:$0xff]
        %v748 = vld [vmem:[%s0 + $0x488] sm:$0xff]
        %v749 = vld [vmem:[%s0 + $0x490] sm:$0xff]
        %v750 = vld [vmem:[%s0 + $0x498] sm:$0xff]
        %v751 = vld [vmem:[%s0 + $0x4a0] sm:$0xff]
        %v752 = vld [vmem:[%s0 + $0x4a8] sm:$0xff]
        %v753 = vld [vmem:[%s0 + $0x4b0] sm:$0xff]
        %v754 = vld [vmem:[%s0 + $0x4b8] sm:$0xff]
        %v755 = vld [vmem:[%s0 + $0x4c0] sm:$0xff]
        %v756 = vld [vmem:[%s0 + $0x4c8] sm:$0xff]
        %v757 = vld [vmem:[%s0 + $0x4d0] sm:$0xff]
        %v758 = vld [vmem:[%s0 + $0x4d8] sm:$0xff]
        %v759 = vld [vmem:[%s0 + $0x4e0] sm:$0xff]
        %v760 = vld [vmem:[%s0 + $0x4e8] sm:$0xff]
        %v761 = vld [vmem:[%s0 + $0x4f0] sm:$0xff]
        %v762 = vld [vmem:[%s0 + $0x4f8] sm:$0xff]
        %v763 = vld [vmem:[%s0 + $0x500] sm:$0xff]
        %v764 = vld [vmem:[%s0 + $0x508] sm:$0xff]
        %v765 = vld [vmem:[%s0 + $0x510] sm:$0xff]
        %v766 = vld [vmem:[%s0 + $0x518] sm:$0xff]
        %v767 = vld [vmem:[%s0 + $0x520] sm:$0xff]
        %v768 = vld [vmem:[%s0 + $0x528] sm:$0xff]
        %v769 = vld [vmem:[%s0 + $0x530] sm:$0xff]
        %v770 = vld [vmem:[%s0 + $0x538] sm:$0xff]
        %v771 = vld [vmem:[%s0 + $0x540] sm:$0xff]
        %v772 = vld [vmem:[%s0 + $0x548] sm:$0xff]
        %v773 = vld [vmem:[%s0 + $0x550] sm:$0xff]
        %v774 = vld [vmem:[%s0 + $0x558] sm:$0xff]
        %v775 = vld [vmem:[%s0 + $0x560] sm:$0xff]
        %v776 = vld [vmem:[%s0 + $0x568] sm:$0xff]
        %v777 = vld [vmem:[%s0 + $0x570] sm:$0xff]
        %v778 = vld [vmem:[%s0 + $0x578] sm:$0xff]
        %v779 = vld [vmem:[%s0 + $0x580] sm:$0xff]
        %v780 = vld [vmem:[%s0 + $0x588] sm:$0xff]
        %v781 = vld [vmem:[%s0 + $0x590] sm:$0xff]
        %v782 = vld [vmem:[%s0 + $0x598] sm:$0xff]
        %v783 = vld [vmem:[%s0 + $0x5a0] sm:$0xff]
        %v784 = vld [vmem:[%s0 + $0x5a8] sm:$0xff]
        %v785 = vld [vmem:[%s0 + $0x5b0] sm:$0xff]
        %v786 = vld [vmem:[%s0 + $0x5b8] sm:$0xff]
        %v787 = vld [vmem:[%s0 + $0x5c0] sm:$0xff]
        %v788 = vld [vmem:[%s0 + $0x5c8] sm:$0xff]
        %v789 = vld [vmem:[%s0 + $0x5d0] sm:$0xff]
        %v790 = vld [vmem:[%s0 + $0x5d8] sm:$0xff]
        %v791 = vld [vmem:[%s0 + $0x5e0] sm:$0xff]
        %v792 = vld [vmem:[%s0 + $0x5e8] sm:$0xff]
        %v793 = vld [vmem:[%s0 + $0x5f0] sm:$0xff]
        %v794 = vld [vmem:[%s0 + $0x5f8] sm:$0xff]
        %v795 = vld [vmem:[%s0 + $0x600] sm:$0xff]
        %v796 = vld [vmem:[%s0 + $0x608] sm:$0xff]
        %v797 = vld [vmem:[%s0 + $0x610] sm:$0xff]
        %v798 = vld [vmem:[%s0 + $0x618] sm:$0xff]
        %v799 = vld [vmem:[%s0 + $0x620] sm:$0xff]
        %v800 = vld [vmem:[%s0 + $0x628] sm:$0xff]
        %v801 = vld [vmem:[%s0 + $0x630] sm:$0xff]
        %v802 = vld [vmem:[%s0 + $0x638] sm:$0xff]
        %v803 = vld [vmem:[%s0 + $0x640] sm:$0xff]
        %v804 = vld [vmem:[%s0 + $0x648] sm:$0xff]
        %v805 = vld [vmem:[%s0 + $0x650] sm:$0xff]
        %v806 = vld [vmem:[%s0 + $0x658] sm:$0xff]
        %v807 = vld [vmem:[%s0 + $0x660] sm:$0xff]
        %v808 = vld [vmem:[%s0 + $0x668] sm:$0xff]
        %v809 = vld [vmem:[%s0 + $0x670] sm:$0xff]
        %v810 = vld [vmem:[%s0 + $0x678] sm:$0xff]
        %v811 = vld [vmem:[%s0 + $0x680] sm:$0xff]
        %v812 = vld [vmem:[%s0 + $0x688] sm:$0xff]
        %v813 = vld [vmem:[%s0 + $0x690] sm:$0xff]
        %v814 = vld [vmem:[%s0 + $0x698] sm:$0xff]
        %v815 = vld [vmem:[%s0 + $0x6a0] sm:$0xff]
        %v816 = vld [vmem:[%s0 + $0x6a8] sm:$0xff]
        %v817 = vld [vmem:[%s0 + $0x6b0] sm:$0xff]
        %v818 = vld [vmem:[%s0 + $0x6b8] sm:$0xff]
        %v819 = vld [vmem:[%s0 + $0x6c0] sm:$0xff]
        %v820 = vld [vmem:[%s0 + $0x6c8] sm:$0xff]
        %v821 = vld [vmem:[%s0 + $0x6d0] sm:$0xff]
        %v822 = vld [vmem:[%s0 + $0x6d8] sm:$0xff]
        %v823 = vld [vmem:[%s0 + $0x6e0] sm:$0xff]
        %v824 = vld [vmem:[%s0 + $0x6e8] sm:$0xff]
        %v825 = vld [vmem:[%s0 + $0x6f0] sm:$0xff]
        %v826 = vld [vmem:[%s0 + $0x6f8] sm:$0xff]
        %v827 = vld [vmem:[%s0 + $0x700] sm:$0xff]
        %v828 = vld [vmem:[%s0 + $0x708] sm:$0xff]
        %v829 = vld [vmem:[%s0 + $0x710] sm:$0xff]
        %v830 = vld [vmem:[%s0 + $0x718] sm:$0xff]
        %v831 = vld [vmem:[%s0 + $0x720] sm:$0xff]
        %v832 = vld [vmem:[%s0 + $0x728] sm:$0xff]
        %v833 = vld [vmem:[%s0 + $0x730] sm:$0xff]
        %v834 = vld [vmem:[%s0 + $0x738] sm:$0xff]
        %v835 = vld [vmem:[%s0 + $0x740] sm:$0xff]
        %v836 = vld [vmem:[%s0 + $0x748] sm:$0xff]
        %v837 = vld [vmem:[%s0 + $0x750] sm:$0xff]
        %v838 = vld [vmem:[%s0 + $0x758] sm:$0xff]
        %v839 = vld [vmem:[%s0 + $0x760] sm:$0xff]
        %v840 = vld [vmem:[%s0 + $0x768] sm:$0xff]
        %v841 = vld [vmem:[%s0 + $0x770] sm:$0xff]
        %v842 = vld [vmem:[%s0 + $0x778] sm:$0xff]
        %v843 = vld [vmem:[%s0 + $0x780] sm:$0xff]
        %v844 = vld [vmem:[%s0 + $0x788] sm:$0xff]
        %v845 = vld [vmem:[%s0 + $0x790] sm:$0xff]
        %v846 = vld [vmem:[%s0 + $0x798] sm:$0xff]
        %v847 = vld [vmem:[%s0 + $0x7a0] sm:$0xff]
        %v848 = vld [vmem:[%s0 + $0x7a8] sm:$0xff]
        %v849 = vld [vmem:[%s0 + $0x7b0] sm:$0xff]
        %v850 = vld [vmem:[%s0 + $0x7b8] sm:$0xff]
        %v851 = vld [vmem:[%s0 + $0x7c0] sm:$0xff]
        %v852 = vld [vmem:[%s0 + $0x7c8] sm:$0xff]
        %v853 = vld [vmem:[%s0 + $0x7d0] sm:$0xff]
        %v854 = vld [vmem:[%s0 + $0x7d8] sm:$0xff]
        %v855 = vld [vmem:[%s0 + $0x7e0] sm:$0xff]
        %v856 = vld [vmem:[%s0 + $0x7e8] sm:$0xff]
        %v857 = vld [vmem:[%s0 + $0x7f0] sm:$0xff]
        %v858 = vld [vmem:[%s0 + $0x7f8] sm:$0xff]
        %v859 = vld [vmem:[%s0 + $0x800] sm:$0xff]
        %v860 = vld [vmem:[%s0 + $0x808] sm:$0xff]
        %862 = vset.pattern.permute.xlu0 0
        %863 = vperm.xlu0 %862, %v603
        %v864 = vpop.permute.xlu0 %863
        %867 = vset.pattern.permute.xlu0 0
        %868 = vperm.xlu0 %867, %v604
        %v869 = vpop.permute.xlu0 %868
        %872 = vset.pattern.permute.xlu0 0
        %873 = vperm.xlu0 %872, %v605
        %v874 = vpop.permute.xlu0 %873
        %877 = vset.pattern.permute.xlu0 0
        %878 = vperm.xlu0 %877, %v606
        %v879 = vpop.permute.xlu0 %878
        %882 = vset.pattern.permute.xlu0 0
        %883 = vperm.xlu0 %882, %v607
        %v884 = vpop.permute.xlu0 %883
        %887 = vset.pattern.permute.xlu0 0
        %888 = vperm.xlu0 %887, %v608
        %v889 = vpop.permute.xlu0 %888
        %892 = vset.pattern.permute.xlu0 0
        %893 = vperm.xlu0 %892, %v609
        %v894 = vpop.permute.xlu0 %893
        %897 = vset.pattern.permute.xlu0 0
        %898 = vperm.xlu0 %897, %v610
        %v899 = vpop.permute.xlu0 %898
        %902 = vset.pattern.permute.xlu0 0
        %903 = vperm.xlu0 %902, %v611
        %v904 = vpop.permute.xlu0 %903
        %907 = vset.pattern.permute.xlu0 0
        %908 = vperm.xlu0 %907, %v612
        %v909 = vpop.permute.xlu0 %908
        %912 = vset.pattern.permute.xlu0 0
        %913 = vperm.xlu0 %912, %v613
        %v914 = vpop.permute.xlu0 %913
        %917 = vset.pattern.permute.xlu0 0
        %918 = vperm.xlu0 %917, %v614
        %v919 = vpop.permute.xlu0 %918
        %922 = vset.pattern.permute.xlu0 0
        %923 = vperm.xlu0 %922, %v615
        %v924 = vpop.permute.xlu0 %923
        %927 = vset.pattern.permute.xlu0 0
        %928 = vperm.xlu0 %927, %v616
        %v929 = vpop.permute.xlu0 %928
        %932 = vset.pattern.permute.xlu0 0
        %933 = vperm.xlu0 %932, %v617
        %v934 = vpop.permute.xlu0 %933
        %937 = vset.pattern.permute.xlu0 0
        %938 = vperm.xlu0 %937, %v618
        %v939 = vpop.permute.xlu0 %938
        %942 = vset.pattern.permute.xlu0 0
        %943 = vperm.xlu0 %942, %v619
        %v944 = vpop.permute.xlu0 %943
        %947 = vset.pattern.permute.xlu0 0
        %948 = vperm.xlu0 %947, %v620
        %v949 = vpop.permute.xlu0 %948
        %952 = vset.pattern.permute.xlu0 0
        %953 = vperm.xlu0 %952, %v621
        %v954 = vpop.permute.xlu0 %953
        %957 = vset.pattern.permute.xlu0 0
        %958 = vperm.xlu0 %957, %v622
        %v959 = vpop.permute.xlu0 %958
        %962 = vset.pattern.permute.xlu0 0
        %963 = vperm.xlu0 %962, %v623
        %v964 = vpop.permute.xlu0 %963
        %967 = vset.pattern.permute.xlu0 0
        %968 = vperm.xlu0 %967, %v624
        %v969 = vpop.permute.xlu0 %968
        %972 = vset.pattern.permute.xlu0 0
        %973 = vperm.xlu0 %972, %v625
        %v974 = vpop.permute.xlu0 %973
        %977 = vset.pattern.permute.xlu0 0
        %978 = vperm.xlu0 %977, %v626
        %v979 = vpop.permute.xlu0 %978
        %982 = vset.pattern.permute.xlu0 0
        %983 = vperm.xlu0 %982, %v627
        %v984 = vpop.permute.xlu0 %983
        %987 = vset.pattern.permute.xlu0 0
        %988 = vperm.xlu0 %987, %v628
        %v989 = vpop.permute.xlu0 %988
        %992 = vset.pattern.permute.xlu0 0
        %993 = vperm.xlu0 %992, %v629
        %v994 = vpop.permute.xlu0 %993
        %997 = vset.pattern.permute.xlu0 0
        %998 = vperm.xlu0 %997, %v630
        %v999 = vpop.permute.xlu0 %998
        %1002 = vset.pattern.permute.xlu0 0
        %1003 = vperm.xlu0 %1002, %v631
        %v1004 = vpop.permute.xlu0 %1003
        %1007 = vset.pattern.permute.xlu0 0
        %1008 = vperm.xlu0 %1007, %v632
        %v1009 = vpop.permute.xlu0 %1008
        %1012 = vset.pattern.permute.xlu0 0
        %1013 = vperm.xlu0 %1012, %v633
        %v1014 = vpop.permute.xlu0 %1013
        %1017 = vset.pattern.permute.xlu0 0
        %1018 = vperm.xlu0 %1017, %v634
        %v1019 = vpop.permute.xlu0 %1018
        %1022 = vset.pattern.permute.xlu0 0
        %1023 = vperm.xlu0 %1022, %v635
        %v1024 = vpop.permute.xlu0 %1023
        %1027 = vset.pattern.permute.xlu0 0
        %1028 = vperm.xlu0 %1027, %v636
        %v1029 = vpop.permute.xlu0 %1028
        %1032 = vset.pattern.permute.xlu0 0
        %1033 = vperm.xlu0 %1032, %v637
        %v1034 = vpop.permute.xlu0 %1033
        %1037 = vset.pattern.permute.xlu0 0
        %1038 = vperm.xlu0 %1037, %v638
        %v1039 = vpop.permute.xlu0 %1038
        %1042 = vset.pattern.permute.xlu0 0
        %1043 = vperm.xlu0 %1042, %v639
        %v1044 = vpop.permute.xlu0 %1043
        %1047 = vset.pattern.permute.xlu0 0
        %1048 = vperm.xlu0 %1047, %v640
        %v1049 = vpop.permute.xlu0 %1048
        %1052 = vset.pattern.permute.xlu0 0
        %1053 = vperm.xlu0 %1052, %v641
        %v1054 = vpop.permute.xlu0 %1053
        %1057 = vset.pattern.permute.xlu0 0
        %1058 = vperm.xlu0 %1057, %v642
        %v1059 = vpop.permute.xlu0 %1058
        %1062 = vset.pattern.permute.xlu0 0
        %1063 = vperm.xlu0 %1062, %v643
        %v1064 = vpop.permute.xlu0 %1063
        %1067 = vset.pattern.permute.xlu0 0
        %1068 = vperm.xlu0 %1067, %v644
        %v1069 = vpop.permute.xlu0 %1068
        %1072 = vset.pattern.permute.xlu0 0
        %1073 = vperm.xlu0 %1072, %v645
        %v1074 = vpop.permute.xlu0 %1073
        %1077 = vset.pattern.permute.xlu0 0
        %1078 = vperm.xlu0 %1077, %v646
        %v1079 = vpop.permute.xlu0 %1078
        %1082 = vset.pattern.permute.xlu0 0
        %1083 = vperm.xlu0 %1082, %v647
        %v1084 = vpop.permute.xlu0 %1083
        %1087 = vset.pattern.permute.xlu0 0
        %1088 = vperm.xlu0 %1087, %v648
        %v1089 = vpop.permute.xlu0 %1088
        %1092 = vset.pattern.permute.xlu0 0
        %1093 = vperm.xlu0 %1092, %v649
        %v1094 = vpop.permute.xlu0 %1093
        %1097 = vset.pattern.permute.xlu0 0
        %1098 = vperm.xlu0 %1097, %v650
        %v1099 = vpop.permute.xlu0 %1098
        %1102 = vset.pattern.permute.xlu0 0
        %1103 = vperm.xlu0 %1102, %v651
        %v1104 = vpop.permute.xlu0 %1103
        %1107 = vset.pattern.permute.xlu0 0
        %1108 = vperm.xlu0 %1107, %v652
        %v1109 = vpop.permute.xlu0 %1108
        %1112 = vset.pattern.permute.xlu0 0
        %1113 = vperm.xlu0 %1112, %v653
        %v1114 = vpop.permute.xlu0 %1113
        %1117 = vset.pattern.permute.xlu0 0
        %1118 = vperm.xlu0 %1117, %v654
        %v1119 = vpop.permute.xlu0 %1118
        %1122 = vset.pattern.permute.xlu0 0
        %1123 = vperm.xlu0 %1122, %v655
        %v1124 = vpop.permute.xlu0 %1123
        %1127 = vset.pattern.permute.xlu0 0
        %1128 = vperm.xlu0 %1127, %v656
        %v1129 = vpop.permute.xlu0 %1128
        %1132 = vset.pattern.permute.xlu0 0
        %1133 = vperm.xlu0 %1132, %v657
        %v1134 = vpop.permute.xlu0 %1133
        %1137 = vset.pattern.permute.xlu0 0
        %1138 = vperm.xlu0 %1137, %v658
        %v1139 = vpop.permute.xlu0 %1138
        %1142 = vset.pattern.permute.xlu0 0
        %1143 = vperm.xlu0 %1142, %v659
        %v1144 = vpop.permute.xlu0 %1143
        %1147 = vset.pattern.permute.xlu0 0
        %1148 = vperm.xlu0 %1147, %v660
        %v1149 = vpop.permute.xlu0 %1148
        %1152 = vset.pattern.permute.xlu0 0
        %1153 = vperm.xlu0 %1152, %v661
        %v1154 = vpop.permute.xlu0 %1153
        %1157 = vset.pattern.permute.xlu0 0
        %1158 = vperm.xlu0 %1157, %v662
        %v1159 = vpop.permute.xlu0 %1158
        %1162 = vset.pattern.permute.xlu0 0
        %1163 = vperm.xlu0 %1162, %v663
        %v1164 = vpop.permute.xlu0 %1163
        %1167 = vset.pattern.permute.xlu0 0
        %1168 = vperm.xlu0 %1167, %v664
        %v1169 = vpop.permute.xlu0 %1168
        %1172 = vset.pattern.permute.xlu0 0
        %1173 = vperm.xlu0 %1172, %v665
        %v1174 = vpop.permute.xlu0 %1173
        %1177 = vset.pattern.permute.xlu0 0
        %1178 = vperm.xlu0 %1177, %v666
        %v1179 = vpop.permute.xlu0 %1178
        %1182 = vset.pattern.permute.xlu0 0
        %1183 = vperm.xlu0 %1182, %v667
        %v1184 = vpop.permute.xlu0 %1183
        %1187 = vset.pattern.permute.xlu0 0
        %1188 = vperm.xlu0 %1187, %v668
        %v1189 = vpop.permute.xlu0 %1188
        %1192 = vset.pattern.permute.xlu0 0
        %1193 = vperm.xlu0 %1192, %v669
        %v1194 = vpop.permute.xlu0 %1193
        %1197 = vset.pattern.permute.xlu0 0
        %1198 = vperm.xlu0 %1197, %v670
        %v1199 = vpop.permute.xlu0 %1198
        %1202 = vset.pattern.permute.xlu0 0
        %1203 = vperm.xlu0 %1202, %v671
        %v1204 = vpop.permute.xlu0 %1203
        %1207 = vset.pattern.permute.xlu0 0
        %1208 = vperm.xlu0 %1207, %v672
        %v1209 = vpop.permute.xlu0 %1208
        %1212 = vset.pattern.permute.xlu0 0
        %1213 = vperm.xlu0 %1212, %v673
        %v1214 = vpop.permute.xlu0 %1213
        %1217 = vset.pattern.permute.xlu0 0
        %1218 = vperm.xlu0 %1217, %v674
        %v1219 = vpop.permute.xlu0 %1218
        %1222 = vset.pattern.permute.xlu0 0
        %1223 = vperm.xlu0 %1222, %v675
        %v1224 = vpop.permute.xlu0 %1223
        %1227 = vset.pattern.permute.xlu0 0
        %1228 = vperm.xlu0 %1227, %v676
        %v1229 = vpop.permute.xlu0 %1228
        %1232 = vset.pattern.permute.xlu0 0
        %1233 = vperm.xlu0 %1232, %v677
        %v1234 = vpop.permute.xlu0 %1233
        %1237 = vset.pattern.permute.xlu0 0
        %1238 = vperm.xlu0 %1237, %v678
        %v1239 = vpop.permute.xlu0 %1238
        %1242 = vset.pattern.permute.xlu0 0
        %1243 = vperm.xlu0 %1242, %v679
        %v1244 = vpop.permute.xlu0 %1243
        %1247 = vset.pattern.permute.xlu0 0
        %1248 = vperm.xlu0 %1247, %v680
        %v1249 = vpop.permute.xlu0 %1248
        %1252 = vset.pattern.permute.xlu0 0
        %1253 = vperm.xlu0 %1252, %v681
        %v1254 = vpop.permute.xlu0 %1253
        %1257 = vset.pattern.permute.xlu0 0
        %1258 = vperm.xlu0 %1257, %v682
        %v1259 = vpop.permute.xlu0 %1258
        %1262 = vset.pattern.permute.xlu0 0
        %1263 = vperm.xlu0 %1262, %v683
        %v1264 = vpop.permute.xlu0 %1263
        %1267 = vset.pattern.permute.xlu0 0
        %1268 = vperm.xlu0 %1267, %v684
        %v1269 = vpop.permute.xlu0 %1268
        %1272 = vset.pattern.permute.xlu0 0
        %1273 = vperm.xlu0 %1272, %v685
        %v1274 = vpop.permute.xlu0 %1273
        %1277 = vset.pattern.permute.xlu0 0
        %1278 = vperm.xlu0 %1277, %v686
        %v1279 = vpop.permute.xlu0 %1278
        %1282 = vset.pattern.permute.xlu0 0
        %1283 = vperm.xlu0 %1282, %v687
        %v1284 = vpop.permute.xlu0 %1283
        %1287 = vset.pattern.permute.xlu0 0
        %1288 = vperm.xlu0 %1287, %v688
        %v1289 = vpop.permute.xlu0 %1288
        %1292 = vset.pattern.permute.xlu0 0
        %1293 = vperm.xlu0 %1292, %v689
        %v1294 = vpop.permute.xlu0 %1293
        %1297 = vset.pattern.permute.xlu0 0
        %1298 = vperm.xlu0 %1297, %v690
        %v1299 = vpop.permute.xlu0 %1298
        %1302 = vset.pattern.permute.xlu0 0
        %1303 = vperm.xlu0 %1302, %v691
        %v1304 = vpop.permute.xlu0 %1303
        %1307 = vset.pattern.permute.xlu0 0
        %1308 = vperm.xlu0 %1307, %v692
        %v1309 = vpop.permute.xlu0 %1308
        %1312 = vset.pattern.permute.xlu0 0
        %1313 = vperm.xlu0 %1312, %v693
        %v1314 = vpop.permute.xlu0 %1313
        %1317 = vset.pattern.permute.xlu0 0
        %1318 = vperm.xlu0 %1317, %v694
        %v1319 = vpop.permute.xlu0 %1318
        %1322 = vset.pattern.permute.xlu0 0
        %1323 = vperm.xlu0 %1322, %v695
        %v1324 = vpop.permute.xlu0 %1323
        %1327 = vset.pattern.permute.xlu0 0
        %1328 = vperm.xlu0 %1327, %v696
        %v1329 = vpop.permute.xlu0 %1328
        %1332 = vset.pattern.permute.xlu0 0
        %1333 = vperm.xlu0 %1332, %v697
        %v1334 = vpop.permute.xlu0 %1333
        %1337 = vset.pattern.permute.xlu0 0
        %1338 = vperm.xlu0 %1337, %v698
        %v1339 = vpop.permute.xlu0 %1338
        %1342 = vset.pattern.permute.xlu0 0
        %1343 = vperm.xlu0 %1342, %v699
        %v1344 = vpop.permute.xlu0 %1343
        %1347 = vset.pattern.permute.xlu0 0
        %1348 = vperm.xlu0 %1347, %v700
        %v1349 = vpop.permute.xlu0 %1348
        %1352 = vset.pattern.permute.xlu0 0
        %1353 = vperm.xlu0 %1352, %v701
        %v1354 = vpop.permute.xlu0 %1353
        %1357 = vset.pattern.permute.xlu0 0
        %1358 = vperm.xlu0 %1357, %v702
        %v1359 = vpop.permute.xlu0 %1358
        %1362 = vset.pattern.permute.xlu0 0
        %1363 = vperm.xlu0 %1362, %v703
        %v1364 = vpop.permute.xlu0 %1363
        %1367 = vset.pattern.permute.xlu0 0
        %1368 = vperm.xlu0 %1367, %v704
        %v1369 = vpop.permute.xlu0 %1368
        %1372 = vset.pattern.permute.xlu0 0
        %1373 = vperm.xlu0 %1372, %v705
        %v1374 = vpop.permute.xlu0 %1373
        %1377 = vset.pattern.permute.xlu0 0
        %1378 = vperm.xlu0 %1377, %v706
        %v1379 = vpop.permute.xlu0 %1378
        %1382 = vset.pattern.permute.xlu0 0
        %1383 = vperm.xlu0 %1382, %v707
        %v1384 = vpop.permute.xlu0 %1383
        %1387 = vset.pattern.permute.xlu0 0
        %1388 = vperm.xlu0 %1387, %v708
        %v1389 = vpop.permute.xlu0 %1388
        %1392 = vset.pattern.permute.xlu0 0
        %1393 = vperm.xlu0 %1392, %v709
        %v1394 = vpop.permute.xlu0 %1393
        %1397 = vset.pattern.permute.xlu0 0
        %1398 = vperm.xlu0 %1397, %v710
        %v1399 = vpop.permute.xlu0 %1398
        %1402 = vset.pattern.permute.xlu0 0
        %1403 = vperm.xlu0 %1402, %v711
        %v1404 = vpop.permute.xlu0 %1403
        %1407 = vset.pattern.permute.xlu0 0
        %1408 = vperm.xlu0 %1407, %v712
        %v1409 = vpop.permute.xlu0 %1408
        %1412 = vset.pattern.permute.xlu0 0
        %1413 = vperm.xlu0 %1412, %v713
        %v1414 = vpop.permute.xlu0 %1413
        %1417 = vset.pattern.permute.xlu0 0
        %1418 = vperm.xlu0 %1417, %v714
        %v1419 = vpop.permute.xlu0 %1418
        %1422 = vset.pattern.permute.xlu0 0
        %1423 = vperm.xlu0 %1422, %v715
        %v1424 = vpop.permute.xlu0 %1423
        %1427 = vset.pattern.permute.xlu0 0
        %1428 = vperm.xlu0 %1427, %v716
        %v1429 = vpop.permute.xlu0 %1428
        %1432 = vset.pattern.permute.xlu0 0
        %1433 = vperm.xlu0 %1432, %v717
        %v1434 = vpop.permute.xlu0 %1433
        %1437 = vset.pattern.permute.xlu0 0
        %1438 = vperm.xlu0 %1437, %v718
        %v1439 = vpop.permute.xlu0 %1438
        %1442 = vset.pattern.permute.xlu0 0
        %1443 = vperm.xlu0 %1442, %v719
        %v1444 = vpop.permute.xlu0 %1443
        %1447 = vset.pattern.permute.xlu0 0
        %1448 = vperm.xlu0 %1447, %v720
        %v1449 = vpop.permute.xlu0 %1448
        %1452 = vset.pattern.permute.xlu0 0
        %1453 = vperm.xlu0 %1452, %v721
        %v1454 = vpop.permute.xlu0 %1453
        %1457 = vset.pattern.permute.xlu0 0
        %1458 = vperm.xlu0 %1457, %v722
        %v1459 = vpop.permute.xlu0 %1458
        %1462 = vset.pattern.permute.xlu0 0
        %1463 = vperm.xlu0 %1462, %v723
        %v1464 = vpop.permute.xlu0 %1463
        %1467 = vset.pattern.permute.xlu0 0
        %1468 = vperm.xlu0 %1467, %v724
        %v1469 = vpop.permute.xlu0 %1468
        %1472 = vset.pattern.permute.xlu0 0
        %1473 = vperm.xlu0 %1472, %v725
        %v1474 = vpop.permute.xlu0 %1473
        %1477 = vset.pattern.permute.xlu0 0
        %1478 = vperm.xlu0 %1477, %v726
        %v1479 = vpop.permute.xlu0 %1478
        %1482 = vset.pattern.permute.xlu0 0
        %1483 = vperm.xlu0 %1482, %v727
        %v1484 = vpop.permute.xlu0 %1483
        %1487 = vset.pattern.permute.xlu0 0
        %1488 = vperm.xlu0 %1487, %v728
        %v1489 = vpop.permute.xlu0 %1488
        %1492 = vset.pattern.permute.xlu0 0
        %1493 = vperm.xlu0 %1492, %v729
        %v1494 = vpop.permute.xlu0 %1493
        %1497 = vset.pattern.permute.xlu0 0
        %1498 = vperm.xlu0 %1497, %v730
        %v1499 = vpop.permute.xlu0 %1498
        %1502 = vset.pattern.permute.xlu0 0
        %1503 = vperm.xlu0 %1502, %v731
        %v1504 = vpop.permute.xlu0 %1503
        %1507 = vset.pattern.permute.xlu0 0
        %1508 = vperm.xlu0 %1507, %v732
        %v1509 = vpop.permute.xlu0 %1508
        %1512 = vset.pattern.permute.xlu0 0
        %1513 = vperm.xlu0 %1512, %v733
        %v1514 = vpop.permute.xlu0 %1513
        %1517 = vset.pattern.permute.xlu0 0
        %1518 = vperm.xlu0 %1517, %v734
        %v1519 = vpop.permute.xlu0 %1518
        %1522 = vset.pattern.permute.xlu0 0
        %1523 = vperm.xlu0 %1522, %v735
        %v1524 = vpop.permute.xlu0 %1523
        %1527 = vset.pattern.permute.xlu0 0
        %1528 = vperm.xlu0 %1527, %v736
        %v1529 = vpop.permute.xlu0 %1528
        %1532 = vset.pattern.permute.xlu0 0
        %1533 = vperm.xlu0 %1532, %v737
        %v1534 = vpop.permute.xlu0 %1533
        %1537 = vset.pattern.permute.xlu0 0
        %1538 = vperm.xlu0 %1537, %v738
        %v1539 = vpop.permute.xlu0 %1538
        %1542 = vset.pattern.permute.xlu0 0
        %1543 = vperm.xlu0 %1542, %v739
        %v1544 = vpop.permute.xlu0 %1543
        %1547 = vset.pattern.permute.xlu0 0
        %1548 = vperm.xlu0 %1547, %v740
        %v1549 = vpop.permute.xlu0 %1548
        %1552 = vset.pattern.permute.xlu0 0
        %1553 = vperm.xlu0 %1552, %v741
        %v1554 = vpop.permute.xlu0 %1553
        %1557 = vset.pattern.permute.xlu0 0
        %1558 = vperm.xlu0 %1557, %v742
        %v1559 = vpop.permute.xlu0 %1558
        %1562 = vset.pattern.permute.xlu0 0
        %1563 = vperm.xlu0 %1562, %v743
        %v1564 = vpop.permute.xlu0 %1563
        %1567 = vset.pattern.permute.xlu0 0
        %1568 = vperm.xlu0 %1567, %v744
        %v1569 = vpop.permute.xlu0 %1568
        %1572 = vset.pattern.permute.xlu0 0
        %1573 = vperm.xlu0 %1572, %v745
        %v1574 = vpop.permute.xlu0 %1573
        %1577 = vset.pattern.permute.xlu0 0
        %1578 = vperm.xlu0 %1577, %v746
        %v1579 = vpop.permute.xlu0 %1578
        %1582 = vset.pattern.permute.xlu0 0
        %1583 = vperm.xlu0 %1582, %v747
        %v1584 = vpop.permute.xlu0 %1583
        %1587 = vset.pattern.permute.xlu0 0
        %1588 = vperm.xlu0 %1587, %v748
        %v1589 = vpop.permute.xlu0 %1588
        %1592 = vset.pattern.permute.xlu0 0
        %1593 = vperm.xlu0 %1592, %v749
        %v1594 = vpop.permute.xlu0 %1593
        %1597 = vset.pattern.permute.xlu0 0
        %1598 = vperm.xlu0 %1597, %v750
        %v1599 = vpop.permute.xlu0 %1598
        %1602 = vset.pattern.permute.xlu0 0
        %1603 = vperm.xlu0 %1602, %v751
        %v1604 = vpop.permute.xlu0 %1603
        %1607 = vset.pattern.permute.xlu0 0
        %1608 = vperm.xlu0 %1607, %v752
        %v1609 = vpop.permute.xlu0 %1608
        %1612 = vset.pattern.permute.xlu0 0
        %1613 = vperm.xlu0 %1612, %v753
        %v1614 = vpop.permute.xlu0 %1613
        %1617 = vset.pattern.permute.xlu0 0
        %1618 = vperm.xlu0 %1617, %v754
        %v1619 = vpop.permute.xlu0 %1618
        %1622 = vset.pattern.permute.xlu0 0
        %1623 = vperm.xlu0 %1622, %v755
        %v1624 = vpop.permute.xlu0 %1623
        %1627 = vset.pattern.permute.xlu0 0
        %1628 = vperm.xlu0 %1627, %v756
        %v1629 = vpop.permute.xlu0 %1628
        %1632 = vset.pattern.permute.xlu0 0
        %1633 = vperm.xlu0 %1632, %v757
        %v1634 = vpop.permute.xlu0 %1633
        %1637 = vset.pattern.permute.xlu0 0
        %1638 = vperm.xlu0 %1637, %v758
        %v1639 = vpop.permute.xlu0 %1638
        %1642 = vset.pattern.permute.xlu0 0
        %1643 = vperm.xlu0 %1642, %v759
        %v1644 = vpop.permute.xlu0 %1643
        %1647 = vset.pattern.permute.xlu0 0
        %1648 = vperm.xlu0 %1647, %v760
        %v1649 = vpop.permute.xlu0 %1648
        %1652 = vset.pattern.permute.xlu0 0
        %1653 = vperm.xlu0 %1652, %v761
        %v1654 = vpop.permute.xlu0 %1653
        %1657 = vset.pattern.permute.xlu0 0
        %1658 = vperm.xlu0 %1657, %v762
        %v1659 = vpop.permute.xlu0 %1658
        %1662 = vset.pattern.permute.xlu0 0
        %1663 = vperm.xlu0 %1662, %v763
        %v1664 = vpop.permute.xlu0 %1663
        %1667 = vset.pattern.permute.xlu0 0
        %1668 = vperm.xlu0 %1667, %v764
        %v1669 = vpop.permute.xlu0 %1668
        %1672 = vset.pattern.permute.xlu0 0
        %1673 = vperm.xlu0 %1672, %v765
        %v1674 = vpop.permute.xlu0 %1673
        %1677 = vset.pattern.permute.xlu0 0
        %1678 = vperm.xlu0 %1677, %v766
        %v1679 = vpop.permute.xlu0 %1678
        %1682 = vset.pattern.permute.xlu0 0
        %1683 = vperm.xlu0 %1682, %v767
        %v1684 = vpop.permute.xlu0 %1683
        %1687 = vset.pattern.permute.xlu0 0
        %1688 = vperm.xlu0 %1687, %v768
        %v1689 = vpop.permute.xlu0 %1688
        %1692 = vset.pattern.permute.xlu0 0
        %1693 = vperm.xlu0 %1692, %v769
        %v1694 = vpop.permute.xlu0 %1693
        %1697 = vset.pattern.permute.xlu0 0
        %1698 = vperm.xlu0 %1697, %v770
        %v1699 = vpop.permute.xlu0 %1698
        %1702 = vset.pattern.permute.xlu0 0
        %1703 = vperm.xlu0 %1702, %v771
        %v1704 = vpop.permute.xlu0 %1703
        %1707 = vset.pattern.permute.xlu0 0
        %1708 = vperm.xlu0 %1707, %v772
        %v1709 = vpop.permute.xlu0 %1708
        %1712 = vset.pattern.permute.xlu0 0
        %1713 = vperm.xlu0 %1712, %v773
        %v1714 = vpop.permute.xlu0 %1713
        %1717 = vset.pattern.permute.xlu0 0
        %1718 = vperm.xlu0 %1717, %v774
        %v1719 = vpop.permute.xlu0 %1718
        %1722 = vset.pattern.permute.xlu0 0
        %1723 = vperm.xlu0 %1722, %v775
        %v1724 = vpop.permute.xlu0 %1723
        %1727 = vset.pattern.permute.xlu0 0
        %1728 = vperm.xlu0 %1727, %v776
        %v1729 = vpop.permute.xlu0 %1728
        %1732 = vset.pattern.permute.xlu0 0
        %1733 = vperm.xlu0 %1732, %v777
        %v1734 = vpop.permute.xlu0 %1733
        %1737 = vset.pattern.permute.xlu0 0
        %1738 = vperm.xlu0 %1737, %v778
        %v1739 = vpop.permute.xlu0 %1738
        %1742 = vset.pattern.permute.xlu0 0
        %1743 = vperm.xlu0 %1742, %v779
        %v1744 = vpop.permute.xlu0 %1743
        %1747 = vset.pattern.permute.xlu0 0
        %1748 = vperm.xlu0 %1747, %v780
        %v1749 = vpop.permute.xlu0 %1748
        %1752 = vset.pattern.permute.xlu0 0
        %1753 = vperm.xlu0 %1752, %v781
        %v1754 = vpop.permute.xlu0 %1753
        %1757 = vset.pattern.permute.xlu0 0
        %1758 = vperm.xlu0 %1757, %v782
        %v1759 = vpop.permute.xlu0 %1758
        %1762 = vset.pattern.permute.xlu0 0
        %1763 = vperm.xlu0 %1762, %v783
        %v1764 = vpop.permute.xlu0 %1763
        %1767 = vset.pattern.permute.xlu0 0
        %1768 = vperm.xlu0 %1767, %v784
        %v1769 = vpop.permute.xlu0 %1768
        %1772 = vset.pattern.permute.xlu0 0
        %1773 = vperm.xlu0 %1772, %v785
        %v1774 = vpop.permute.xlu0 %1773
        %1777 = vset.pattern.permute.xlu0 0
        %1778 = vperm.xlu0 %1777, %v786
        %v1779 = vpop.permute.xlu0 %1778
        %1782 = vset.pattern.permute.xlu0 0
        %1783 = vperm.xlu0 %1782, %v787
        %v1784 = vpop.permute.xlu0 %1783
        %1787 = vset.pattern.permute.xlu0 0
        %1788 = vperm.xlu0 %1787, %v788
        %v1789 = vpop.permute.xlu0 %1788
        %1792 = vset.pattern.permute.xlu0 0
        %1793 = vperm.xlu0 %1792, %v789
        %v1794 = vpop.permute.xlu0 %1793
        %1797 = vset.pattern.permute.xlu0 0
        %1798 = vperm.xlu0 %1797, %v790
        %v1799 = vpop.permute.xlu0 %1798
        %1802 = vset.pattern.permute.xlu0 0
        %1803 = vperm.xlu0 %1802, %v791
        %v1804 = vpop.permute.xlu0 %1803
        %1807 = vset.pattern.permute.xlu0 0
        %1808 = vperm.xlu0 %1807, %v792
        %v1809 = vpop.permute.xlu0 %1808
        %1812 = vset.pattern.permute.xlu0 0
        %1813 = vperm.xlu0 %1812, %v793
        %v1814 = vpop.permute.xlu0 %1813
        %1817 = vset.pattern.permute.xlu0 0
        %1818 = vperm.xlu0 %1817, %v794
        %v1819 = vpop.permute.xlu0 %1818
        %1822 = vset.pattern.permute.xlu0 0
        %1823 = vperm.xlu0 %1822, %v795
        %v1824 = vpop.permute.xlu0 %1823
        %1827 = vset.pattern.permute.xlu0 0
        %1828 = vperm.xlu0 %1827, %v796
        %v1829 = vpop.permute.xlu0 %1828
        %1832 = vset.pattern.permute.xlu0 0
        %1833 = vperm.xlu0 %1832, %v797
        %v1834 = vpop.permute.xlu0 %1833
        %1837 = vset.pattern.permute.xlu0 0
        %1838 = vperm.xlu0 %1837, %v798
        %v1839 = vpop.permute.xlu0 %1838
        %1842 = vset.pattern.permute.xlu0 0
        %1843 = vperm.xlu0 %1842, %v799
        %v1844 = vpop.permute.xlu0 %1843
        %1847 = vset.pattern.permute.xlu0 0
        %1848 = vperm.xlu0 %1847, %v800
        %v1849 = vpop.permute.xlu0 %1848
        %1852 = vset.pattern.permute.xlu0 0
        %1853 = vperm.xlu0 %1852, %v801
        %v1854 = vpop.permute.xlu0 %1853
        %1857 = vset.pattern.permute.xlu0 0
        %1858 = vperm.xlu0 %1857, %v802
        %v1859 = vpop.permute.xlu0 %1858
        %1862 = vset.pattern.permute.xlu0 0
        %1863 = vperm.xlu0 %1862, %v803
        %v1864 = vpop.permute.xlu0 %1863
        %1867 = vset.pattern.permute.xlu0 0
        %1868 = vperm.xlu0 %1867, %v804
        %v1869 = vpop.permute.xlu0 %1868
        %1872 = vset.pattern.permute.xlu0 0
        %1873 = vperm.xlu0 %1872, %v805
        %v1874 = vpop.permute.xlu0 %1873
        %1877 = vset.pattern.permute.xlu0 0
        %1878 = vperm.xlu0 %1877, %v806
        %v1879 = vpop.permute.xlu0 %1878
        %1882 = vset.pattern.permute.xlu0 0
        %1883 = vperm.xlu0 %1882, %v807
        %v1884 = vpop.permute.xlu0 %1883
        %1887 = vset.pattern.permute.xlu0 0
        %1888 = vperm.xlu0 %1887, %v808
        %v1889 = vpop.permute.xlu0 %1888
        %1892 = vset.pattern.permute.xlu0 0
        %1893 = vperm.xlu0 %1892, %v809
        %v1894 = vpop.permute.xlu0 %1893
        %1897 = vset.pattern.permute.xlu0 0
        %1898 = vperm.xlu0 %1897, %v810
        %v1899 = vpop.permute.xlu0 %1898
        %1902 = vset.pattern.permute.xlu0 0
        %1903 = vperm.xlu0 %1902, %v811
        %v1904 = vpop.permute.xlu0 %1903
        %1907 = vset.pattern.permute.xlu0 0
        %1908 = vperm.xlu0 %1907, %v812
        %v1909 = vpop.permute.xlu0 %1908
        %1912 = vset.pattern.permute.xlu0 0
        %1913 = vperm.xlu0 %1912, %v813
        %v1914 = vpop.permute.xlu0 %1913
        %1917 = vset.pattern.permute.xlu0 0
        %1918 = vperm.xlu0 %1917, %v814
        %v1919 = vpop.permute.xlu0 %1918
        %1922 = vset.pattern.permute.xlu0 0
        %1923 = vperm.xlu0 %1922, %v815
        %v1924 = vpop.permute.xlu0 %1923
        %1927 = vset.pattern.permute.xlu0 0
        %1928 = vperm.xlu0 %1927, %v816
        %v1929 = vpop.permute.xlu0 %1928
        %1932 = vset.pattern.permute.xlu0 0
        %1933 = vperm.xlu0 %1932, %v817
        %v1934 = vpop.permute.xlu0 %1933
        %1937 = vset.pattern.permute.xlu0 0
        %1938 = vperm.xlu0 %1937, %v818
        %v1939 = vpop.permute.xlu0 %1938
        %1942 = vset.pattern.permute.xlu0 0
        %1943 = vperm.xlu0 %1942, %v819
        %v1944 = vpop.permute.xlu0 %1943
        %1947 = vset.pattern.permute.xlu0 0
        %1948 = vperm.xlu0 %1947, %v820
        %v1949 = vpop.permute.xlu0 %1948
        %1952 = vset.pattern.permute.xlu0 0
        %1953 = vperm.xlu0 %1952, %v821
        %v1954 = vpop.permute.xlu0 %1953
        %1957 = vset.pattern.permute.xlu0 0
        %1958 = vperm.xlu0 %1957, %v822
        %v1959 = vpop.permute.xlu0 %1958
        %1962 = vset.pattern.permute.xlu0 0
        %1963 = vperm.xlu0 %1962, %v823
        %v1964 = vpop.permute.xlu0 %1963
        %1967 = vset.pattern.permute.xlu0 0
        %1968 = vperm.xlu0 %1967, %v824
        %v1969 = vpop.permute.xlu0 %1968
        %1972 = vset.pattern.permute.xlu0 0
        %1973 = vperm.xlu0 %1972, %v825
        %v1974 = vpop.permute.xlu0 %1973
        %1977 = vset.pattern.permute.xlu0 0
        %1978 = vperm.xlu0 %1977, %v826
        %v1979 = vpop.permute.xlu0 %1978
        %1982 = vset.pattern.permute.xlu0 0
        %1983 = vperm.xlu0 %1982, %v827
        %v1984 = vpop.permute.xlu0 %1983
        %1987 = vset.pattern.permute.xlu0 0
        %1988 = vperm.xlu0 %1987, %v828
        %v1989 = vpop.permute.xlu0 %1988
        %1992 = vset.pattern.permute.xlu0 0
        %1993 = vperm.xlu0 %1992, %v829
        %v1994 = vpop.permute.xlu0 %1993
        %1997 = vset.pattern.permute.xlu0 0
        %1998 = vperm.xlu0 %1997, %v830
        %v1999 = vpop.permute.xlu0 %1998
        %2002 = vset.pattern.permute.xlu0 0
        %2003 = vperm.xlu0 %2002, %v831
        %v2004 = vpop.permute.xlu0 %2003
        %2007 = vset.pattern.permute.xlu0 0
        %2008 = vperm.xlu0 %2007, %v832
        %v2009 = vpop.permute.xlu0 %2008
        %2012 = vset.pattern.permute.xlu0 0
        %2013 = vperm.xlu0 %2012, %v833
        %v2014 = vpop.permute.xlu0 %2013
        %2017 = vset.pattern.permute.xlu0 0
        %2018 = vperm.xlu0 %2017, %v834
        %v2019 = vpop.permute.xlu0 %2018
        %2022 = vset.pattern.permute.xlu0 0
        %2023 = vperm.xlu0 %2022, %v835
        %v2024 = vpop.permute.xlu0 %2023
        %2027 = vset.pattern.permute.xlu0 0
        %2028 = vperm.xlu0 %2027, %v836
        %v2029 = vpop.permute.xlu0 %2028
        %2032 = vset.pattern.permute.xlu0 0
        %2033 = vperm.xlu0 %2032, %v837
        %v2034 = vpop.permute.xlu0 %2033
        %2037 = vset.pattern.permute.xlu0 0
        %2038 = vperm.xlu0 %2037, %v838
        %v2039 = vpop.permute.xlu0 %2038
        %2042 = vset.pattern.permute.xlu0 0
        %2043 = vperm.xlu0 %2042, %v839
        %v2044 = vpop.permute.xlu0 %2043
        %2047 = vset.pattern.permute.xlu0 0
        %2048 = vperm.xlu0 %2047, %v840
        %v2049 = vpop.permute.xlu0 %2048
        %2052 = vset.pattern.permute.xlu0 0
        %2053 = vperm.xlu0 %2052, %v841
        %v2054 = vpop.permute.xlu0 %2053
        %2057 = vset.pattern.permute.xlu0 0
        %2058 = vperm.xlu0 %2057, %v842
        %v2059 = vpop.permute.xlu0 %2058
        %2062 = vset.pattern.permute.xlu0 0
        %2063 = vperm.xlu0 %2062, %v843
        %v2064 = vpop.permute.xlu0 %2063
        %2067 = vset.pattern.permute.xlu0 0
        %2068 = vperm.xlu0 %2067, %v844
        %v2069 = vpop.permute.xlu0 %2068
        %2072 = vset.pattern.permute.xlu0 0
        %2073 = vperm.xlu0 %2072, %v845
        %v2074 = vpop.permute.xlu0 %2073
        %2077 = vset.pattern.permute.xlu0 0
        %2078 = vperm.xlu0 %2077, %v846
        %v2079 = vpop.permute.xlu0 %2078
        %2082 = vset.pattern.permute.xlu0 0
        %2083 = vperm.xlu0 %2082, %v847
        %v2084 = vpop.permute.xlu0 %2083
        %2087 = vset.pattern.permute.xlu0 0
        %2088 = vperm.xlu0 %2087, %v848
        %v2089 = vpop.permute.xlu0 %2088
        %2092 = vset.pattern.permute.xlu0 0
        %2093 = vperm.xlu0 %2092, %v849
        %v2094 = vpop.permute.xlu0 %2093
        %2097 = vset.pattern.permute.xlu0 0
        %2098 = vperm.xlu0 %2097, %v850
        %v2099 = vpop.permute.xlu0 %2098
        %2102 = vset.pattern.permute.xlu0 0
        %2103 = vperm.xlu0 %2102, %v851
        %v2104 = vpop.permute.xlu0 %2103
        %2107 = vset.pattern.permute.xlu0 0
        %2108 = vperm.xlu0 %2107, %v852
        %v2109 = vpop.permute.xlu0 %2108
        %2112 = vset.pattern.permute.xlu0 0
        %2113 = vperm.xlu0 %2112, %v853
        %v2114 = vpop.permute.xlu0 %2113
        %2117 = vset.pattern.permute.xlu0 0
        %2118 = vperm.xlu0 %2117, %v854
        %v2119 = vpop.permute.xlu0 %2118
        %2122 = vset.pattern.permute.xlu0 0
        %2123 = vperm.xlu0 %2122, %v855
        %v2124 = vpop.permute.xlu0 %2123
        %2127 = vset.pattern.permute.xlu0 0
        %2128 = vperm.xlu0 %2127, %v856
        %v2129 = vpop.permute.xlu0 %2128
        %2132 = vset.pattern.permute.xlu0 0
        %2133 = vperm.xlu0 %2132, %v857
        %v2134 = vpop.permute.xlu0 %2133
        %2137 = vset.pattern.permute.xlu0 0
        %2138 = vperm.xlu0 %2137, %v858
        %v2139 = vpop.permute.xlu0 %2138
        %2142 = vset.pattern.permute.xlu0 0
        %2143 = vperm.xlu0 %2142, %v859
        %v2144 = vpop.permute.xlu0 %2143
        %2147 = vset.pattern.permute.xlu0 0
        %2148 = vperm.xlu0 %2147, %v860
        %v2149 = vpop.permute.xlu0 %2148
        %v2151 = vmul.f32 %v345, %v864
        %v2152 = vmul.f32 %v346, %v869
        %v2153 = vmul.f32 %v347, %v874
        %v2154 = vmul.f32 %v348, %v879
        %v2155 = vmul.f32 %v349, %v884
        %v2156 = vmul.f32 %v350, %v889
        %v2157 = vmul.f32 %v351, %v894
        %v2158 = vmul.f32 %v352, %v899
        %v2159 = vmul.f32 %v353, %v904
        %v2160 = vmul.f32 %v354, %v909
        %v2161 = vmul.f32 %v355, %v914
        %v2162 = vmul.f32 %v356, %v919
        %v2163 = vmul.f32 %v357, %v924
        %v2164 = vmul.f32 %v358, %v929
        %v2165 = vmul.f32 %v359, %v934
        %v2166 = vmul.f32 %v360, %v939
        %v2167 = vmul.f32 %v361, %v944
        %v2168 = vmul.f32 %v362, %v949
        %v2169 = vmul.f32 %v363, %v954
        %v2170 = vmul.f32 %v364, %v959
        %v2171 = vmul.f32 %v365, %v964
        %v2172 = vmul.f32 %v366, %v969
        %v2173 = vmul.f32 %v367, %v974
        %v2174 = vmul.f32 %v368, %v979
        %v2175 = vmul.f32 %v369, %v984
        %v2176 = vmul.f32 %v370, %v989
        %v2177 = vmul.f32 %v371, %v994
        %v2178 = vmul.f32 %v372, %v999
        %v2179 = vmul.f32 %v373, %v1004
        %v2180 = vmul.f32 %v374, %v1009
        %v2181 = vmul.f32 %v375, %v1014
        %v2182 = vmul.f32 %v376, %v1019
        %v2183 = vmul.f32 %v377, %v1024
        %v2184 = vmul.f32 %v378, %v1029
        %v2185 = vmul.f32 %v379, %v1034
        %v2186 = vmul.f32 %v380, %v1039
        %v2187 = vmul.f32 %v381, %v1044
        %v2188 = vmul.f32 %v382, %v1049
        %v2189 = vmul.f32 %v383, %v1054
        %v2190 = vmul.f32 %v384, %v1059
        %v2191 = vmul.f32 %v385, %v1064
        %v2192 = vmul.f32 %v386, %v1069
        %v2193 = vmul.f32 %v387, %v1074
        %v2194 = vmul.f32 %v388, %v1079
        %v2195 = vmul.f32 %v389, %v1084
        %v2196 = vmul.f32 %v390, %v1089
        %v2197 = vmul.f32 %v391, %v1094
        %v2198 = vmul.f32 %v392, %v1099
        %v2199 = vmul.f32 %v393, %v1104
        %v2200 = vmul.f32 %v394, %v1109
        %v2201 = vmul.f32 %v395, %v1114
        %v2202 = vmul.f32 %v396, %v1119
        %v2203 = vmul.f32 %v397, %v1124
        %v2204 = vmul.f32 %v398, %v1129
        %v2205 = vmul.f32 %v399, %v1134
        %v2206 = vmul.f32 %v400, %v1139
        %v2207 = vmul.f32 %v401, %v1144
        %v2208 = vmul.f32 %v402, %v1149
        %v2209 = vmul.f32 %v403, %v1154
        %v2210 = vmul.f32 %v404, %v1159
        %v2211 = vmul.f32 %v405, %v1164
        %v2212 = vmul.f32 %v406, %v1169
        %v2213 = vmul.f32 %v407, %v1174
        %v2214 = vmul.f32 %v408, %v1179
        %v2215 = vmul.f32 %v409, %v1184
        %v2216 = vmul.f32 %v410, %v1189
        %v2217 = vmul.f32 %v411, %v1194
        %v2218 = vmul.f32 %v412, %v1199
        %v2219 = vmul.f32 %v413, %v1204
        %v2220 = vmul.f32 %v414, %v1209
        %v2221 = vmul.f32 %v415, %v1214
        %v2222 = vmul.f32 %v416, %v1219
        %v2223 = vmul.f32 %v417, %v1224
        %v2224 = vmul.f32 %v418, %v1229
        %v2225 = vmul.f32 %v419, %v1234
        %v2226 = vmul.f32 %v420, %v1239
        %v2227 = vmul.f32 %v421, %v1244
        %v2228 = vmul.f32 %v422, %v1249
        %v2229 = vmul.f32 %v423, %v1254
        %v2230 = vmul.f32 %v424, %v1259
        %v2231 = vmul.f32 %v425, %v1264
        %v2232 = vmul.f32 %v426, %v1269
        %v2233 = vmul.f32 %v427, %v1274
        %v2234 = vmul.f32 %v428, %v1279
        %v2235 = vmul.f32 %v429, %v1284
        %v2236 = vmul.f32 %v430, %v1289
        %v2237 = vmul.f32 %v431, %v1294
        %v2238 = vmul.f32 %v432, %v1299
        %v2239 = vmul.f32 %v433, %v1304
        %v2240 = vmul.f32 %v434, %v1309
        %v2241 = vmul.f32 %v435, %v1314
        %v2242 = vmul.f32 %v436, %v1319
        %v2243 = vmul.f32 %v437, %v1324
        %v2244 = vmul.f32 %v438, %v1329
        %v2245 = vmul.f32 %v439, %v1334
        %v2246 = vmul.f32 %v440, %v1339
        %v2247 = vmul.f32 %v441, %v1344
        %v2248 = vmul.f32 %v442, %v1349
        %v2249 = vmul.f32 %v443, %v1354
        %v2250 = vmul.f32 %v444, %v1359
        %v2251 = vmul.f32 %v445, %v1364
        %v2252 = vmul.f32 %v446, %v1369
        %v2253 = vmul.f32 %v447, %v1374
        %v2254 = vmul.f32 %v448, %v1379
        %v2255 = vmul.f32 %v449, %v1384
        %v2256 = vmul.f32 %v450, %v1389
        %v2257 = vmul.f32 %v451, %v1394
        %v2258 = vmul.f32 %v452, %v1399
        %v2259 = vmul.f32 %v453, %v1404
        %v2260 = vmul.f32 %v454, %v1409
        %v2261 = vmul.f32 %v455, %v1414
        %v2262 = vmul.f32 %v456, %v1419
        %v2263 = vmul.f32 %v457, %v1424
        %v2264 = vmul.f32 %v458, %v1429
        %v2265 = vmul.f32 %v459, %v1434
        %v2266 = vmul.f32 %v460, %v1439
        %v2267 = vmul.f32 %v461, %v1444
        %v2268 = vmul.f32 %v462, %v1449
        %v2269 = vmul.f32 %v463, %v1454
        %v2270 = vmul.f32 %v464, %v1459
        %v2271 = vmul.f32 %v465, %v1464
        %v2272 = vmul.f32 %v466, %v1469
        %v2273 = vmul.f32 %v467, %v1474
        %v2274 = vmul.f32 %v468, %v1479
        %v2275 = vmul.f32 %v469, %v1484
        %v2276 = vmul.f32 %v470, %v1489
        %v2277 = vmul.f32 %v471, %v1494
        %v2278 = vmul.f32 %v472, %v1499
        %v2279 = vmul.f32 %v473, %v1504
        %v2280 = vmul.f32 %v474, %v1509
        %v2281 = vmul.f32 %v475, %v1514
        %v2282 = vmul.f32 %v476, %v1519
        %v2283 = vmul.f32 %v477, %v1524
        %v2284 = vmul.f32 %v478, %v1529
        %v2285 = vmul.f32 %v479, %v1534
        %v2286 = vmul.f32 %v480, %v1539
        %v2287 = vmul.f32 %v481, %v1544
        %v2288 = vmul.f32 %v482, %v1549
        %v2289 = vmul.f32 %v483, %v1554
        %v2290 = vmul.f32 %v484, %v1559
        %v2291 = vmul.f32 %v485, %v1564
        %v2292 = vmul.f32 %v486, %v1569
        %v2293 = vmul.f32 %v487, %v1574
        %v2294 = vmul.f32 %v488, %v1579
        %v2295 = vmul.f32 %v489, %v1584
        %v2296 = vmul.f32 %v490, %v1589
        %v2297 = vmul.f32 %v491, %v1594
        %v2298 = vmul.f32 %v492, %v1599
        %v2299 = vmul.f32 %v493, %v1604
        %v2300 = vmul.f32 %v494, %v1609
        %v2301 = vmul.f32 %v495, %v1614
        %v2302 = vmul.f32 %v496, %v1619
        %v2303 = vmul.f32 %v497, %v1624
        %v2304 = vmul.f32 %v498, %v1629
        %v2305 = vmul.f32 %v499, %v1634
        %v2306 = vmul.f32 %v500, %v1639
        %v2307 = vmul.f32 %v501, %v1644
        %v2308 = vmul.f32 %v502, %v1649
        %v2309 = vmul.f32 %v503, %v1654
        %v2310 = vmul.f32 %v504, %v1659
        %v2311 = vmul.f32 %v505, %v1664
        %v2312 = vmul.f32 %v506, %v1669
        %v2313 = vmul.f32 %v507, %v1674
        %v2314 = vmul.f32 %v508, %v1679
        %v2315 = vmul.f32 %v509, %v1684
        %v2316 = vmul.f32 %v510, %v1689
        %v2317 = vmul.f32 %v511, %v1694
        %v2318 = vmul.f32 %v512, %v1699
        %v2319 = vmul.f32 %v513, %v1704
        %v2320 = vmul.f32 %v514, %v1709
        %v2321 = vmul.f32 %v515, %v1714
        %v2322 = vmul.f32 %v516, %v1719
        %v2323 = vmul.f32 %v517, %v1724
        %v2324 = vmul.f32 %v518, %v1729
        %v2325 = vmul.f32 %v519, %v1734
        %v2326 = vmul.f32 %v520, %v1739
        %v2327 = vmul.f32 %v521, %v1744
        %v2328 = vmul.f32 %v522, %v1749
        %v2329 = vmul.f32 %v523, %v1754
        %v2330 = vmul.f32 %v524, %v1759
        %v2331 = vmul.f32 %v525, %v1764
        %v2332 = vmul.f32 %v526, %v1769
        %v2333 = vmul.f32 %v527, %v1774
        %v2334 = vmul.f32 %v528, %v1779
        %v2335 = vmul.f32 %v529, %v1784
        %v2336 = vmul.f32 %v530, %v1789
        %v2337 = vmul.f32 %v531, %v1794
        %v2338 = vmul.f32 %v532, %v1799
        %v2339 = vmul.f32 %v533, %v1804
        %v2340 = vmul.f32 %v534, %v1809
        %v2341 = vmul.f32 %v535, %v1814
        %v2342 = vmul.f32 %v536, %v1819
        %v2343 = vmul.f32 %v537, %v1824
        %v2344 = vmul.f32 %v538, %v1829
        %v2345 = vmul.f32 %v539, %v1834
        %v2346 = vmul.f32 %v540, %v1839
        %v2347 = vmul.f32 %v541, %v1844
        %v2348 = vmul.f32 %v542, %v1849
        %v2349 = vmul.f32 %v543, %v1854
        %v2350 = vmul.f32 %v544, %v1859
        %v2351 = vmul.f32 %v545, %v1864
        %v2352 = vmul.f32 %v546, %v1869
        %v2353 = vmul.f32 %v547, %v1874
        %v2354 = vmul.f32 %v548, %v1879
        %v2355 = vmul.f32 %v549, %v1884
        %v2356 = vmul.f32 %v550, %v1889
        %v2357 = vmul.f32 %v551, %v1894
        %v2358 = vmul.f32 %v552, %v1899
        %v2359 = vmul.f32 %v553, %v1904
        %v2360 = vmul.f32 %v554, %v1909
        %v2361 = vmul.f32 %v555, %v1914
        %v2362 = vmul.f32 %v556, %v1919
        %v2363 = vmul.f32 %v557, %v1924
        %v2364 = vmul.f32 %v558, %v1929
        %v2365 = vmul.f32 %v559, %v1934
        %v2366 = vmul.f32 %v560, %v1939
        %v2367 = vmul.f32 %v561, %v1944
        %v2368 = vmul.f32 %v562, %v1949
        %v2369 = vmul.f32 %v563, %v1954
        %v2370 = vmul.f32 %v564, %v1959
        %v2371 = vmul.f32 %v565, %v1964
        %v2372 = vmul.f32 %v566, %v1969
        %v2373 = vmul.f32 %v567, %v1974
        %v2374 = vmul.f32 %v568, %v1979
        %v2375 = vmul.f32 %v569, %v1984
        %v2376 = vmul.f32 %v570, %v1989
        %v2377 = vmul.f32 %v571, %v1994
        %v2378 = vmul.f32 %v572, %v1999
        %v2379 = vmul.f32 %v573, %v2004
        %v2380 = vmul.f32 %v574, %v2009
        %v2381 = vmul.f32 %v575, %v2014
        %v2382 = vmul.f32 %v576, %v2019
        %v2383 = vmul.f32 %v577, %v2024
        %v2384 = vmul.f32 %v578, %v2029
        %v2385 = vmul.f32 %v579, %v2034
        %v2386 = vmul.f32 %v580, %v2039
        %v2387 = vmul.f32 %v581, %v2044
        %v2388 = vmul.f32 %v582, %v2049
        %v2389 = vmul.f32 %v583, %v2054
        %v2390 = vmul.f32 %v584, %v2059
        %v2391 = vmul.f32 %v585, %v2064
        %v2392 = vmul.f32 %v586, %v2069
        %v2393 = vmul.f32 %v587, %v2074
        %v2394 = vmul.f32 %v588, %v2079
        %v2395 = vmul.f32 %v589, %v2084
        %v2396 = vmul.f32 %v590, %v2089
        %v2397 = vmul.f32 %v591, %v2094
        %v2398 = vmul.f32 %v592, %v2099
        %v2399 = vmul.f32 %v593, %v2104
        %v2400 = vmul.f32 %v594, %v2109
        %v2401 = vmul.f32 %v595, %v2114
        %v2402 = vmul.f32 %v596, %v2119
        %v2403 = vmul.f32 %v597, %v2124
        %v2404 = vmul.f32 %v598, %v2129
        %v2405 = vmul.f32 %v599, %v2134
        %v2406 = vmul.f32 %v600, %v2139
        %v2407 = vmul.f32 %v601, %v2144
        %v2408 = vmul.f32 %v602, %v2149
        %v2409 = vld [vmem:[%s261] sm:$0xff]
        %v2410 = vld [vmem:[%s261 + $0x8] sm:$0xff]
        %v2411 = vld [vmem:[%s261 + $0x10] sm:$0xff]
        %v2412 = vld [vmem:[%s261 + $0x18] sm:$0xff]
        %v2413 = vld [vmem:[%s261 + $0x20] sm:$0xff]
        %v2414 = vld [vmem:[%s261 + $0x28] sm:$0xff]
        %v2415 = vld [vmem:[%s261 + $0x30] sm:$0xff]
        %v2416 = vld [vmem:[%s261 + $0x38] sm:$0xff]
        %v2417 = vld [vmem:[%s261 + $0x40] sm:$0xff]
        %v2418 = vld [vmem:[%s261 + $0x48] sm:$0xff]
        %v2419 = vld [vmem:[%s261 + $0x50] sm:$0xff]
        %v2420 = vld [vmem:[%s261 + $0x58] sm:$0xff]
        %v2421 = vld [vmem:[%s261 + $0x60] sm:$0xff]
        %v2422 = vld [vmem:[%s261 + $0x68] sm:$0xff]
        %v2423 = vld [vmem:[%s261 + $0x70] sm:$0xff]
        %v2424 = vld [vmem:[%s261 + $0x78] sm:$0xff]
        %v2425 = vld [vmem:[%s261 + $0x80] sm:$0xff]
        %v2426 = vld [vmem:[%s261 + $0x88] sm:$0xff]
        %v2427 = vld [vmem:[%s261 + $0x90] sm:$0xff]
        %v2428 = vld [vmem:[%s261 + $0x98] sm:$0xff]
        %v2429 = vld [vmem:[%s261 + $0xa0] sm:$0xff]
        %v2430 = vld [vmem:[%s261 + $0xa8] sm:$0xff]
        %v2431 = vld [vmem:[%s261 + $0xb0] sm:$0xff]
        %v2432 = vld [vmem:[%s261 + $0xb8] sm:$0xff]
        %v2433 = vld [vmem:[%s261 + $0xc0] sm:$0xff]
        %v2434 = vld [vmem:[%s261 + $0xc8] sm:$0xff]
        %v2435 = vld [vmem:[%s261 + $0xd0] sm:$0xff]
        %v2436 = vld [vmem:[%s261 + $0xd8] sm:$0xff]
        %v2437 = vld [vmem:[%s261 + $0xe0] sm:$0xff]
        %v2438 = vld [vmem:[%s261 + $0xe8] sm:$0xff]
        %v2439 = vld [vmem:[%s261 + $0xf0] sm:$0xff]
        %v2440 = vld [vmem:[%s261 + $0xf8] sm:$0xff]
        %v2441 = vld [vmem:[%s261 + $0x100] sm:$0xff]
        %v2442 = vld [vmem:[%s261 + $0x108] sm:$0xff]
        %v2443 = vld [vmem:[%s261 + $0x110] sm:$0xff]
        %v2444 = vld [vmem:[%s261 + $0x118] sm:$0xff]
        %v2445 = vld [vmem:[%s261 + $0x120] sm:$0xff]
        %v2446 = vld [vmem:[%s261 + $0x128] sm:$0xff]
        %v2447 = vld [vmem:[%s261 + $0x130] sm:$0xff]
        %v2448 = vld [vmem:[%s261 + $0x138] sm:$0xff]
        %v2449 = vld [vmem:[%s261 + $0x140] sm:$0xff]
        %v2450 = vld [vmem:[%s261 + $0x148] sm:$0xff]
        %v2451 = vld [vmem:[%s261 + $0x150] sm:$0xff]
        %v2452 = vld [vmem:[%s261 + $0x158] sm:$0xff]
        %v2453 = vld [vmem:[%s261 + $0x160] sm:$0xff]
        %v2454 = vld [vmem:[%s261 + $0x168] sm:$0xff]
        %v2455 = vld [vmem:[%s261 + $0x170] sm:$0xff]
        %v2456 = vld [vmem:[%s261 + $0x178] sm:$0xff]
        %v2457 = vld [vmem:[%s261 + $0x180] sm:$0xff]
        %v2458 = vld [vmem:[%s261 + $0x188] sm:$0xff]
        %v2459 = vld [vmem:[%s261 + $0x190] sm:$0xff]
        %v2460 = vld [vmem:[%s261 + $0x198] sm:$0xff]
        %v2461 = vld [vmem:[%s261 + $0x1a0] sm:$0xff]
        %v2462 = vld [vmem:[%s261 + $0x1a8] sm:$0xff]
        %v2463 = vld [vmem:[%s261 + $0x1b0] sm:$0xff]
        %v2464 = vld [vmem:[%s261 + $0x1b8] sm:$0xff]
        %v2465 = vld [vmem:[%s261 + $0x1c0] sm:$0xff]
        %v2466 = vld [vmem:[%s261 + $0x1c8] sm:$0xff]
        %v2467 = vld [vmem:[%s261 + $0x1d0] sm:$0xff]
        %v2468 = vld [vmem:[%s261 + $0x1d8] sm:$0xff]
        %v2469 = vld [vmem:[%s261 + $0x1e0] sm:$0xff]
        %v2470 = vld [vmem:[%s261 + $0x1e8] sm:$0xff]
        %v2471 = vld [vmem:[%s261 + $0x1f0] sm:$0xff]
        %v2472 = vld [vmem:[%s261 + $0x1f8] sm:$0xff]
        %v2473 = vld [vmem:[%s261 + $0x200] sm:$0xff]
        %v2474 = vld [vmem:[%s261 + $0x208] sm:$0xff]
        %v2475 = vld [vmem:[%s261 + $0x210] sm:$0xff]
        %v2476 = vld [vmem:[%s261 + $0x218] sm:$0xff]
        %v2477 = vld [vmem:[%s261 + $0x220] sm:$0xff]
        %v2478 = vld [vmem:[%s261 + $0x228] sm:$0xff]
        %v2479 = vld [vmem:[%s261 + $0x230] sm:$0xff]
        %v2480 = vld [vmem:[%s261 + $0x238] sm:$0xff]
        %v2481 = vld [vmem:[%s261 + $0x240] sm:$0xff]
        %v2482 = vld [vmem:[%s261 + $0x248] sm:$0xff]
        %v2483 = vld [vmem:[%s261 + $0x250] sm:$0xff]
        %v2484 = vld [vmem:[%s261 + $0x258] sm:$0xff]
        %v2485 = vld [vmem:[%s261 + $0x260] sm:$0xff]
        %v2486 = vld [vmem:[%s261 + $0x268] sm:$0xff]
        %v2487 = vld [vmem:[%s261 + $0x270] sm:$0xff]
        %v2488 = vld [vmem:[%s261 + $0x278] sm:$0xff]
        %v2489 = vld [vmem:[%s261 + $0x280] sm:$0xff]
        %v2490 = vld [vmem:[%s261 + $0x288] sm:$0xff]
        %v2491 = vld [vmem:[%s261 + $0x290] sm:$0xff]
        %v2492 = vld [vmem:[%s261 + $0x298] sm:$0xff]
        %v2493 = vld [vmem:[%s261 + $0x2a0] sm:$0xff]
        %v2494 = vld [vmem:[%s261 + $0x2a8] sm:$0xff]
        %v2495 = vld [vmem:[%s261 + $0x2b0] sm:$0xff]
        %v2496 = vld [vmem:[%s261 + $0x2b8] sm:$0xff]
        %v2497 = vld [vmem:[%s261 + $0x2c0] sm:$0xff]
        %v2498 = vld [vmem:[%s261 + $0x2c8] sm:$0xff]
        %v2499 = vld [vmem:[%s261 + $0x2d0] sm:$0xff]
        %v2500 = vld [vmem:[%s261 + $0x2d8] sm:$0xff]
        %v2501 = vld [vmem:[%s261 + $0x2e0] sm:$0xff]
        %v2502 = vld [vmem:[%s261 + $0x2e8] sm:$0xff]
        %v2503 = vld [vmem:[%s261 + $0x2f0] sm:$0xff]
        %v2504 = vld [vmem:[%s261 + $0x2f8] sm:$0xff]
        %v2505 = vld [vmem:[%s261 + $0x300] sm:$0xff]
        %v2506 = vld [vmem:[%s261 + $0x308] sm:$0xff]
        %v2507 = vld [vmem:[%s261 + $0x310] sm:$0xff]
        %v2508 = vld [vmem:[%s261 + $0x318] sm:$0xff]
        %v2509 = vld [vmem:[%s261 + $0x320] sm:$0xff]
        %v2510 = vld [vmem:[%s261 + $0x328] sm:$0xff]
        %v2511 = vld [vmem:[%s261 + $0x330] sm:$0xff]
        %v2512 = vld [vmem:[%s261 + $0x338] sm:$0xff]
        %v2513 = vld [vmem:[%s261 + $0x340] sm:$0xff]
        %v2514 = vld [vmem:[%s261 + $0x348] sm:$0xff]
        %v2515 = vld [vmem:[%s261 + $0x350] sm:$0xff]
        %v2516 = vld [vmem:[%s261 + $0x358] sm:$0xff]
        %v2517 = vld [vmem:[%s261 + $0x360] sm:$0xff]
        %v2518 = vld [vmem:[%s261 + $0x368] sm:$0xff]
        %v2519 = vld [vmem:[%s261 + $0x370] sm:$0xff]
        %v2520 = vld [vmem:[%s261 + $0x378] sm:$0xff]
        %v2521 = vld [vmem:[%s261 + $0x380] sm:$0xff]
        %v2522 = vld [vmem:[%s261 + $0x388] sm:$0xff]
        %v2523 = vld [vmem:[%s261 + $0x390] sm:$0xff]
        %v2524 = vld [vmem:[%s261 + $0x398] sm:$0xff]
        %v2525 = vld [vmem:[%s261 + $0x3a0] sm:$0xff]
        %v2526 = vld [vmem:[%s261 + $0x3a8] sm:$0xff]
        %v2527 = vld [vmem:[%s261 + $0x3b0] sm:$0xff]
        %v2528 = vld [vmem:[%s261 + $0x3b8] sm:$0xff]
        %v2529 = vld [vmem:[%s261 + $0x3c0] sm:$0xff]
        %v2530 = vld [vmem:[%s261 + $0x3c8] sm:$0xff]
        %v2531 = vld [vmem:[%s261 + $0x3d0] sm:$0xff]
        %v2532 = vld [vmem:[%s261 + $0x3d8] sm:$0xff]
        %v2533 = vld [vmem:[%s261 + $0x3e0] sm:$0xff]
        %v2534 = vld [vmem:[%s261 + $0x3e8] sm:$0xff]
        %v2535 = vld [vmem:[%s261 + $0x3f0] sm:$0xff]
        %v2536 = vld [vmem:[%s261 + $0x3f8] sm:$0xff]
        %v2537 = vld [vmem:[%s261 + $0x400] sm:$0xff]
        %v2538 = vld [vmem:[%s261 + $0x408] sm:$0xff]
        %v2539 = vld [vmem:[%s261 + $0x410] sm:$0xff]
        %v2540 = vld [vmem:[%s261 + $0x418] sm:$0xff]
        %v2541 = vld [vmem:[%s261 + $0x420] sm:$0xff]
        %v2542 = vld [vmem:[%s261 + $0x428] sm:$0xff]
        %v2543 = vld [vmem:[%s261 + $0x430] sm:$0xff]
        %v2544 = vld [vmem:[%s261 + $0x438] sm:$0xff]
        %v2545 = vld [vmem:[%s261 + $0x440] sm:$0xff]
        %v2546 = vld [vmem:[%s261 + $0x448] sm:$0xff]
        %v2547 = vld [vmem:[%s261 + $0x450] sm:$0xff]
        %v2548 = vld [vmem:[%s261 + $0x458] sm:$0xff]
        %v2549 = vld [vmem:[%s261 + $0x460] sm:$0xff]
        %v2550 = vld [vmem:[%s261 + $0x468] sm:$0xff]
        %v2551 = vld [vmem:[%s261 + $0x470] sm:$0xff]
        %v2552 = vld [vmem:[%s261 + $0x478] sm:$0xff]
        %v2553 = vld [vmem:[%s261 + $0x480] sm:$0xff]
        %v2554 = vld [vmem:[%s261 + $0x488] sm:$0xff]
        %v2555 = vld [vmem:[%s261 + $0x490] sm:$0xff]
        %v2556 = vld [vmem:[%s261 + $0x498] sm:$0xff]
        %v2557 = vld [vmem:[%s261 + $0x4a0] sm:$0xff]
        %v2558 = vld [vmem:[%s261 + $0x4a8] sm:$0xff]
        %v2559 = vld [vmem:[%s261 + $0x4b0] sm:$0xff]
        %v2560 = vld [vmem:[%s261 + $0x4b8] sm:$0xff]
        %v2561 = vld [vmem:[%s261 + $0x4c0] sm:$0xff]
        %v2562 = vld [vmem:[%s261 + $0x4c8] sm:$0xff]
        %v2563 = vld [vmem:[%s261 + $0x4d0] sm:$0xff]
        %v2564 = vld [vmem:[%s261 + $0x4d8] sm:$0xff]
        %v2565 = vld [vmem:[%s261 + $0x4e0] sm:$0xff]
        %v2566 = vld [vmem:[%s261 + $0x4e8] sm:$0xff]
        %v2567 = vld [vmem:[%s261 + $0x4f0] sm:$0xff]
        %v2568 = vld [vmem:[%s261 + $0x4f8] sm:$0xff]
        %v2569 = vld [vmem:[%s261 + $0x500] sm:$0xff]
        %v2570 = vld [vmem:[%s261 + $0x508] sm:$0xff]
        %v2571 = vld [vmem:[%s261 + $0x510] sm:$0xff]
        %v2572 = vld [vmem:[%s261 + $0x518] sm:$0xff]
        %v2573 = vld [vmem:[%s261 + $0x520] sm:$0xff]
        %v2574 = vld [vmem:[%s261 + $0x528] sm:$0xff]
        %v2575 = vld [vmem:[%s261 + $0x530] sm:$0xff]
        %v2576 = vld [vmem:[%s261 + $0x538] sm:$0xff]
        %v2577 = vld [vmem:[%s261 + $0x540] sm:$0xff]
        %v2578 = vld [vmem:[%s261 + $0x548] sm:$0xff]
        %v2579 = vld [vmem:[%s261 + $0x550] sm:$0xff]
        %v2580 = vld [vmem:[%s261 + $0x558] sm:$0xff]
        %v2581 = vld [vmem:[%s261 + $0x560] sm:$0xff]
        %v2582 = vld [vmem:[%s261 + $0x568] sm:$0xff]
        %v2583 = vld [vmem:[%s261 + $0x570] sm:$0xff]
        %v2584 = vld [vmem:[%s261 + $0x578] sm:$0xff]
        %v2585 = vld [vmem:[%s261 + $0x580] sm:$0xff]
        %v2586 = vld [vmem:[%s261 + $0x588] sm:$0xff]
        %v2587 = vld [vmem:[%s261 + $0x590] sm:$0xff]
        %v2588 = vld [vmem:[%s261 + $0x598] sm:$0xff]
        %v2589 = vld [vmem:[%s261 + $0x5a0] sm:$0xff]
        %v2590 = vld [vmem:[%s261 + $0x5a8] sm:$0xff]
        %v2591 = vld [vmem:[%s261 + $0x5b0] sm:$0xff]
        %v2592 = vld [vmem:[%s261 + $0x5b8] sm:$0xff]
        %v2593 = vld [vmem:[%s261 + $0x5c0] sm:$0xff]
        %v2594 = vld [vmem:[%s261 + $0x5c8] sm:$0xff]
        %v2595 = vld [vmem:[%s261 + $0x5d0] sm:$0xff]
        %v2596 = vld [vmem:[%s261 + $0x5d8] sm:$0xff]
        %v2597 = vld [vmem:[%s261 + $0x5e0] sm:$0xff]
        %v2598 = vld [vmem:[%s261 + $0x5e8] sm:$0xff]
        %v2599 = vld [vmem:[%s261 + $0x5f0] sm:$0xff]
        %v2600 = vld [vmem:[%s261 + $0x5f8] sm:$0xff]
        %v2601 = vld [vmem:[%s261 + $0x600] sm:$0xff]
        %v2602 = vld [vmem:[%s261 + $0x608] sm:$0xff]
        %v2603 = vld [vmem:[%s261 + $0x610] sm:$0xff]
        %v2604 = vld [vmem:[%s261 + $0x618] sm:$0xff]
        %v2605 = vld [vmem:[%s261 + $0x620] sm:$0xff]
        %v2606 = vld [vmem:[%s261 + $0x628] sm:$0xff]
        %v2607 = vld [vmem:[%s261 + $0x630] sm:$0xff]
        %v2608 = vld [vmem:[%s261 + $0x638] sm:$0xff]
        %v2609 = vld [vmem:[%s261 + $0x640] sm:$0xff]
        %v2610 = vld [vmem:[%s261 + $0x648] sm:$0xff]
        %v2611 = vld [vmem:[%s261 + $0x650] sm:$0xff]
        %v2612 = vld [vmem:[%s261 + $0x658] sm:$0xff]
        %v2613 = vld [vmem:[%s261 + $0x660] sm:$0xff]
        %v2614 = vld [vmem:[%s261 + $0x668] sm:$0xff]
        %v2615 = vld [vmem:[%s261 + $0x670] sm:$0xff]
        %v2616 = vld [vmem:[%s261 + $0x678] sm:$0xff]
        %v2617 = vld [vmem:[%s261 + $0x680] sm:$0xff]
        %v2618 = vld [vmem:[%s261 + $0x688] sm:$0xff]
        %v2619 = vld [vmem:[%s261 + $0x690] sm:$0xff]
        %v2620 = vld [vmem:[%s261 + $0x698] sm:$0xff]
        %v2621 = vld [vmem:[%s261 + $0x6a0] sm:$0xff]
        %v2622 = vld [vmem:[%s261 + $0x6a8] sm:$0xff]
        %v2623 = vld [vmem:[%s261 + $0x6b0] sm:$0xff]
        %v2624 = vld [vmem:[%s261 + $0x6b8] sm:$0xff]
        %v2625 = vld [vmem:[%s261 + $0x6c0] sm:$0xff]
        %v2626 = vld [vmem:[%s261 + $0x6c8] sm:$0xff]
        %v2627 = vld [vmem:[%s261 + $0x6d0] sm:$0xff]
        %v2628 = vld [vmem:[%s261 + $0x6d8] sm:$0xff]
        %v2629 = vld [vmem:[%s261 + $0x6e0] sm:$0xff]
        %v2630 = vld [vmem:[%s261 + $0x6e8] sm:$0xff]
        %v2631 = vld [vmem:[%s261 + $0x6f0] sm:$0xff]
        %v2632 = vld [vmem:[%s261 + $0x6f8] sm:$0xff]
        %v2633 = vld [vmem:[%s261 + $0x700] sm:$0xff]
        %v2634 = vld [vmem:[%s261 + $0x708] sm:$0xff]
        %v2635 = vld [vmem:[%s261 + $0x710] sm:$0xff]
        %v2636 = vld [vmem:[%s261 + $0x718] sm:$0xff]
        %v2637 = vld [vmem:[%s261 + $0x720] sm:$0xff]
        %v2638 = vld [vmem:[%s261 + $0x728] sm:$0xff]
        %v2639 = vld [vmem:[%s261 + $0x730] sm:$0xff]
        %v2640 = vld [vmem:[%s261 + $0x738] sm:$0xff]
        %v2641 = vld [vmem:[%s261 + $0x740] sm:$0xff]
        %v2642 = vld [vmem:[%s261 + $0x748] sm:$0xff]
        %v2643 = vld [vmem:[%s261 + $0x750] sm:$0xff]
        %v2644 = vld [vmem:[%s261 + $0x758] sm:$0xff]
        %v2645 = vld [vmem:[%s261 + $0x760] sm:$0xff]
        %v2646 = vld [vmem:[%s261 + $0x768] sm:$0xff]
        %v2647 = vld [vmem:[%s261 + $0x770] sm:$0xff]
        %v2648 = vld [vmem:[%s261 + $0x778] sm:$0xff]
        %v2649 = vld [vmem:[%s261 + $0x780] sm:$0xff]
        %v2650 = vld [vmem:[%s261 + $0x788] sm:$0xff]
        %v2651 = vld [vmem:[%s261 + $0x790] sm:$0xff]
        %v2652 = vld [vmem:[%s261 + $0x798] sm:$0xff]
        %v2653 = vld [vmem:[%s261 + $0x7a0] sm:$0xff]
        %v2654 = vld [vmem:[%s261 + $0x7a8] sm:$0xff]
        %v2655 = vld [vmem:[%s261 + $0x7b0] sm:$0xff]
        %v2656 = vld [vmem:[%s261 + $0x7b8] sm:$0xff]
        %v2657 = vld [vmem:[%s261 + $0x7c0] sm:$0xff]
        %v2658 = vld [vmem:[%s261 + $0x7c8] sm:$0xff]
        %v2659 = vld [vmem:[%s261 + $0x7d0] sm:$0xff]
        %v2660 = vld [vmem:[%s261 + $0x7d8] sm:$0xff]
        %v2661 = vld [vmem:[%s261 + $0x7e0] sm:$0xff]
        %v2662 = vld [vmem:[%s261 + $0x7e8] sm:$0xff]
        %v2663 = vld [vmem:[%s261 + $0x7f0] sm:$0xff]
        %v2664 = vld [vmem:[%s261 + $0x7f8] sm:$0xff]
        %v2665 = vld [vmem:[%s261 + $0x800] sm:$0xff]
        %v2666 = vld [vmem:[%s261 + $0x808] sm:$0xff]
        %v2667 = vld [vmem:[%s261 + $0x810] sm:$0xff]
        %v2668 = vld [vmem:[%s261 + $0x818] sm:$0xff]
        %v2669 = vld [vmem:[%s261 + $0x820] sm:$0xff]
        %v2670 = vld [vmem:[%s261 + $0x828] sm:$0xff]
        %v2671 = vld [vmem:[%s261 + $0x830] sm:$0xff]
        %v2672 = vld [vmem:[%s261 + $0x838] sm:$0xff]
        %v2673 = vld [vmem:[%s261 + $0x840] sm:$0xff]
        %v2674 = vld [vmem:[%s261 + $0x848] sm:$0xff]
        %v2675 = vld [vmem:[%s261 + $0x850] sm:$0xff]
        %v2676 = vld [vmem:[%s261 + $0x858] sm:$0xff]
        %v2677 = vld [vmem:[%s261 + $0x860] sm:$0xff]
        %v2678 = vld [vmem:[%s261 + $0x868] sm:$0xff]
        %v2679 = vld [vmem:[%s261 + $0x870] sm:$0xff]
        %v2680 = vld [vmem:[%s261 + $0x878] sm:$0xff]
        %v2681 = vld [vmem:[%s261 + $0x880] sm:$0xff]
        %v2682 = vld [vmem:[%s261 + $0x888] sm:$0xff]
        %v2683 = vld [vmem:[%s261 + $0x890] sm:$0xff]
        %v2684 = vld [vmem:[%s261 + $0x898] sm:$0xff]
        %v2685 = vld [vmem:[%s261 + $0x8a0] sm:$0xff]
        %v2686 = vld [vmem:[%s261 + $0x8a8] sm:$0xff]
        %v2687 = vld [vmem:[%s261 + $0x8b0] sm:$0xff]
        %v2688 = vld [vmem:[%s261 + $0x8b8] sm:$0xff]
        %v2689 = vld [vmem:[%s261 + $0x8c0] sm:$0xff]
        %v2690 = vld [vmem:[%s261 + $0x8c8] sm:$0xff]
        %v2691 = vld [vmem:[%s261 + $0x8d0] sm:$0xff]
        %v2692 = vld [vmem:[%s261 + $0x8d8] sm:$0xff]
        %v2693 = vld [vmem:[%s261 + $0x8e0] sm:$0xff]
        %v2694 = vld [vmem:[%s261 + $0x8e8] sm:$0xff]
        %v2695 = vld [vmem:[%s261 + $0x8f0] sm:$0xff]
        %v2696 = vld [vmem:[%s261 + $0x8f8] sm:$0xff]
        %v2697 = vld [vmem:[%s261 + $0x900] sm:$0xff]
        %v2698 = vld [vmem:[%s261 + $0x908] sm:$0xff]
        %v2699 = vld [vmem:[%s261 + $0x910] sm:$0xff]
        %v2700 = vld [vmem:[%s261 + $0x918] sm:$0xff]
        %v2701 = vld [vmem:[%s261 + $0x920] sm:$0xff]
        %v2702 = vld [vmem:[%s261 + $0x928] sm:$0xff]
        %v2703 = vld [vmem:[%s261 + $0x930] sm:$0xff]
        %v2704 = vld [vmem:[%s261 + $0x938] sm:$0xff]
        %v2705 = vld [vmem:[%s261 + $0x940] sm:$0xff]
        %v2706 = vld [vmem:[%s261 + $0x948] sm:$0xff]
        %v2707 = vld [vmem:[%s261 + $0x950] sm:$0xff]
        %v2708 = vld [vmem:[%s261 + $0x958] sm:$0xff]
        %v2709 = vld [vmem:[%s261 + $0x960] sm:$0xff]
        %v2710 = vld [vmem:[%s261 + $0x968] sm:$0xff]
        %v2711 = vld [vmem:[%s261 + $0x970] sm:$0xff]
        %v2712 = vld [vmem:[%s261 + $0x978] sm:$0xff]
        %v2713 = vld [vmem:[%s261 + $0x980] sm:$0xff]
        %v2714 = vld [vmem:[%s261 + $0x988] sm:$0xff]
        %v2715 = vld [vmem:[%s261 + $0x990] sm:$0xff]
        %v2716 = vld [vmem:[%s261 + $0x998] sm:$0xff]
        %v2717 = vld [vmem:[%s261 + $0x9a0] sm:$0xff]
        %v2718 = vld [vmem:[%s261 + $0x9a8] sm:$0xff]
        %v2719 = vld [vmem:[%s261 + $0x9b0] sm:$0xff]
        %v2720 = vld [vmem:[%s261 + $0x9b8] sm:$0xff]
        %v2721 = vld [vmem:[%s261 + $0x9c0] sm:$0xff]
        %v2722 = vld [vmem:[%s261 + $0x9c8] sm:$0xff]
        %v2723 = vld [vmem:[%s261 + $0x9d0] sm:$0xff]
        %v2724 = vld [vmem:[%s261 + $0x9d8] sm:$0xff]
        %v2725 = vld [vmem:[%s261 + $0x9e0] sm:$0xff]
        %v2726 = vld [vmem:[%s261 + $0x9e8] sm:$0xff]
        %v2727 = vld [vmem:[%s261 + $0x9f0] sm:$0xff]
        %v2728 = vld [vmem:[%s261 + $0x9f8] sm:$0xff]
        %v2729 = vld [vmem:[%s261 + $0xa00] sm:$0xff]
        %v2730 = vld [vmem:[%s261 + $0xa08] sm:$0xff]
        %v2731 = vld [vmem:[%s261 + $0xa10] sm:$0xff]
        %v2732 = vld [vmem:[%s261 + $0xa18] sm:$0xff]
        %v2733 = vld [vmem:[%s261 + $0xa20] sm:$0xff]
        %v2734 = vld [vmem:[%s261 + $0xa28] sm:$0xff]
        %v2735 = vld [vmem:[%s261 + $0xa30] sm:$0xff]
        %v2736 = vld [vmem:[%s261 + $0xa38] sm:$0xff]
        %v2737 = vld [vmem:[%s261 + $0xa40] sm:$0xff]
        %v2738 = vld [vmem:[%s261 + $0xa48] sm:$0xff]
        %v2739 = vld [vmem:[%s261 + $0xa50] sm:$0xff]
        %v2740 = vld [vmem:[%s261 + $0xa58] sm:$0xff]
        %v2741 = vld [vmem:[%s261 + $0xa60] sm:$0xff]
        %v2742 = vld [vmem:[%s261 + $0xa68] sm:$0xff]
        %v2743 = vld [vmem:[%s261 + $0xa70] sm:$0xff]
        %v2744 = vld [vmem:[%s261 + $0xa78] sm:$0xff]
        %v2745 = vld [vmem:[%s261 + $0xa80] sm:$0xff]
        %v2746 = vld [vmem:[%s261 + $0xa88] sm:$0xff]
        %v2747 = vld [vmem:[%s261 + $0xa90] sm:$0xff]
        %v2748 = vld [vmem:[%s261 + $0xa98] sm:$0xff]
        %v2749 = vld [vmem:[%s261 + $0xaa0] sm:$0xff]
        %v2750 = vld [vmem:[%s261 + $0xaa8] sm:$0xff]
        %v2751 = vld [vmem:[%s261 + $0xab0] sm:$0xff]
        %v2752 = vld [vmem:[%s261 + $0xab8] sm:$0xff]
        %v2753 = vld [vmem:[%s261 + $0xac0] sm:$0xff]
        %v2754 = vld [vmem:[%s261 + $0xac8] sm:$0xff]
        %v2755 = vld [vmem:[%s261 + $0xad0] sm:$0xff]
        %v2756 = vld [vmem:[%s261 + $0xad8] sm:$0xff]
        %v2757 = vld [vmem:[%s261 + $0xae0] sm:$0xff]
        %v2758 = vld [vmem:[%s261 + $0xae8] sm:$0xff]
        %v2759 = vld [vmem:[%s261 + $0xaf0] sm:$0xff]
        %v2760 = vld [vmem:[%s261 + $0xaf8] sm:$0xff]
        %v2761 = vld [vmem:[%s261 + $0xb00] sm:$0xff]
        %v2762 = vld [vmem:[%s261 + $0xb08] sm:$0xff]
        %v2763 = vld [vmem:[%s261 + $0xb10] sm:$0xff]
        %v2764 = vld [vmem:[%s261 + $0xb18] sm:$0xff]
        %v2765 = vld [vmem:[%s261 + $0xb20] sm:$0xff]
        %v2766 = vld [vmem:[%s261 + $0xb28] sm:$0xff]
        %v2767 = vld [vmem:[%s261 + $0xb30] sm:$0xff]
        %v2768 = vld [vmem:[%s261 + $0xb38] sm:$0xff]
        %v2769 = vld [vmem:[%s261 + $0xb40] sm:$0xff]
        %v2770 = vld [vmem:[%s261 + $0xb48] sm:$0xff]
        %v2771 = vld [vmem:[%s261 + $0xb50] sm:$0xff]
        %v2772 = vld [vmem:[%s261 + $0xb58] sm:$0xff]
        %v2773 = vld [vmem:[%s261 + $0xb60] sm:$0xff]
        %v2774 = vld [vmem:[%s261 + $0xb68] sm:$0xff]
        %v2775 = vld [vmem:[%s261 + $0xb70] sm:$0xff]
        %v2776 = vld [vmem:[%s261 + $0xb78] sm:$0xff]
        %v2777 = vld [vmem:[%s261 + $0xb80] sm:$0xff]
        %v2778 = vld [vmem:[%s261 + $0xb88] sm:$0xff]
        %v2779 = vld [vmem:[%s261 + $0xb90] sm:$0xff]
        %v2780 = vld [vmem:[%s261 + $0xb98] sm:$0xff]
        %v2781 = vld [vmem:[%s261 + $0xba0] sm:$0xff]
        %v2782 = vld [vmem:[%s261 + $0xba8] sm:$0xff]
        %vm2783 = vcmask 130048
        %v2785 = vsel %vm2783, %v2425, 0
        %v2788 = vsel %vm2783, %v2442, 0
        %v2791 = vsel %vm2783, %v2459, 0
        %v2794 = vsel %vm2783, %v2476, 0
        %v2797 = vsel %vm2783, %v2493, 0
        %v2800 = vsel %vm2783, %v2510, 0
        %v2803 = vsel %vm2783, %v2527, 0
        %v2806 = vsel %vm2783, %v2544, 0
        %v2809 = vsel %vm2783, %v2561, 0
        %v2812 = vsel %vm2783, %v2578, 0
        %v2815 = vsel %vm2783, %v2595, 0
        %v2818 = vsel %vm2783, %v2612, 0
        %v2821 = vsel %vm2783, %v2629, 0
        %v2824 = vsel %vm2783, %v2646, 0
        %v2827 = vsel %vm2783, %v2663, 0
        %v2830 = vsel %vm2783, %v2680, 0
        %v2833 = vsel %vm2783, %v2697, 0
        %v2836 = vsel %vm2783, %v2714, 0
        %v2839 = vsel %vm2783, %v2731, 0
        %v2842 = vsel %vm2783, %v2748, 0
        %v2845 = vsel %vm2783, %v2765, 0
        %v2848 = vsel %vm2783, %v2782, 0
        %2850 = vmatpush.msra.mxu0 %v2166
        %2851 = vmatpush.msra.mxu0 %v2165
        %2852 = vmatpush.msra.mxu0 %v2164
        %2853 = vmatpush.msra.mxu0 %v2163
        %2854 = vmatpush.msra.mxu0 %v2162
        %2855 = vmatpush.msra.mxu0 %v2161
        %2856 = vmatpush.msra.mxu0 %v2160
        %2857 = vmatpush.msra.mxu0 %v2159
        %2858 = vmatpush.msra.mxu0 %v2158
        %2859 = vmatpush.msra.mxu0 %v2157
        %2860 = vmatpush.msra.mxu0 %v2156
        %2861 = vmatpush.msra.mxu0 %v2155
        %2862 = vmatpush.msra.mxu0 %v2154
        %2863 = vmatpush.msra.mxu0 %v2153
        %2864 = vmatpush.msra.mxu0 %v2152
        %2865 = vmatpush.msra.mxu0 %v2151
        %2866 = vmatmul.f32.gmra.mxu0 %v2409
        %v2867 = vpop.f32.mrf.mxu0
        %v2868 = vadd.f32 0.0, %v2867
        %2869 = vmatmul.f32.gmra.mxu0 %v2426
        %v2870 = vpop.f32.mrf.mxu0
        %v2871 = vadd.f32 0.0, %v2870
        %2872 = vmatmul.f32.gmra.mxu0 %v2443
        %v2873 = vpop.f32.mrf.mxu0
        %v2874 = vadd.f32 0.0, %v2873
        %2875 = vmatmul.f32.gmra.mxu0 %v2460
        %v2876 = vpop.f32.mrf.mxu0
        %v2877 = vadd.f32 0.0, %v2876
        %2878 = vmatmul.f32.gmra.mxu0 %v2477
        %v2879 = vpop.f32.mrf.mxu0
        %v2880 = vadd.f32 0.0, %v2879
        %2881 = vmatmul.f32.gmra.mxu0 %v2494
        %v2882 = vpop.f32.mrf.mxu0
        %v2883 = vadd.f32 0.0, %v2882
        %2884 = vmatmul.f32.gmra.mxu0 %v2511
        %v2885 = vpop.f32.mrf.mxu0
        %v2886 = vadd.f32 0.0, %v2885
        %2887 = vmatmul.f32.gmra.mxu0 %v2528
        %v2888 = vpop.f32.mrf.mxu0
        %v2889 = vadd.f32 0.0, %v2888
        %2890 = vmatmul.f32.gmra.mxu0 %v2545
        %v2891 = vpop.f32.mrf.mxu0
        %v2892 = vadd.f32 0.0, %v2891
        %2893 = vmatmul.f32.gmra.mxu0 %v2562
        %v2894 = vpop.f32.mrf.mxu0
        %v2895 = vadd.f32 0.0, %v2894
        %2896 = vmatmul.f32.gmra.mxu0 %v2579
        %v2897 = vpop.f32.mrf.mxu0
        %v2898 = vadd.f32 0.0, %v2897
        %2899 = vmatmul.f32.gmra.mxu0 %v2596
        %v2900 = vpop.f32.mrf.mxu0
        %v2901 = vadd.f32 0.0, %v2900
        %2902 = vmatmul.f32.gmra.mxu0 %v2613
        %v2903 = vpop.f32.mrf.mxu0
        %v2904 = vadd.f32 0.0, %v2903
        %2905 = vmatmul.f32.gmra.mxu0 %v2630
        %v2906 = vpop.f32.mrf.mxu0
        %v2907 = vadd.f32 0.0, %v2906
        %2908 = vmatmul.f32.gmra.mxu0 %v2647
        %v2909 = vpop.f32.mrf.mxu0
        %v2910 = vadd.f32 0.0, %v2909
        %2911 = vmatmul.f32.gmra.mxu0 %v2664
        %v2912 = vpop.f32.mrf.mxu0
        %v2913 = vadd.f32 0.0, %v2912
        %2914 = vmatmul.f32.gmra.mxu0 %v2681
        %v2915 = vpop.f32.mrf.mxu0
        %v2916 = vadd.f32 0.0, %v2915
        %2917 = vmatmul.f32.gmra.mxu0 %v2698
        %v2918 = vpop.f32.mrf.mxu0
        %v2919 = vadd.f32 0.0, %v2918
        %2920 = vmatmul.f32.gmra.mxu0 %v2715
        %v2921 = vpop.f32.mrf.mxu0
        %v2922 = vadd.f32 0.0, %v2921
        %2923 = vmatmul.f32.gmra.mxu0 %v2732
        %v2924 = vpop.f32.mrf.mxu0
        %v2925 = vadd.f32 0.0, %v2924
        %2926 = vmatmul.f32.gmra.mxu0 %v2749
        %v2927 = vpop.f32.mrf.mxu0
        %v2928 = vadd.f32 0.0, %v2927
        %2929 = vmatmul.f32.gmra.mxu0 %v2766
        %v2930 = vpop.f32.mrf.mxu0
        %v2931 = vadd.f32 0.0, %v2930
        %2932 = vdwg.mxu0
        %2933 = vmatpush.msra.mxu0 %v2182
        %2934 = vmatpush.msra.mxu0 %v2181
        %2935 = vmatpush.msra.mxu0 %v2180
        %2936 = vmatpush.msra.mxu0 %v2179
        %2937 = vmatpush.msra.mxu0 %v2178
        %2938 = vmatpush.msra.mxu0 %v2177
        %2939 = vmatpush.msra.mxu0 %v2176
        %2940 = vmatpush.msra.mxu0 %v2175
        %2941 = vmatpush.msra.mxu0 %v2174
        %2942 = vmatpush.msra.mxu0 %v2173
        %2943 = vmatpush.msra.mxu0 %v2172
        %2944 = vmatpush.msra.mxu0 %v2171
        %2945 = vmatpush.msra.mxu0 %v2170
        %2946 = vmatpush.msra.mxu0 %v2169
        %2947 = vmatpush.msra.mxu0 %v2168
        %2948 = vmatpush.msra.mxu0 %v2167
        %2949 = vmatmul.f32.gmra.mxu0 %v2410
        %v2950 = vpop.f32.mrf.mxu0
        %v2951 = vadd.f32 %v2868, %v2950
        %2952 = vmatmul.f32.gmra.mxu0 %v2427
        %v2953 = vpop.f32.mrf.mxu0
        %v2954 = vadd.f32 %v2871, %v2953
        %2955 = vmatmul.f32.gmra.mxu0 %v2444
        %v2956 = vpop.f32.mrf.mxu0
        %v2957 = vadd.f32 %v2874, %v2956
        %2958 = vmatmul.f32.gmra.mxu0 %v2461
        %v2959 = vpop.f32.mrf.mxu0
        %v2960 = vadd.f32 %v2877, %v2959
        %2961 = vmatmul.f32.gmra.mxu0 %v2478
        %v2962 = vpop.f32.mrf.mxu0
        %v2963 = vadd.f32 %v2880, %v2962
        %2964 = vmatmul.f32.gmra.mxu0 %v2495
        %v2965 = vpop.f32.mrf.mxu0
        %v2966 = vadd.f32 %v2883, %v2965
        %2967 = vmatmul.f32.gmra.mxu0 %v2512
        %v2968 = vpop.f32.mrf.mxu0
        %v2969 = vadd.f32 %v2886, %v2968
        %2970 = vmatmul.f32.gmra.mxu0 %v2529
        %v2971 = vpop.f32.mrf.mxu0
        %v2972 = vadd.f32 %v2889, %v2971
        %2973 = vmatmul.f32.gmra.mxu0 %v2546
        %v2974 = vpop.f32.mrf.mxu0
        %v2975 = vadd.f32 %v2892, %v2974
        %2976 = vmatmul.f32.gmra.mxu0 %v2563
        %v2977 = vpop.f32.mrf.mxu0
        %v2978 = vadd.f32 %v2895, %v2977
        %2979 = vmatmul.f32.gmra.mxu0 %v2580
        %v2980 = vpop.f32.mrf.mxu0
        %v2981 = vadd.f32 %v2898, %v2980
        %2982 = vmatmul.f32.gmra.mxu0 %v2597
        %v2983 = vpop.f32.mrf.mxu0
        %v2984 = vadd.f32 %v2901, %v2983
        %2985 = vmatmul.f32.gmra.mxu0 %v2614
        %v2986 = vpop.f32.mrf.mxu0
        %v2987 = vadd.f32 %v2904, %v2986
        %2988 = vmatmul.f32.gmra.mxu0 %v2631
        %v2989 = vpop.f32.mrf.mxu0
        %v2990 = vadd.f32 %v2907, %v2989
        %2991 = vmatmul.f32.gmra.mxu0 %v2648
        %v2992 = vpop.f32.mrf.mxu0
        %v2993 = vadd.f32 %v2910, %v2992
        %2994 = vmatmul.f32.gmra.mxu0 %v2665
        %v2995 = vpop.f32.mrf.mxu0
        %v2996 = vadd.f32 %v2913, %v2995
        %2997 = vmatmul.f32.gmra.mxu0 %v2682
        %v2998 = vpop.f32.mrf.mxu0
        %v2999 = vadd.f32 %v2916, %v2998
        %3000 = vmatmul.f32.gmra.mxu0 %v2699
        %v3001 = vpop.f32.mrf.mxu0
        %v3002 = vadd.f32 %v2919, %v3001
        %3003 = vmatmul.f32.gmra.mxu0 %v2716
        %v3004 = vpop.f32.mrf.mxu0
        %v3005 = vadd.f32 %v2922, %v3004
        %3006 = vmatmul.f32.gmra.mxu0 %v2733
        %v3007 = vpop.f32.mrf.mxu0
        %v3008 = vadd.f32 %v2925, %v3007
        %3009 = vmatmul.f32.gmra.mxu0 %v2750
        %v3010 = vpop.f32.mrf.mxu0
        %v3011 = vadd.f32 %v2928, %v3010
        %3012 = vmatmul.f32.gmra.mxu0 %v2767
        %v3013 = vpop.f32.mrf.mxu0
        %v3014 = vadd.f32 %v2931, %v3013
        %3015 = vdwg.mxu0
        %3016 = vmatpush.msra.mxu0 %v2198
        %3017 = vmatpush.msra.mxu0 %v2197
        %3018 = vmatpush.msra.mxu0 %v2196
        %3019 = vmatpush.msra.mxu0 %v2195
        %3020 = vmatpush.msra.mxu0 %v2194
        %3021 = vmatpush.msra.mxu0 %v2193
        %3022 = vmatpush.msra.mxu0 %v2192
        %3023 = vmatpush.msra.mxu0 %v2191
        %3024 = vmatpush.msra.mxu0 %v2190
        %3025 = vmatpush.msra.mxu0 %v2189
        %3026 = vmatpush.msra.mxu0 %v2188
        %3027 = vmatpush.msra.mxu0 %v2187
        %3028 = vmatpush.msra.mxu0 %v2186
        %3029 = vmatpush.msra.mxu0 %v2185
        %3030 = vmatpush.msra.mxu0 %v2184
        %3031 = vmatpush.msra.mxu0 %v2183
        %3032 = vmatmul.f32.gmra.mxu0 %v2411
        %v3033 = vpop.f32.mrf.mxu0
        %v3034 = vadd.f32 %v2951, %v3033
        %3035 = vmatmul.f32.gmra.mxu0 %v2428
        %v3036 = vpop.f32.mrf.mxu0
        %v3037 = vadd.f32 %v2954, %v3036
        %3038 = vmatmul.f32.gmra.mxu0 %v2445
        %v3039 = vpop.f32.mrf.mxu0
        %v3040 = vadd.f32 %v2957, %v3039
        %3041 = vmatmul.f32.gmra.mxu0 %v2462
        %v3042 = vpop.f32.mrf.mxu0
        %v3043 = vadd.f32 %v2960, %v3042
        %3044 = vmatmul.f32.gmra.mxu0 %v2479
        %v3045 = vpop.f32.mrf.mxu0
        %v3046 = vadd.f32 %v2963, %v3045
        %3047 = vmatmul.f32.gmra.mxu0 %v2496
        %v3048 = vpop.f32.mrf.mxu0
        %v3049 = vadd.f32 %v2966, %v3048
        %3050 = vmatmul.f32.gmra.mxu0 %v2513
        %v3051 = vpop.f32.mrf.mxu0
        %v3052 = vadd.f32 %v2969, %v3051
        %3053 = vmatmul.f32.gmra.mxu0 %v2530
        %v3054 = vpop.f32.mrf.mxu0
        %v3055 = vadd.f32 %v2972, %v3054
        %3056 = vmatmul.f32.gmra.mxu0 %v2547
        %v3057 = vpop.f32.mrf.mxu0
        %v3058 = vadd.f32 %v2975, %v3057
        %3059 = vmatmul.f32.gmra.mxu0 %v2564
        %v3060 = vpop.f32.mrf.mxu0
        %v3061 = vadd.f32 %v2978, %v3060
        %3062 = vmatmul.f32.gmra.mxu0 %v2581
        %v3063 = vpop.f32.mrf.mxu0
        %v3064 = vadd.f32 %v2981, %v3063
        %3065 = vmatmul.f32.gmra.mxu0 %v2598
        %v3066 = vpop.f32.mrf.mxu0
        %v3067 = vadd.f32 %v2984, %v3066
        %3068 = vmatmul.f32.gmra.mxu0 %v2615
        %v3069 = vpop.f32.mrf.mxu0
        %v3070 = vadd.f32 %v2987, %v3069
        %3071 = vmatmul.f32.gmra.mxu0 %v2632
        %v3072 = vpop.f32.mrf.mxu0
        %v3073 = vadd.f32 %v2990, %v3072
        %3074 = vmatmul.f32.gmra.mxu0 %v2649
        %v3075 = vpop.f32.mrf.mxu0
        %v3076 = vadd.f32 %v2993, %v3075
        %3077 = vmatmul.f32.gmra.mxu0 %v2666
        %v3078 = vpop.f32.mrf.mxu0
        %v3079 = vadd.f32 %v2996, %v3078
        %3080 = vmatmul.f32.gmra.mxu0 %v2683
        %v3081 = vpop.f32.mrf.mxu0
        %v3082 = vadd.f32 %v2999, %v3081
        %3083 = vmatmul.f32.gmra.mxu0 %v2700
        %v3084 = vpop.f32.mrf.mxu0
        %v3085 = vadd.f32 %v3002, %v3084
        %3086 = vmatmul.f32.gmra.mxu0 %v2717
        %v3087 = vpop.f32.mrf.mxu0
        %v3088 = vadd.f32 %v3005, %v3087
        %3089 = vmatmul.f32.gmra.mxu0 %v2734
        %v3090 = vpop.f32.mrf.mxu0
        %v3091 = vadd.f32 %v3008, %v3090
        %3092 = vmatmul.f32.gmra.mxu0 %v2751
        %v3093 = vpop.f32.mrf.mxu0
        %v3094 = vadd.f32 %v3011, %v3093
        %3095 = vmatmul.f32.gmra.mxu0 %v2768
        %v3096 = vpop.f32.mrf.mxu0
        %v3097 = vadd.f32 %v3014, %v3096
        %3098 = vdwg.mxu0
        %3099 = vmatpush.msra.mxu0 %v2214
        %3100 = vmatpush.msra.mxu0 %v2213
        %3101 = vmatpush.msra.mxu0 %v2212
        %3102 = vmatpush.msra.mxu0 %v2211
        %3103 = vmatpush.msra.mxu0 %v2210
        %3104 = vmatpush.msra.mxu0 %v2209
        %3105 = vmatpush.msra.mxu0 %v2208
        %3106 = vmatpush.msra.mxu0 %v2207
        %3107 = vmatpush.msra.mxu0 %v2206
        %3108 = vmatpush.msra.mxu0 %v2205
        %3109 = vmatpush.msra.mxu0 %v2204
        %3110 = vmatpush.msra.mxu0 %v2203
        %3111 = vmatpush.msra.mxu0 %v2202
        %3112 = vmatpush.msra.mxu0 %v2201
        %3113 = vmatpush.msra.mxu0 %v2200
        %3114 = vmatpush.msra.mxu0 %v2199
        %3115 = vmatmul.f32.gmra.mxu0 %v2412
        %v3116 = vpop.f32.mrf.mxu0
        %v3117 = vadd.f32 %v3034, %v3116
        %3118 = vmatmul.f32.gmra.mxu0 %v2429
        %v3119 = vpop.f32.mrf.mxu0
        %v3120 = vadd.f32 %v3037, %v3119
        %3121 = vmatmul.f32.gmra.mxu0 %v2446
        %v3122 = vpop.f32.mrf.mxu0
        %v3123 = vadd.f32 %v3040, %v3122
        %3124 = vmatmul.f32.gmra.mxu0 %v2463
        %v3125 = vpop.f32.mrf.mxu0
        %v3126 = vadd.f32 %v3043, %v3125
        %3127 = vmatmul.f32.gmra.mxu0 %v2480
        %v3128 = vpop.f32.mrf.mxu0
        %v3129 = vadd.f32 %v3046, %v3128
        %3130 = vmatmul.f32.gmra.mxu0 %v2497
        %v3131 = vpop.f32.mrf.mxu0
        %v3132 = vadd.f32 %v3049, %v3131
        %3133 = vmatmul.f32.gmra.mxu0 %v2514
        %v3134 = vpop.f32.mrf.mxu0
        %v3135 = vadd.f32 %v3052, %v3134
        %3136 = vmatmul.f32.gmra.mxu0 %v2531
        %v3137 = vpop.f32.mrf.mxu0
        %v3138 = vadd.f32 %v3055, %v3137
        %3139 = vmatmul.f32.gmra.mxu0 %v2548
        %v3140 = vpop.f32.mrf.mxu0
        %v3141 = vadd.f32 %v3058, %v3140
        %3142 = vmatmul.f32.gmra.mxu0 %v2565
        %v3143 = vpop.f32.mrf.mxu0
        %v3144 = vadd.f32 %v3061, %v3143
        %3145 = vmatmul.f32.gmra.mxu0 %v2582
        %v3146 = vpop.f32.mrf.mxu0
        %v3147 = vadd.f32 %v3064, %v3146
        %3148 = vmatmul.f32.gmra.mxu0 %v2599
        %v3149 = vpop.f32.mrf.mxu0
        %v3150 = vadd.f32 %v3067, %v3149
        %3151 = vmatmul.f32.gmra.mxu0 %v2616
        %v3152 = vpop.f32.mrf.mxu0
        %v3153 = vadd.f32 %v3070, %v3152
        %3154 = vmatmul.f32.gmra.mxu0 %v2633
        %v3155 = vpop.f32.mrf.mxu0
        %v3156 = vadd.f32 %v3073, %v3155
        %3157 = vmatmul.f32.gmra.mxu0 %v2650
        %v3158 = vpop.f32.mrf.mxu0
        %v3159 = vadd.f32 %v3076, %v3158
        %3160 = vmatmul.f32.gmra.mxu0 %v2667
        %v3161 = vpop.f32.mrf.mxu0
        %v3162 = vadd.f32 %v3079, %v3161
        %3163 = vmatmul.f32.gmra.mxu0 %v2684
        %v3164 = vpop.f32.mrf.mxu0
        %v3165 = vadd.f32 %v3082, %v3164
        %3166 = vmatmul.f32.gmra.mxu0 %v2701
        %v3167 = vpop.f32.mrf.mxu0
        %v3168 = vadd.f32 %v3085, %v3167
        %3169 = vmatmul.f32.gmra.mxu0 %v2718
        %v3170 = vpop.f32.mrf.mxu0
        %v3171 = vadd.f32 %v3088, %v3170
        %3172 = vmatmul.f32.gmra.mxu0 %v2735
        %v3173 = vpop.f32.mrf.mxu0
        %v3174 = vadd.f32 %v3091, %v3173
        %3175 = vmatmul.f32.gmra.mxu0 %v2752
        %v3176 = vpop.f32.mrf.mxu0
        %v3177 = vadd.f32 %v3094, %v3176
        %3178 = vmatmul.f32.gmra.mxu0 %v2769
        %v3179 = vpop.f32.mrf.mxu0
        %v3180 = vadd.f32 %v3097, %v3179
        %3181 = vdwg.mxu0
        %3182 = vmatpush.msra.mxu0 %v2230
        %3183 = vmatpush.msra.mxu0 %v2229
        %3184 = vmatpush.msra.mxu0 %v2228
        %3185 = vmatpush.msra.mxu0 %v2227
        %3186 = vmatpush.msra.mxu0 %v2226
        %3187 = vmatpush.msra.mxu0 %v2225
        %3188 = vmatpush.msra.mxu0 %v2224
        %3189 = vmatpush.msra.mxu0 %v2223
        %3190 = vmatpush.msra.mxu0 %v2222
        %3191 = vmatpush.msra.mxu0 %v2221
        %3192 = vmatpush.msra.mxu0 %v2220
        %3193 = vmatpush.msra.mxu0 %v2219
        %3194 = vmatpush.msra.mxu0 %v2218
        %3195 = vmatpush.msra.mxu0 %v2217
        %3196 = vmatpush.msra.mxu0 %v2216
        %3197 = vmatpush.msra.mxu0 %v2215
        %3198 = vmatmul.f32.gmra.mxu0 %v2413
        %v3199 = vpop.f32.mrf.mxu0
        %v3200 = vadd.f32 %v3117, %v3199
        %3201 = vmatmul.f32.gmra.mxu0 %v2430
        %v3202 = vpop.f32.mrf.mxu0
        %v3203 = vadd.f32 %v3120, %v3202
        %3204 = vmatmul.f32.gmra.mxu0 %v2447
        %v3205 = vpop.f32.mrf.mxu0
        %v3206 = vadd.f32 %v3123, %v3205
        %3207 = vmatmul.f32.gmra.mxu0 %v2464
        %v3208 = vpop.f32.mrf.mxu0
        %v3209 = vadd.f32 %v3126, %v3208
        %3210 = vmatmul.f32.gmra.mxu0 %v2481
        %v3211 = vpop.f32.mrf.mxu0
        %v3212 = vadd.f32 %v3129, %v3211
        %3213 = vmatmul.f32.gmra.mxu0 %v2498
        %v3214 = vpop.f32.mrf.mxu0
        %v3215 = vadd.f32 %v3132, %v3214
        %3216 = vmatmul.f32.gmra.mxu0 %v2515
        %v3217 = vpop.f32.mrf.mxu0
        %v3218 = vadd.f32 %v3135, %v3217
        %3219 = vmatmul.f32.gmra.mxu0 %v2532
        %v3220 = vpop.f32.mrf.mxu0
        %v3221 = vadd.f32 %v3138, %v3220
        %3222 = vmatmul.f32.gmra.mxu0 %v2549
        %v3223 = vpop.f32.mrf.mxu0
        %v3224 = vadd.f32 %v3141, %v3223
        %3225 = vmatmul.f32.gmra.mxu0 %v2566
        %v3226 = vpop.f32.mrf.mxu0
        %v3227 = vadd.f32 %v3144, %v3226
        %3228 = vmatmul.f32.gmra.mxu0 %v2583
        %v3229 = vpop.f32.mrf.mxu0
        %v3230 = vadd.f32 %v3147, %v3229
        %3231 = vmatmul.f32.gmra.mxu0 %v2600
        %v3232 = vpop.f32.mrf.mxu0
        %v3233 = vadd.f32 %v3150, %v3232
        %3234 = vmatmul.f32.gmra.mxu0 %v2617
        %v3235 = vpop.f32.mrf.mxu0
        %v3236 = vadd.f32 %v3153, %v3235
        %3237 = vmatmul.f32.gmra.mxu0 %v2634
        %v3238 = vpop.f32.mrf.mxu0
        %v3239 = vadd.f32 %v3156, %v3238
        %3240 = vmatmul.f32.gmra.mxu0 %v2651
        %v3241 = vpop.f32.mrf.mxu0
        %v3242 = vadd.f32 %v3159, %v3241
        %3243 = vmatmul.f32.gmra.mxu0 %v2668
        %v3244 = vpop.f32.mrf.mxu0
        %v3245 = vadd.f32 %v3162, %v3244
        %3246 = vmatmul.f32.gmra.mxu0 %v2685
        %v3247 = vpop.f32.mrf.mxu0
        %v3248 = vadd.f32 %v3165, %v3247
        %3249 = vmatmul.f32.gmra.mxu0 %v2702
        %v3250 = vpop.f32.mrf.mxu0
        %v3251 = vadd.f32 %v3168, %v3250
        %3252 = vmatmul.f32.gmra.mxu0 %v2719
        %v3253 = vpop.f32.mrf.mxu0
        %v3254 = vadd.f32 %v3171, %v3253
        %3255 = vmatmul.f32.gmra.mxu0 %v2736
        %v3256 = vpop.f32.mrf.mxu0
        %v3257 = vadd.f32 %v3174, %v3256
        %3258 = vmatmul.f32.gmra.mxu0 %v2753
        %v3259 = vpop.f32.mrf.mxu0
        %v3260 = vadd.f32 %v3177, %v3259
        %3261 = vmatmul.f32.gmra.mxu0 %v2770
        %v3262 = vpop.f32.mrf.mxu0
        %v3263 = vadd.f32 %v3180, %v3262
        %3264 = vdwg.mxu0
        %3265 = vmatpush.msra.mxu0 %v2246
        %3266 = vmatpush.msra.mxu0 %v2245
        %3267 = vmatpush.msra.mxu0 %v2244
        %3268 = vmatpush.msra.mxu0 %v2243
        %3269 = vmatpush.msra.mxu0 %v2242
        %3270 = vmatpush.msra.mxu0 %v2241
        %3271 = vmatpush.msra.mxu0 %v2240
        %3272 = vmatpush.msra.mxu0 %v2239
        %3273 = vmatpush.msra.mxu0 %v2238
        %3274 = vmatpush.msra.mxu0 %v2237
        %3275 = vmatpush.msra.mxu0 %v2236
        %3276 = vmatpush.msra.mxu0 %v2235
        %3277 = vmatpush.msra.mxu0 %v2234
        %3278 = vmatpush.msra.mxu0 %v2233
        %3279 = vmatpush.msra.mxu0 %v2232
        %3280 = vmatpush.msra.mxu0 %v2231
        %3281 = vmatmul.f32.gmra.mxu0 %v2414
        %v3282 = vpop.f32.mrf.mxu0
        %v3283 = vadd.f32 %v3200, %v3282
        %3284 = vmatmul.f32.gmra.mxu0 %v2431
        %v3285 = vpop.f32.mrf.mxu0
        %v3286 = vadd.f32 %v3203, %v3285
        %3287 = vmatmul.f32.gmra.mxu0 %v2448
        %v3288 = vpop.f32.mrf.mxu0
        %v3289 = vadd.f32 %v3206, %v3288
        %3290 = vmatmul.f32.gmra.mxu0 %v2465
        %v3291 = vpop.f32.mrf.mxu0
        %v3292 = vadd.f32 %v3209, %v3291
        %3293 = vmatmul.f32.gmra.mxu0 %v2482
        %v3294 = vpop.f32.mrf.mxu0
        %v3295 = vadd.f32 %v3212, %v3294
        %3296 = vmatmul.f32.gmra.mxu0 %v2499
        %v3297 = vpop.f32.mrf.mxu0
        %v3298 = vadd.f32 %v3215, %v3297
        %3299 = vmatmul.f32.gmra.mxu0 %v2516
        %v3300 = vpop.f32.mrf.mxu0
        %v3301 = vadd.f32 %v3218, %v3300
        %3302 = vmatmul.f32.gmra.mxu0 %v2533
        %v3303 = vpop.f32.mrf.mxu0
        %v3304 = vadd.f32 %v3221, %v3303
        %3305 = vmatmul.f32.gmra.mxu0 %v2550
        %v3306 = vpop.f32.mrf.mxu0
        %v3307 = vadd.f32 %v3224, %v3306
        %3308 = vmatmul.f32.gmra.mxu0 %v2567
        %v3309 = vpop.f32.mrf.mxu0
        %v3310 = vadd.f32 %v3227, %v3309
        %3311 = vmatmul.f32.gmra.mxu0 %v2584
        %v3312 = vpop.f32.mrf.mxu0
        %v3313 = vadd.f32 %v3230, %v3312
        %3314 = vmatmul.f32.gmra.mxu0 %v2601
        %v3315 = vpop.f32.mrf.mxu0
        %v3316 = vadd.f32 %v3233, %v3315
        %3317 = vmatmul.f32.gmra.mxu0 %v2618
        %v3318 = vpop.f32.mrf.mxu0
        %v3319 = vadd.f32 %v3236, %v3318
        %3320 = vmatmul.f32.gmra.mxu0 %v2635
        %v3321 = vpop.f32.mrf.mxu0
        %v3322 = vadd.f32 %v3239, %v3321
        %3323 = vmatmul.f32.gmra.mxu0 %v2652
        %v3324 = vpop.f32.mrf.mxu0
        %v3325 = vadd.f32 %v3242, %v3324
        %3326 = vmatmul.f32.gmra.mxu0 %v2669
        %v3327 = vpop.f32.mrf.mxu0
        %v3328 = vadd.f32 %v3245, %v3327
        %3329 = vmatmul.f32.gmra.mxu0 %v2686
        %v3330 = vpop.f32.mrf.mxu0
        %v3331 = vadd.f32 %v3248, %v3330
        %3332 = vmatmul.f32.gmra.mxu0 %v2703
        %v3333 = vpop.f32.mrf.mxu0
        %v3334 = vadd.f32 %v3251, %v3333
        %3335 = vmatmul.f32.gmra.mxu0 %v2720
        %v3336 = vpop.f32.mrf.mxu0
        %v3337 = vadd.f32 %v3254, %v3336
        %3338 = vmatmul.f32.gmra.mxu0 %v2737
        %v3339 = vpop.f32.mrf.mxu0
        %v3340 = vadd.f32 %v3257, %v3339
        %3341 = vmatmul.f32.gmra.mxu0 %v2754
        %v3342 = vpop.f32.mrf.mxu0
        %v3343 = vadd.f32 %v3260, %v3342
        %3344 = vmatmul.f32.gmra.mxu0 %v2771
        %v3345 = vpop.f32.mrf.mxu0
        %v3346 = vadd.f32 %v3263, %v3345
        %3347 = vdwg.mxu0
        %3348 = vmatpush.msra.mxu0 %v2262
        %3349 = vmatpush.msra.mxu0 %v2261
        %3350 = vmatpush.msra.mxu0 %v2260
        %3351 = vmatpush.msra.mxu0 %v2259
        %3352 = vmatpush.msra.mxu0 %v2258
        %3353 = vmatpush.msra.mxu0 %v2257
        %3354 = vmatpush.msra.mxu0 %v2256
        %3355 = vmatpush.msra.mxu0 %v2255
        %3356 = vmatpush.msra.mxu0 %v2254
        %3357 = vmatpush.msra.mxu0 %v2253
        %3358 = vmatpush.msra.mxu0 %v2252
        %3359 = vmatpush.msra.mxu0 %v2251
        %3360 = vmatpush.msra.mxu0 %v2250
        %3361 = vmatpush.msra.mxu0 %v2249
        %3362 = vmatpush.msra.mxu0 %v2248
        %3363 = vmatpush.msra.mxu0 %v2247
        %3364 = vmatmul.f32.gmra.mxu0 %v2415
        %v3365 = vpop.f32.mrf.mxu0
        %v3366 = vadd.f32 %v3283, %v3365
        %3367 = vmatmul.f32.gmra.mxu0 %v2432
        %v3368 = vpop.f32.mrf.mxu0
        %v3369 = vadd.f32 %v3286, %v3368
        %3370 = vmatmul.f32.gmra.mxu0 %v2449
        %v3371 = vpop.f32.mrf.mxu0
        %v3372 = vadd.f32 %v3289, %v3371
        %3373 = vmatmul.f32.gmra.mxu0 %v2466
        %v3374 = vpop.f32.mrf.mxu0
        %v3375 = vadd.f32 %v3292, %v3374
        %3376 = vmatmul.f32.gmra.mxu0 %v2483
        %v3377 = vpop.f32.mrf.mxu0
        %v3378 = vadd.f32 %v3295, %v3377
        %3379 = vmatmul.f32.gmra.mxu0 %v2500
        %v3380 = vpop.f32.mrf.mxu0
        %v3381 = vadd.f32 %v3298, %v3380
        %3382 = vmatmul.f32.gmra.mxu0 %v2517
        %v3383 = vpop.f32.mrf.mxu0
        %v3384 = vadd.f32 %v3301, %v3383
        %3385 = vmatmul.f32.gmra.mxu0 %v2534
        %v3386 = vpop.f32.mrf.mxu0
        %v3387 = vadd.f32 %v3304, %v3386
        %3388 = vmatmul.f32.gmra.mxu0 %v2551
        %v3389 = vpop.f32.mrf.mxu0
        %v3390 = vadd.f32 %v3307, %v3389
        %3391 = vmatmul.f32.gmra.mxu0 %v2568
        %v3392 = vpop.f32.mrf.mxu0
        %v3393 = vadd.f32 %v3310, %v3392
        %3394 = vmatmul.f32.gmra.mxu0 %v2585
        %v3395 = vpop.f32.mrf.mxu0
        %v3396 = vadd.f32 %v3313, %v3395
        %3397 = vmatmul.f32.gmra.mxu0 %v2602
        %v3398 = vpop.f32.mrf.mxu0
        %v3399 = vadd.f32 %v3316, %v3398
        %3400 = vmatmul.f32.gmra.mxu0 %v2619
        %v3401 = vpop.f32.mrf.mxu0
        %v3402 = vadd.f32 %v3319, %v3401
        %3403 = vmatmul.f32.gmra.mxu0 %v2636
        %v3404 = vpop.f32.mrf.mxu0
        %v3405 = vadd.f32 %v3322, %v3404
        %3406 = vmatmul.f32.gmra.mxu0 %v2653
        %v3407 = vpop.f32.mrf.mxu0
        %v3408 = vadd.f32 %v3325, %v3407
        %3409 = vmatmul.f32.gmra.mxu0 %v2670
        %v3410 = vpop.f32.mrf.mxu0
        %v3411 = vadd.f32 %v3328, %v3410
        %3412 = vmatmul.f32.gmra.mxu0 %v2687
        %v3413 = vpop.f32.mrf.mxu0
        %v3414 = vadd.f32 %v3331, %v3413
        %3415 = vmatmul.f32.gmra.mxu0 %v2704
        %v3416 = vpop.f32.mrf.mxu0
        %v3417 = vadd.f32 %v3334, %v3416
        %3418 = vmatmul.f32.gmra.mxu0 %v2721
        %v3419 = vpop.f32.mrf.mxu0
        %v3420 = vadd.f32 %v3337, %v3419
        %3421 = vmatmul.f32.gmra.mxu0 %v2738
        %v3422 = vpop.f32.mrf.mxu0
        %v3423 = vadd.f32 %v3340, %v3422
        %3424 = vmatmul.f32.gmra.mxu0 %v2755
        %v3425 = vpop.f32.mrf.mxu0
        %v3426 = vadd.f32 %v3343, %v3425
        %3427 = vmatmul.f32.gmra.mxu0 %v2772
        %v3428 = vpop.f32.mrf.mxu0
        %v3429 = vadd.f32 %v3346, %v3428
        %3430 = vdwg.mxu0
        %3431 = vmatpush.msra.mxu0 %v2278
        %3432 = vmatpush.msra.mxu0 %v2277
        %3433 = vmatpush.msra.mxu0 %v2276
        %3434 = vmatpush.msra.mxu0 %v2275
        %3435 = vmatpush.msra.mxu0 %v2274
        %3436 = vmatpush.msra.mxu0 %v2273
        %3437 = vmatpush.msra.mxu0 %v2272
        %3438 = vmatpush.msra.mxu0 %v2271
        %3439 = vmatpush.msra.mxu0 %v2270
        %3440 = vmatpush.msra.mxu0 %v2269
        %3441 = vmatpush.msra.mxu0 %v2268
        %3442 = vmatpush.msra.mxu0 %v2267
        %3443 = vmatpush.msra.mxu0 %v2266
        %3444 = vmatpush.msra.mxu0 %v2265
        %3445 = vmatpush.msra.mxu0 %v2264
        %3446 = vmatpush.msra.mxu0 %v2263
        %3447 = vmatmul.f32.gmra.mxu0 %v2416
        %v3448 = vpop.f32.mrf.mxu0
        %v3449 = vadd.f32 %v3366, %v3448
        %3450 = vmatmul.f32.gmra.mxu0 %v2433
        %v3451 = vpop.f32.mrf.mxu0
        %v3452 = vadd.f32 %v3369, %v3451
        %3453 = vmatmul.f32.gmra.mxu0 %v2450
        %v3454 = vpop.f32.mrf.mxu0
        %v3455 = vadd.f32 %v3372, %v3454
        %3456 = vmatmul.f32.gmra.mxu0 %v2467
        %v3457 = vpop.f32.mrf.mxu0
        %v3458 = vadd.f32 %v3375, %v3457
        %3459 = vmatmul.f32.gmra.mxu0 %v2484
        %v3460 = vpop.f32.mrf.mxu0
        %v3461 = vadd.f32 %v3378, %v3460
        %3462 = vmatmul.f32.gmra.mxu0 %v2501
        %v3463 = vpop.f32.mrf.mxu0
        %v3464 = vadd.f32 %v3381, %v3463
        %3465 = vmatmul.f32.gmra.mxu0 %v2518
        %v3466 = vpop.f32.mrf.mxu0
        %v3467 = vadd.f32 %v3384, %v3466
        %3468 = vmatmul.f32.gmra.mxu0 %v2535
        %v3469 = vpop.f32.mrf.mxu0
        %v3470 = vadd.f32 %v3387, %v3469
        %3471 = vmatmul.f32.gmra.mxu0 %v2552
        %v3472 = vpop.f32.mrf.mxu0
        %v3473 = vadd.f32 %v3390, %v3472
        %3474 = vmatmul.f32.gmra.mxu0 %v2569
        %v3475 = vpop.f32.mrf.mxu0
        %v3476 = vadd.f32 %v3393, %v3475
        %3477 = vmatmul.f32.gmra.mxu0 %v2586
        %v3478 = vpop.f32.mrf.mxu0
        %v3479 = vadd.f32 %v3396, %v3478
        %3480 = vmatmul.f32.gmra.mxu0 %v2603
        %v3481 = vpop.f32.mrf.mxu0
        %v3482 = vadd.f32 %v3399, %v3481
        %3483 = vmatmul.f32.gmra.mxu0 %v2620
        %v3484 = vpop.f32.mrf.mxu0
        %v3485 = vadd.f32 %v3402, %v3484
        %3486 = vmatmul.f32.gmra.mxu0 %v2637
        %v3487 = vpop.f32.mrf.mxu0
        %v3488 = vadd.f32 %v3405, %v3487
        %3489 = vmatmul.f32.gmra.mxu0 %v2654
        %v3490 = vpop.f32.mrf.mxu0
        %v3491 = vadd.f32 %v3408, %v3490
        %3492 = vmatmul.f32.gmra.mxu0 %v2671
        %v3493 = vpop.f32.mrf.mxu0
        %v3494 = vadd.f32 %v3411, %v3493
        %3495 = vmatmul.f32.gmra.mxu0 %v2688
        %v3496 = vpop.f32.mrf.mxu0
        %v3497 = vadd.f32 %v3414, %v3496
        %3498 = vmatmul.f32.gmra.mxu0 %v2705
        %v3499 = vpop.f32.mrf.mxu0
        %v3500 = vadd.f32 %v3417, %v3499
        %3501 = vmatmul.f32.gmra.mxu0 %v2722
        %v3502 = vpop.f32.mrf.mxu0
        %v3503 = vadd.f32 %v3420, %v3502
        %3504 = vmatmul.f32.gmra.mxu0 %v2739
        %v3505 = vpop.f32.mrf.mxu0
        %v3506 = vadd.f32 %v3423, %v3505
        %3507 = vmatmul.f32.gmra.mxu0 %v2756
        %v3508 = vpop.f32.mrf.mxu0
        %v3509 = vadd.f32 %v3426, %v3508
        %3510 = vmatmul.f32.gmra.mxu0 %v2773
        %v3511 = vpop.f32.mrf.mxu0
        %v3512 = vadd.f32 %v3429, %v3511
        %3513 = vdwg.mxu0
        %3514 = vmatpush.msra.mxu0 %v2294
        %3515 = vmatpush.msra.mxu0 %v2293
        %3516 = vmatpush.msra.mxu0 %v2292
        %3517 = vmatpush.msra.mxu0 %v2291
        %3518 = vmatpush.msra.mxu0 %v2290
        %3519 = vmatpush.msra.mxu0 %v2289
        %3520 = vmatpush.msra.mxu0 %v2288
        %3521 = vmatpush.msra.mxu0 %v2287
        %3522 = vmatpush.msra.mxu0 %v2286
        %3523 = vmatpush.msra.mxu0 %v2285
        %3524 = vmatpush.msra.mxu0 %v2284
        %3525 = vmatpush.msra.mxu0 %v2283
        %3526 = vmatpush.msra.mxu0 %v2282
        %3527 = vmatpush.msra.mxu0 %v2281
        %3528 = vmatpush.msra.mxu0 %v2280
        %3529 = vmatpush.msra.mxu0 %v2279
        %3530 = vmatmul.f32.gmra.mxu0 %v2417
        %v3531 = vpop.f32.mrf.mxu0
        %v3532 = vadd.f32 %v3449, %v3531
        %3533 = vmatmul.f32.gmra.mxu0 %v2434
        %v3534 = vpop.f32.mrf.mxu0
        %v3535 = vadd.f32 %v3452, %v3534
        %3536 = vmatmul.f32.gmra.mxu0 %v2451
        %v3537 = vpop.f32.mrf.mxu0
        %v3538 = vadd.f32 %v3455, %v3537
        %3539 = vmatmul.f32.gmra.mxu0 %v2468
        %v3540 = vpop.f32.mrf.mxu0
        %v3541 = vadd.f32 %v3458, %v3540
        %3542 = vmatmul.f32.gmra.mxu0 %v2485
        %v3543 = vpop.f32.mrf.mxu0
        %v3544 = vadd.f32 %v3461, %v3543
        %3545 = vmatmul.f32.gmra.mxu0 %v2502
        %v3546 = vpop.f32.mrf.mxu0
        %v3547 = vadd.f32 %v3464, %v3546
        %3548 = vmatmul.f32.gmra.mxu0 %v2519
        %v3549 = vpop.f32.mrf.mxu0
        %v3550 = vadd.f32 %v3467, %v3549
        %3551 = vmatmul.f32.gmra.mxu0 %v2536
        %v3552 = vpop.f32.mrf.mxu0
        %v3553 = vadd.f32 %v3470, %v3552
        %3554 = vmatmul.f32.gmra.mxu0 %v2553
        %v3555 = vpop.f32.mrf.mxu0
        %v3556 = vadd.f32 %v3473, %v3555
        %3557 = vmatmul.f32.gmra.mxu0 %v2570
        %v3558 = vpop.f32.mrf.mxu0
        %v3559 = vadd.f32 %v3476, %v3558
        %3560 = vmatmul.f32.gmra.mxu0 %v2587
        %v3561 = vpop.f32.mrf.mxu0
        %v3562 = vadd.f32 %v3479, %v3561
        %3563 = vmatmul.f32.gmra.mxu0 %v2604
        %v3564 = vpop.f32.mrf.mxu0
        %v3565 = vadd.f32 %v3482, %v3564
        %3566 = vmatmul.f32.gmra.mxu0 %v2621
        %v3567 = vpop.f32.mrf.mxu0
        %v3568 = vadd.f32 %v3485, %v3567
        %3569 = vmatmul.f32.gmra.mxu0 %v2638
        %v3570 = vpop.f32.mrf.mxu0
        %v3571 = vadd.f32 %v3488, %v3570
        %3572 = vmatmul.f32.gmra.mxu0 %v2655
        %v3573 = vpop.f32.mrf.mxu0
        %v3574 = vadd.f32 %v3491, %v3573
        %3575 = vmatmul.f32.gmra.mxu0 %v2672
        %v3576 = vpop.f32.mrf.mxu0
        %v3577 = vadd.f32 %v3494, %v3576
        %3578 = vmatmul.f32.gmra.mxu0 %v2689
        %v3579 = vpop.f32.mrf.mxu0
        %v3580 = vadd.f32 %v3497, %v3579
        %3581 = vmatmul.f32.gmra.mxu0 %v2706
        %v3582 = vpop.f32.mrf.mxu0
        %v3583 = vadd.f32 %v3500, %v3582
        %3584 = vmatmul.f32.gmra.mxu0 %v2723
        %v3585 = vpop.f32.mrf.mxu0
        %v3586 = vadd.f32 %v3503, %v3585
        %3587 = vmatmul.f32.gmra.mxu0 %v2740
        %v3588 = vpop.f32.mrf.mxu0
        %v3589 = vadd.f32 %v3506, %v3588
        %3590 = vmatmul.f32.gmra.mxu0 %v2757
        %v3591 = vpop.f32.mrf.mxu0
        %v3592 = vadd.f32 %v3509, %v3591
        %3593 = vmatmul.f32.gmra.mxu0 %v2774
        %v3594 = vpop.f32.mrf.mxu0
        %v3595 = vadd.f32 %v3512, %v3594
        %3596 = vdwg.mxu0
        %3597 = vmatpush.msra.mxu0 %v2310
        %3598 = vmatpush.msra.mxu0 %v2309
        %3599 = vmatpush.msra.mxu0 %v2308
        %3600 = vmatpush.msra.mxu0 %v2307
        %3601 = vmatpush.msra.mxu0 %v2306
        %3602 = vmatpush.msra.mxu0 %v2305
        %3603 = vmatpush.msra.mxu0 %v2304
        %3604 = vmatpush.msra.mxu0 %v2303
        %3605 = vmatpush.msra.mxu0 %v2302
        %3606 = vmatpush.msra.mxu0 %v2301
        %3607 = vmatpush.msra.mxu0 %v2300
        %3608 = vmatpush.msra.mxu0 %v2299
        %3609 = vmatpush.msra.mxu0 %v2298
        %3610 = vmatpush.msra.mxu0 %v2297
        %3611 = vmatpush.msra.mxu0 %v2296
        %3612 = vmatpush.msra.mxu0 %v2295
        %3613 = vmatmul.f32.gmra.mxu0 %v2418
        %v3614 = vpop.f32.mrf.mxu0
        %v3615 = vadd.f32 %v3532, %v3614
        %3616 = vmatmul.f32.gmra.mxu0 %v2435
        %v3617 = vpop.f32.mrf.mxu0
        %v3618 = vadd.f32 %v3535, %v3617
        %3619 = vmatmul.f32.gmra.mxu0 %v2452
        %v3620 = vpop.f32.mrf.mxu0
        %v3621 = vadd.f32 %v3538, %v3620
        %3622 = vmatmul.f32.gmra.mxu0 %v2469
        %v3623 = vpop.f32.mrf.mxu0
        %v3624 = vadd.f32 %v3541, %v3623
        %3625 = vmatmul.f32.gmra.mxu0 %v2486
        %v3626 = vpop.f32.mrf.mxu0
        %v3627 = vadd.f32 %v3544, %v3626
        %3628 = vmatmul.f32.gmra.mxu0 %v2503
        %v3629 = vpop.f32.mrf.mxu0
        %v3630 = vadd.f32 %v3547, %v3629
        %3631 = vmatmul.f32.gmra.mxu0 %v2520
        %v3632 = vpop.f32.mrf.mxu0
        %v3633 = vadd.f32 %v3550, %v3632
        %3634 = vmatmul.f32.gmra.mxu0 %v2537
        %v3635 = vpop.f32.mrf.mxu0
        %v3636 = vadd.f32 %v3553, %v3635
        %3637 = vmatmul.f32.gmra.mxu0 %v2554
        %v3638 = vpop.f32.mrf.mxu0
        %v3639 = vadd.f32 %v3556, %v3638
        %3640 = vmatmul.f32.gmra.mxu0 %v2571
        %v3641 = vpop.f32.mrf.mxu0
        %v3642 = vadd.f32 %v3559, %v3641
        %3643 = vmatmul.f32.gmra.mxu0 %v2588
        %v3644 = vpop.f32.mrf.mxu0
        %v3645 = vadd.f32 %v3562, %v3644
        %3646 = vmatmul.f32.gmra.mxu0 %v2605
        %v3647 = vpop.f32.mrf.mxu0
        %v3648 = vadd.f32 %v3565, %v3647
        %3649 = vmatmul.f32.gmra.mxu0 %v2622
        %v3650 = vpop.f32.mrf.mxu0
        %v3651 = vadd.f32 %v3568, %v3650
        %3652 = vmatmul.f32.gmra.mxu0 %v2639
        %v3653 = vpop.f32.mrf.mxu0
        %v3654 = vadd.f32 %v3571, %v3653
        %3655 = vmatmul.f32.gmra.mxu0 %v2656
        %v3656 = vpop.f32.mrf.mxu0
        %v3657 = vadd.f32 %v3574, %v3656
        %3658 = vmatmul.f32.gmra.mxu0 %v2673
        %v3659 = vpop.f32.mrf.mxu0
        %v3660 = vadd.f32 %v3577, %v3659
        %3661 = vmatmul.f32.gmra.mxu0 %v2690
        %v3662 = vpop.f32.mrf.mxu0
        %v3663 = vadd.f32 %v3580, %v3662
        %3664 = vmatmul.f32.gmra.mxu0 %v2707
        %v3665 = vpop.f32.mrf.mxu0
        %v3666 = vadd.f32 %v3583, %v3665
        %3667 = vmatmul.f32.gmra.mxu0 %v2724
        %v3668 = vpop.f32.mrf.mxu0
        %v3669 = vadd.f32 %v3586, %v3668
        %3670 = vmatmul.f32.gmra.mxu0 %v2741
        %v3671 = vpop.f32.mrf.mxu0
        %v3672 = vadd.f32 %v3589, %v3671
        %3673 = vmatmul.f32.gmra.mxu0 %v2758
        %v3674 = vpop.f32.mrf.mxu0
        %v3675 = vadd.f32 %v3592, %v3674
        %3676 = vmatmul.f32.gmra.mxu0 %v2775
        %v3677 = vpop.f32.mrf.mxu0
        %v3678 = vadd.f32 %v3595, %v3677
        %3679 = vdwg.mxu0
        %3680 = vmatpush.msra.mxu0 %v2326
        %3681 = vmatpush.msra.mxu0 %v2325
        %3682 = vmatpush.msra.mxu0 %v2324
        %3683 = vmatpush.msra.mxu0 %v2323
        %3684 = vmatpush.msra.mxu0 %v2322
        %3685 = vmatpush.msra.mxu0 %v2321
        %3686 = vmatpush.msra.mxu0 %v2320
        %3687 = vmatpush.msra.mxu0 %v2319
        %3688 = vmatpush.msra.mxu0 %v2318
        %3689 = vmatpush.msra.mxu0 %v2317
        %3690 = vmatpush.msra.mxu0 %v2316
        %3691 = vmatpush.msra.mxu0 %v2315
        %3692 = vmatpush.msra.mxu0 %v2314
        %3693 = vmatpush.msra.mxu0 %v2313
        %3694 = vmatpush.msra.mxu0 %v2312
        %3695 = vmatpush.msra.mxu0 %v2311
        %3696 = vmatmul.f32.gmra.mxu0 %v2419
        %v3697 = vpop.f32.mrf.mxu0
        %v3698 = vadd.f32 %v3615, %v3697
        %3699 = vmatmul.f32.gmra.mxu0 %v2436
        %v3700 = vpop.f32.mrf.mxu0
        %v3701 = vadd.f32 %v3618, %v3700
        %3702 = vmatmul.f32.gmra.mxu0 %v2453
        %v3703 = vpop.f32.mrf.mxu0
        %v3704 = vadd.f32 %v3621, %v3703
        %3705 = vmatmul.f32.gmra.mxu0 %v2470
        %v3706 = vpop.f32.mrf.mxu0
        %v3707 = vadd.f32 %v3624, %v3706
        %3708 = vmatmul.f32.gmra.mxu0 %v2487
        %v3709 = vpop.f32.mrf.mxu0
        %v3710 = vadd.f32 %v3627, %v3709
        %3711 = vmatmul.f32.gmra.mxu0 %v2504
        %v3712 = vpop.f32.mrf.mxu0
        %v3713 = vadd.f32 %v3630, %v3712
        %3714 = vmatmul.f32.gmra.mxu0 %v2521
        %v3715 = vpop.f32.mrf.mxu0
        %v3716 = vadd.f32 %v3633, %v3715
        %3717 = vmatmul.f32.gmra.mxu0 %v2538
        %v3718 = vpop.f32.mrf.mxu0
        %v3719 = vadd.f32 %v3636, %v3718
        %3720 = vmatmul.f32.gmra.mxu0 %v2555
        %v3721 = vpop.f32.mrf.mxu0
        %v3722 = vadd.f32 %v3639, %v3721
        %3723 = vmatmul.f32.gmra.mxu0 %v2572
        %v3724 = vpop.f32.mrf.mxu0
        %v3725 = vadd.f32 %v3642, %v3724
        %3726 = vmatmul.f32.gmra.mxu0 %v2589
        %v3727 = vpop.f32.mrf.mxu0
        %v3728 = vadd.f32 %v3645, %v3727
        %3729 = vmatmul.f32.gmra.mxu0 %v2606
        %v3730 = vpop.f32.mrf.mxu0
        %v3731 = vadd.f32 %v3648, %v3730
        %3732 = vmatmul.f32.gmra.mxu0 %v2623
        %v3733 = vpop.f32.mrf.mxu0
        %v3734 = vadd.f32 %v3651, %v3733
        %3735 = vmatmul.f32.gmra.mxu0 %v2640
        %v3736 = vpop.f32.mrf.mxu0
        %v3737 = vadd.f32 %v3654, %v3736
        %3738 = vmatmul.f32.gmra.mxu0 %v2657
        %v3739 = vpop.f32.mrf.mxu0
        %v3740 = vadd.f32 %v3657, %v3739
        %3741 = vmatmul.f32.gmra.mxu0 %v2674
        %v3742 = vpop.f32.mrf.mxu0
        %v3743 = vadd.f32 %v3660, %v3742
        %3744 = vmatmul.f32.gmra.mxu0 %v2691
        %v3745 = vpop.f32.mrf.mxu0
        %v3746 = vadd.f32 %v3663, %v3745
        %3747 = vmatmul.f32.gmra.mxu0 %v2708
        %v3748 = vpop.f32.mrf.mxu0
        %v3749 = vadd.f32 %v3666, %v3748
        %3750 = vmatmul.f32.gmra.mxu0 %v2725
        %v3751 = vpop.f32.mrf.mxu0
        %v3752 = vadd.f32 %v3669, %v3751
        %3753 = vmatmul.f32.gmra.mxu0 %v2742
        %v3754 = vpop.f32.mrf.mxu0
        %v3755 = vadd.f32 %v3672, %v3754
        %3756 = vmatmul.f32.gmra.mxu0 %v2759
        %v3757 = vpop.f32.mrf.mxu0
        %v3758 = vadd.f32 %v3675, %v3757
        %3759 = vmatmul.f32.gmra.mxu0 %v2776
        %v3760 = vpop.f32.mrf.mxu0
        %v3761 = vadd.f32 %v3678, %v3760
        %3762 = vdwg.mxu0
        %3763 = vmatpush.msra.mxu0 %v2342
        %3764 = vmatpush.msra.mxu0 %v2341
        %3765 = vmatpush.msra.mxu0 %v2340
        %3766 = vmatpush.msra.mxu0 %v2339
        %3767 = vmatpush.msra.mxu0 %v2338
        %3768 = vmatpush.msra.mxu0 %v2337
        %3769 = vmatpush.msra.mxu0 %v2336
        %3770 = vmatpush.msra.mxu0 %v2335
        %3771 = vmatpush.msra.mxu0 %v2334
        %3772 = vmatpush.msra.mxu0 %v2333
        %3773 = vmatpush.msra.mxu0 %v2332
        %3774 = vmatpush.msra.mxu0 %v2331
        %3775 = vmatpush.msra.mxu0 %v2330
        %3776 = vmatpush.msra.mxu0 %v2329
        %3777 = vmatpush.msra.mxu0 %v2328
        %3778 = vmatpush.msra.mxu0 %v2327
        %3779 = vmatmul.f32.gmra.mxu0 %v2420
        %v3780 = vpop.f32.mrf.mxu0
        %v3781 = vadd.f32 %v3698, %v3780
        %3782 = vmatmul.f32.gmra.mxu0 %v2437
        %v3783 = vpop.f32.mrf.mxu0
        %v3784 = vadd.f32 %v3701, %v3783
        %3785 = vmatmul.f32.gmra.mxu0 %v2454
        %v3786 = vpop.f32.mrf.mxu0
        %v3787 = vadd.f32 %v3704, %v3786
        %3788 = vmatmul.f32.gmra.mxu0 %v2471
        %v3789 = vpop.f32.mrf.mxu0
        %v3790 = vadd.f32 %v3707, %v3789
        %3791 = vmatmul.f32.gmra.mxu0 %v2488
        %v3792 = vpop.f32.mrf.mxu0
        %v3793 = vadd.f32 %v3710, %v3792
        %3794 = vmatmul.f32.gmra.mxu0 %v2505
        %v3795 = vpop.f32.mrf.mxu0
        %v3796 = vadd.f32 %v3713, %v3795
        %3797 = vmatmul.f32.gmra.mxu0 %v2522
        %v3798 = vpop.f32.mrf.mxu0
        %v3799 = vadd.f32 %v3716, %v3798
        %3800 = vmatmul.f32.gmra.mxu0 %v2539
        %v3801 = vpop.f32.mrf.mxu0
        %v3802 = vadd.f32 %v3719, %v3801
        %3803 = vmatmul.f32.gmra.mxu0 %v2556
        %v3804 = vpop.f32.mrf.mxu0
        %v3805 = vadd.f32 %v3722, %v3804
        %3806 = vmatmul.f32.gmra.mxu0 %v2573
        %v3807 = vpop.f32.mrf.mxu0
        %v3808 = vadd.f32 %v3725, %v3807
        %3809 = vmatmul.f32.gmra.mxu0 %v2590
        %v3810 = vpop.f32.mrf.mxu0
        %v3811 = vadd.f32 %v3728, %v3810
        %3812 = vmatmul.f32.gmra.mxu0 %v2607
        %v3813 = vpop.f32.mrf.mxu0
        %v3814 = vadd.f32 %v3731, %v3813
        %3815 = vmatmul.f32.gmra.mxu0 %v2624
        %v3816 = vpop.f32.mrf.mxu0
        %v3817 = vadd.f32 %v3734, %v3816
        %3818 = vmatmul.f32.gmra.mxu0 %v2641
        %v3819 = vpop.f32.mrf.mxu0
        %v3820 = vadd.f32 %v3737, %v3819
        %3821 = vmatmul.f32.gmra.mxu0 %v2658
        %v3822 = vpop.f32.mrf.mxu0
        %v3823 = vadd.f32 %v3740, %v3822
        %3824 = vmatmul.f32.gmra.mxu0 %v2675
        %v3825 = vpop.f32.mrf.mxu0
        %v3826 = vadd.f32 %v3743, %v3825
        %3827 = vmatmul.f32.gmra.mxu0 %v2692
        %v3828 = vpop.f32.mrf.mxu0
        %v3829 = vadd.f32 %v3746, %v3828
        %3830 = vmatmul.f32.gmra.mxu0 %v2709
        %v3831 = vpop.f32.mrf.mxu0
        %v3832 = vadd.f32 %v3749, %v3831
        %3833 = vmatmul.f32.gmra.mxu0 %v2726
        %v3834 = vpop.f32.mrf.mxu0
        %v3835 = vadd.f32 %v3752, %v3834
        %3836 = vmatmul.f32.gmra.mxu0 %v2743
        %v3837 = vpop.f32.mrf.mxu0
        %v3838 = vadd.f32 %v3755, %v3837
        %3839 = vmatmul.f32.gmra.mxu0 %v2760
        %v3840 = vpop.f32.mrf.mxu0
        %v3841 = vadd.f32 %v3758, %v3840
        %3842 = vmatmul.f32.gmra.mxu0 %v2777
        %v3843 = vpop.f32.mrf.mxu0
        %v3844 = vadd.f32 %v3761, %v3843
        %3845 = vdwg.mxu0
        %3846 = vmatpush.msra.mxu0 %v2358
        %3847 = vmatpush.msra.mxu0 %v2357
        %3848 = vmatpush.msra.mxu0 %v2356
        %3849 = vmatpush.msra.mxu0 %v2355
        %3850 = vmatpush.msra.mxu0 %v2354
        %3851 = vmatpush.msra.mxu0 %v2353
        %3852 = vmatpush.msra.mxu0 %v2352
        %3853 = vmatpush.msra.mxu0 %v2351
        %3854 = vmatpush.msra.mxu0 %v2350
        %3855 = vmatpush.msra.mxu0 %v2349
        %3856 = vmatpush.msra.mxu0 %v2348
        %3857 = vmatpush.msra.mxu0 %v2347
        %3858 = vmatpush.msra.mxu0 %v2346
        %3859 = vmatpush.msra.mxu0 %v2345
        %3860 = vmatpush.msra.mxu0 %v2344
        %3861 = vmatpush.msra.mxu0 %v2343
        %3862 = vmatmul.f32.gmra.mxu0 %v2421
        %v3863 = vpop.f32.mrf.mxu0
        %v3864 = vadd.f32 %v3781, %v3863
        %3865 = vmatmul.f32.gmra.mxu0 %v2438
        %v3866 = vpop.f32.mrf.mxu0
        %v3867 = vadd.f32 %v3784, %v3866
        %3868 = vmatmul.f32.gmra.mxu0 %v2455
        %v3869 = vpop.f32.mrf.mxu0
        %v3870 = vadd.f32 %v3787, %v3869
        %3871 = vmatmul.f32.gmra.mxu0 %v2472
        %v3872 = vpop.f32.mrf.mxu0
        %v3873 = vadd.f32 %v3790, %v3872
        %3874 = vmatmul.f32.gmra.mxu0 %v2489
        %v3875 = vpop.f32.mrf.mxu0
        %v3876 = vadd.f32 %v3793, %v3875
        %3877 = vmatmul.f32.gmra.mxu0 %v2506
        %v3878 = vpop.f32.mrf.mxu0
        %v3879 = vadd.f32 %v3796, %v3878
        %3880 = vmatmul.f32.gmra.mxu0 %v2523
        %v3881 = vpop.f32.mrf.mxu0
        %v3882 = vadd.f32 %v3799, %v3881
        %3883 = vmatmul.f32.gmra.mxu0 %v2540
        %v3884 = vpop.f32.mrf.mxu0
        %v3885 = vadd.f32 %v3802, %v3884
        %3886 = vmatmul.f32.gmra.mxu0 %v2557
        %v3887 = vpop.f32.mrf.mxu0
        %v3888 = vadd.f32 %v3805, %v3887
        %3889 = vmatmul.f32.gmra.mxu0 %v2574
        %v3890 = vpop.f32.mrf.mxu0
        %v3891 = vadd.f32 %v3808, %v3890
        %3892 = vmatmul.f32.gmra.mxu0 %v2591
        %v3893 = vpop.f32.mrf.mxu0
        %v3894 = vadd.f32 %v3811, %v3893
        %3895 = vmatmul.f32.gmra.mxu0 %v2608
        %v3896 = vpop.f32.mrf.mxu0
        %v3897 = vadd.f32 %v3814, %v3896
        %3898 = vmatmul.f32.gmra.mxu0 %v2625
        %v3899 = vpop.f32.mrf.mxu0
        %v3900 = vadd.f32 %v3817, %v3899
        %3901 = vmatmul.f32.gmra.mxu0 %v2642
        %v3902 = vpop.f32.mrf.mxu0
        %v3903 = vadd.f32 %v3820, %v3902
        %3904 = vmatmul.f32.gmra.mxu0 %v2659
        %v3905 = vpop.f32.mrf.mxu0
        %v3906 = vadd.f32 %v3823, %v3905
        %3907 = vmatmul.f32.gmra.mxu0 %v2676
        %v3908 = vpop.f32.mrf.mxu0
        %v3909 = vadd.f32 %v3826, %v3908
        %3910 = vmatmul.f32.gmra.mxu0 %v2693
        %v3911 = vpop.f32.mrf.mxu0
        %v3912 = vadd.f32 %v3829, %v3911
        %3913 = vmatmul.f32.gmra.mxu0 %v2710
        %v3914 = vpop.f32.mrf.mxu0
        %v3915 = vadd.f32 %v3832, %v3914
        %3916 = vmatmul.f32.gmra.mxu0 %v2727
        %v3917 = vpop.f32.mrf.mxu0
        %v3918 = vadd.f32 %v3835, %v3917
        %3919 = vmatmul.f32.gmra.mxu0 %v2744
        %v3920 = vpop.f32.mrf.mxu0
        %v3921 = vadd.f32 %v3838, %v3920
        %3922 = vmatmul.f32.gmra.mxu0 %v2761
        %v3923 = vpop.f32.mrf.mxu0
        %v3924 = vadd.f32 %v3841, %v3923
        %3925 = vmatmul.f32.gmra.mxu0 %v2778
        %v3926 = vpop.f32.mrf.mxu0
        %v3927 = vadd.f32 %v3844, %v3926
        %3928 = vdwg.mxu0
        %3929 = vmatpush.msra.mxu0 %v2374
        %3930 = vmatpush.msra.mxu0 %v2373
        %3931 = vmatpush.msra.mxu0 %v2372
        %3932 = vmatpush.msra.mxu0 %v2371
        %3933 = vmatpush.msra.mxu0 %v2370
        %3934 = vmatpush.msra.mxu0 %v2369
        %3935 = vmatpush.msra.mxu0 %v2368
        %3936 = vmatpush.msra.mxu0 %v2367
        %3937 = vmatpush.msra.mxu0 %v2366
        %3938 = vmatpush.msra.mxu0 %v2365
        %3939 = vmatpush.msra.mxu0 %v2364
        %3940 = vmatpush.msra.mxu0 %v2363
        %3941 = vmatpush.msra.mxu0 %v2362
        %3942 = vmatpush.msra.mxu0 %v2361
        %3943 = vmatpush.msra.mxu0 %v2360
        %3944 = vmatpush.msra.mxu0 %v2359
        %3945 = vmatmul.f32.gmra.mxu0 %v2422
        %v3946 = vpop.f32.mrf.mxu0
        %v3947 = vadd.f32 %v3864, %v3946
        %3948 = vmatmul.f32.gmra.mxu0 %v2439
        %v3949 = vpop.f32.mrf.mxu0
        %v3950 = vadd.f32 %v3867, %v3949
        %3951 = vmatmul.f32.gmra.mxu0 %v2456
        %v3952 = vpop.f32.mrf.mxu0
        %v3953 = vadd.f32 %v3870, %v3952
        %3954 = vmatmul.f32.gmra.mxu0 %v2473
        %v3955 = vpop.f32.mrf.mxu0
        %v3956 = vadd.f32 %v3873, %v3955
        %3957 = vmatmul.f32.gmra.mxu0 %v2490
        %v3958 = vpop.f32.mrf.mxu0
        %v3959 = vadd.f32 %v3876, %v3958
        %3960 = vmatmul.f32.gmra.mxu0 %v2507
        %v3961 = vpop.f32.mrf.mxu0
        %v3962 = vadd.f32 %v3879, %v3961
        %3963 = vmatmul.f32.gmra.mxu0 %v2524
        %v3964 = vpop.f32.mrf.mxu0
        %v3965 = vadd.f32 %v3882, %v3964
        %3966 = vmatmul.f32.gmra.mxu0 %v2541
        %v3967 = vpop.f32.mrf.mxu0
        %v3968 = vadd.f32 %v3885, %v3967
        %3969 = vmatmul.f32.gmra.mxu0 %v2558
        %v3970 = vpop.f32.mrf.mxu0
        %v3971 = vadd.f32 %v3888, %v3970
        %3972 = vmatmul.f32.gmra.mxu0 %v2575
        %v3973 = vpop.f32.mrf.mxu0
        %v3974 = vadd.f32 %v3891, %v3973
        %3975 = vmatmul.f32.gmra.mxu0 %v2592
        %v3976 = vpop.f32.mrf.mxu0
        %v3977 = vadd.f32 %v3894, %v3976
        %3978 = vmatmul.f32.gmra.mxu0 %v2609
        %v3979 = vpop.f32.mrf.mxu0
        %v3980 = vadd.f32 %v3897, %v3979
        %3981 = vmatmul.f32.gmra.mxu0 %v2626
        %v3982 = vpop.f32.mrf.mxu0
        %v3983 = vadd.f32 %v3900, %v3982
        %3984 = vmatmul.f32.gmra.mxu0 %v2643
        %v3985 = vpop.f32.mrf.mxu0
        %v3986 = vadd.f32 %v3903, %v3985
        %3987 = vmatmul.f32.gmra.mxu0 %v2660
        %v3988 = vpop.f32.mrf.mxu0
        %v3989 = vadd.f32 %v3906, %v3988
        %3990 = vmatmul.f32.gmra.mxu0 %v2677
        %v3991 = vpop.f32.mrf.mxu0
        %v3992 = vadd.f32 %v3909, %v3991
        %3993 = vmatmul.f32.gmra.mxu0 %v2694
        %v3994 = vpop.f32.mrf.mxu0
        %v3995 = vadd.f32 %v3912, %v3994
        %3996 = vmatmul.f32.gmra.mxu0 %v2711
        %v3997 = vpop.f32.mrf.mxu0
        %v3998 = vadd.f32 %v3915, %v3997
        %3999 = vmatmul.f32.gmra.mxu0 %v2728
        %v4000 = vpop.f32.mrf.mxu0
        %v4001 = vadd.f32 %v3918, %v4000
        %4002 = vmatmul.f32.gmra.mxu0 %v2745
        %v4003 = vpop.f32.mrf.mxu0
        %v4004 = vadd.f32 %v3921, %v4003
        %4005 = vmatmul.f32.gmra.mxu0 %v2762
        %v4006 = vpop.f32.mrf.mxu0
        %v4007 = vadd.f32 %v3924, %v4006
        %4008 = vmatmul.f32.gmra.mxu0 %v2779
        %v4009 = vpop.f32.mrf.mxu0
        %v4010 = vadd.f32 %v3927, %v4009
        %4011 = vdwg.mxu0
        %4012 = vmatpush.msra.mxu0 %v2390
        %4013 = vmatpush.msra.mxu0 %v2389
        %4014 = vmatpush.msra.mxu0 %v2388
        %4015 = vmatpush.msra.mxu0 %v2387
        %4016 = vmatpush.msra.mxu0 %v2386
        %4017 = vmatpush.msra.mxu0 %v2385
        %4018 = vmatpush.msra.mxu0 %v2384
        %4019 = vmatpush.msra.mxu0 %v2383
        %4020 = vmatpush.msra.mxu0 %v2382
        %4021 = vmatpush.msra.mxu0 %v2381
        %4022 = vmatpush.msra.mxu0 %v2380
        %4023 = vmatpush.msra.mxu0 %v2379
        %4024 = vmatpush.msra.mxu0 %v2378
        %4025 = vmatpush.msra.mxu0 %v2377
        %4026 = vmatpush.msra.mxu0 %v2376
        %4027 = vmatpush.msra.mxu0 %v2375
        %4028 = vmatmul.f32.gmra.mxu0 %v2423
        %v4029 = vpop.f32.mrf.mxu0
        %v4030 = vadd.f32 %v3947, %v4029
        %4031 = vmatmul.f32.gmra.mxu0 %v2440
        %v4032 = vpop.f32.mrf.mxu0
        %v4033 = vadd.f32 %v3950, %v4032
        %4034 = vmatmul.f32.gmra.mxu0 %v2457
        %v4035 = vpop.f32.mrf.mxu0
        %v4036 = vadd.f32 %v3953, %v4035
        %4037 = vmatmul.f32.gmra.mxu0 %v2474
        %v4038 = vpop.f32.mrf.mxu0
        %v4039 = vadd.f32 %v3956, %v4038
        %4040 = vmatmul.f32.gmra.mxu0 %v2491
        %v4041 = vpop.f32.mrf.mxu0
        %v4042 = vadd.f32 %v3959, %v4041
        %4043 = vmatmul.f32.gmra.mxu0 %v2508
        %v4044 = vpop.f32.mrf.mxu0
        %v4045 = vadd.f32 %v3962, %v4044
        %4046 = vmatmul.f32.gmra.mxu0 %v2525
        %v4047 = vpop.f32.mrf.mxu0
        %v4048 = vadd.f32 %v3965, %v4047
        %4049 = vmatmul.f32.gmra.mxu0 %v2542
        %v4050 = vpop.f32.mrf.mxu0
        %v4051 = vadd.f32 %v3968, %v4050
        %4052 = vmatmul.f32.gmra.mxu0 %v2559
        %v4053 = vpop.f32.mrf.mxu0
        %v4054 = vadd.f32 %v3971, %v4053
        %4055 = vmatmul.f32.gmra.mxu0 %v2576
        %v4056 = vpop.f32.mrf.mxu0
        %v4057 = vadd.f32 %v3974, %v4056
        %4058 = vmatmul.f32.gmra.mxu0 %v2593
        %v4059 = vpop.f32.mrf.mxu0
        %v4060 = vadd.f32 %v3977, %v4059
        %4061 = vmatmul.f32.gmra.mxu0 %v2610
        %v4062 = vpop.f32.mrf.mxu0
        %v4063 = vadd.f32 %v3980, %v4062
        %4064 = vmatmul.f32.gmra.mxu0 %v2627
        %v4065 = vpop.f32.mrf.mxu0
        %v4066 = vadd.f32 %v3983, %v4065
        %4067 = vmatmul.f32.gmra.mxu0 %v2644
        %v4068 = vpop.f32.mrf.mxu0
        %v4069 = vadd.f32 %v3986, %v4068
        %4070 = vmatmul.f32.gmra.mxu0 %v2661
        %v4071 = vpop.f32.mrf.mxu0
        %v4072 = vadd.f32 %v3989, %v4071
        %4073 = vmatmul.f32.gmra.mxu0 %v2678
        %v4074 = vpop.f32.mrf.mxu0
        %v4075 = vadd.f32 %v3992, %v4074
        %4076 = vmatmul.f32.gmra.mxu0 %v2695
        %v4077 = vpop.f32.mrf.mxu0
        %v4078 = vadd.f32 %v3995, %v4077
        %4079 = vmatmul.f32.gmra.mxu0 %v2712
        %v4080 = vpop.f32.mrf.mxu0
        %v4081 = vadd.f32 %v3998, %v4080
        %4082 = vmatmul.f32.gmra.mxu0 %v2729
        %v4083 = vpop.f32.mrf.mxu0
        %v4084 = vadd.f32 %v4001, %v4083
        %4085 = vmatmul.f32.gmra.mxu0 %v2746
        %v4086 = vpop.f32.mrf.mxu0
        %v4087 = vadd.f32 %v4004, %v4086
        %4088 = vmatmul.f32.gmra.mxu0 %v2763
        %v4089 = vpop.f32.mrf.mxu0
        %v4090 = vadd.f32 %v4007, %v4089
        %4091 = vmatmul.f32.gmra.mxu0 %v2780
        %v4092 = vpop.f32.mrf.mxu0
        %v4093 = vadd.f32 %v4010, %v4092
        %4094 = vdwg.mxu0
        %4095 = vmatpush.msra.mxu0 %v2406
        %4096 = vmatpush.msra.mxu0 %v2405
        %4097 = vmatpush.msra.mxu0 %v2404
        %4098 = vmatpush.msra.mxu0 %v2403
        %4099 = vmatpush.msra.mxu0 %v2402
        %4100 = vmatpush.msra.mxu0 %v2401
        %4101 = vmatpush.msra.mxu0 %v2400
        %4102 = vmatpush.msra.mxu0 %v2399
        %4103 = vmatpush.msra.mxu0 %v2398
        %4104 = vmatpush.msra.mxu0 %v2397
        %4105 = vmatpush.msra.mxu0 %v2396
        %4106 = vmatpush.msra.mxu0 %v2395
        %4107 = vmatpush.msra.mxu0 %v2394
        %4108 = vmatpush.msra.mxu0 %v2393
        %4109 = vmatpush.msra.mxu0 %v2392
        %4110 = vmatpush.msra.mxu0 %v2391
        %4111 = vmatmul.f32.gmra.mxu0 %v2424
        %v4112 = vpop.f32.mrf.mxu0
        %v4113 = vadd.f32 %v4030, %v4112
        %4114 = vmatmul.f32.gmra.mxu0 %v2441
        %v4115 = vpop.f32.mrf.mxu0
        %v4116 = vadd.f32 %v4033, %v4115
        %4117 = vmatmul.f32.gmra.mxu0 %v2458
        %v4118 = vpop.f32.mrf.mxu0
        %v4119 = vadd.f32 %v4036, %v4118
        %4120 = vmatmul.f32.gmra.mxu0 %v2475
        %v4121 = vpop.f32.mrf.mxu0
        %v4122 = vadd.f32 %v4039, %v4121
        %4123 = vmatmul.f32.gmra.mxu0 %v2492
        %v4124 = vpop.f32.mrf.mxu0
        %v4125 = vadd.f32 %v4042, %v4124
        %4126 = vmatmul.f32.gmra.mxu0 %v2509
        %v4127 = vpop.f32.mrf.mxu0
        %v4128 = vadd.f32 %v4045, %v4127
        %4129 = vmatmul.f32.gmra.mxu0 %v2526
        %v4130 = vpop.f32.mrf.mxu0
        %v4131 = vadd.f32 %v4048, %v4130
        %4132 = vmatmul.f32.gmra.mxu0 %v2543
        %v4133 = vpop.f32.mrf.mxu0
        %v4134 = vadd.f32 %v4051, %v4133
        %4135 = vmatmul.f32.gmra.mxu0 %v2560
        %v4136 = vpop.f32.mrf.mxu0
        %v4137 = vadd.f32 %v4054, %v4136
        %4138 = vmatmul.f32.gmra.mxu0 %v2577
        %v4139 = vpop.f32.mrf.mxu0
        %v4140 = vadd.f32 %v4057, %v4139
        %4141 = vmatmul.f32.gmra.mxu0 %v2594
        %v4142 = vpop.f32.mrf.mxu0
        %v4143 = vadd.f32 %v4060, %v4142
        %4144 = vmatmul.f32.gmra.mxu0 %v2611
        %v4145 = vpop.f32.mrf.mxu0
        %v4146 = vadd.f32 %v4063, %v4145
        %4147 = vmatmul.f32.gmra.mxu0 %v2628
        %v4148 = vpop.f32.mrf.mxu0
        %v4149 = vadd.f32 %v4066, %v4148
        %4150 = vmatmul.f32.gmra.mxu0 %v2645
        %v4151 = vpop.f32.mrf.mxu0
        %v4152 = vadd.f32 %v4069, %v4151
        %4153 = vmatmul.f32.gmra.mxu0 %v2662
        %v4154 = vpop.f32.mrf.mxu0
        %v4155 = vadd.f32 %v4072, %v4154
        %4156 = vmatmul.f32.gmra.mxu0 %v2679
        %v4157 = vpop.f32.mrf.mxu0
        %v4158 = vadd.f32 %v4075, %v4157
        %4159 = vmatmul.f32.gmra.mxu0 %v2696
        %v4160 = vpop.f32.mrf.mxu0
        %v4161 = vadd.f32 %v4078, %v4160
        %4162 = vmatmul.f32.gmra.mxu0 %v2713
        %v4163 = vpop.f32.mrf.mxu0
        %v4164 = vadd.f32 %v4081, %v4163
        %4165 = vmatmul.f32.gmra.mxu0 %v2730
        %v4166 = vpop.f32.mrf.mxu0
        %v4167 = vadd.f32 %v4084, %v4166
        %4168 = vmatmul.f32.gmra.mxu0 %v2747
        %v4169 = vpop.f32.mrf.mxu0
        %v4170 = vadd.f32 %v4087, %v4169
        %4171 = vmatmul.f32.gmra.mxu0 %v2764
        %v4172 = vpop.f32.mrf.mxu0
        %v4173 = vadd.f32 %v4090, %v4172
        %4174 = vmatmul.f32.gmra.mxu0 %v2781
        %v4175 = vpop.f32.mrf.mxu0
        %v4176 = vadd.f32 %v4093, %v4175
        %4177 = vdwg.mxu0
        %4178 = vmatpush.msra.mxu0 0.0
        %4179 = vmatpush.msra.mxu0 0.0
        %4180 = vmatpush.msra.mxu0 0.0
        %4181 = vmatpush.msra.mxu0 0.0
        %4182 = vmatpush.msra.mxu0 0.0
        %4183 = vmatpush.msra.mxu0 0.0
        %4184 = vmatpush.msra.mxu0 0.0
        %4185 = vmatpush.msra.mxu0 0.0
        %4186 = vmatpush.msra.mxu0 0.0
        %4187 = vmatpush.msra.mxu0 0.0
        %4188 = vmatpush.msra.mxu0 0.0
        %4189 = vmatpush.msra.mxu0 0.0
        %4190 = vmatpush.msra.mxu0 0.0
        %4191 = vmatpush.msra.mxu0 0.0
        %4192 = vmatpush.msra.mxu0 %v2408
        %4193 = vmatpush.msra.mxu0 %v2407
        %4194 = vmatmul.f32.gmra.mxu0 %v2785
        %v4195 = vpop.f32.mrf.mxu0
        %v4196 = vadd.f32 %v4113, %v4195
        %4197 = vmatmul.f32.gmra.mxu0 %v2788
        %v4198 = vpop.f32.mrf.mxu0
        %v4199 = vadd.f32 %v4116, %v4198
        %4200 = vmatmul.f32.gmra.mxu0 %v2791
        %v4201 = vpop.f32.mrf.mxu0
        %v4202 = vadd.f32 %v4119, %v4201
        %4203 = vmatmul.f32.gmra.mxu0 %v2794
        %v4204 = vpop.f32.mrf.mxu0
        %v4205 = vadd.f32 %v4122, %v4204
        %4206 = vmatmul.f32.gmra.mxu0 %v2797
        %v4207 = vpop.f32.mrf.mxu0
        %v4208 = vadd.f32 %v4125, %v4207
        %4209 = vmatmul.f32.gmra.mxu0 %v2800
        %v4210 = vpop.f32.mrf.mxu0
        %v4211 = vadd.f32 %v4128, %v4210
        %4212 = vmatmul.f32.gmra.mxu0 %v2803
        %v4213 = vpop.f32.mrf.mxu0
        %v4214 = vadd.f32 %v4131, %v4213
        %4215 = vmatmul.f32.gmra.mxu0 %v2806
        %v4216 = vpop.f32.mrf.mxu0
        %v4217 = vadd.f32 %v4134, %v4216
        %4218 = vmatmul.f32.gmra.mxu0 %v2809
        %v4219 = vpop.f32.mrf.mxu0
        %v4220 = vadd.f32 %v4137, %v4219
        %4221 = vmatmul.f32.gmra.mxu0 %v2812
        %v4222 = vpop.f32.mrf.mxu0
        %v4223 = vadd.f32 %v4140, %v4222
        %4224 = vmatmul.f32.gmra.mxu0 %v2815
        %v4225 = vpop.f32.mrf.mxu0
        %v4226 = vadd.f32 %v4143, %v4225
        %4227 = vmatmul.f32.gmra.mxu0 %v2818
        %v4228 = vpop.f32.mrf.mxu0
        %v4229 = vadd.f32 %v4146, %v4228
        %4230 = vmatmul.f32.gmra.mxu0 %v2821
        %v4231 = vpop.f32.mrf.mxu0
        %v4232 = vadd.f32 %v4149, %v4231
        %4233 = vmatmul.f32.gmra.mxu0 %v2824
        %v4234 = vpop.f32.mrf.mxu0
        %v4235 = vadd.f32 %v4152, %v4234
        %4236 = vmatmul.f32.gmra.mxu0 %v2827
        %v4237 = vpop.f32.mrf.mxu0
        %v4238 = vadd.f32 %v4155, %v4237
        %4239 = vmatmul.f32.gmra.mxu0 %v2830
        %v4240 = vpop.f32.mrf.mxu0
        %v4241 = vadd.f32 %v4158, %v4240
        %4242 = vmatmul.f32.gmra.mxu0 %v2833
        %v4243 = vpop.f32.mrf.mxu0
        %v4244 = vadd.f32 %v4161, %v4243
        %4245 = vmatmul.f32.gmra.mxu0 %v2836
        %v4246 = vpop.f32.mrf.mxu0
        %v4247 = vadd.f32 %v4164, %v4246
        %4248 = vmatmul.f32.gmra.mxu0 %v2839
        %v4249 = vpop.f32.mrf.mxu0
        %v4250 = vadd.f32 %v4167, %v4249
        %4251 = vmatmul.f32.gmra.mxu0 %v2842
        %v4252 = vpop.f32.mrf.mxu0
        %v4253 = vadd.f32 %v4170, %v4252
        %4254 = vmatmul.f32.gmra.mxu0 %v2845
        %v4255 = vpop.f32.mrf.mxu0
        %v4256 = vadd.f32 %v4173, %v4255
        %4257 = vmatmul.f32.gmra.mxu0 %v2848
        %v4258 = vpop.f32.mrf.mxu0
        %v4259 = vadd.f32 %v4176, %v4258
        %4260 = vdwg.mxu0
        %vm4261 = vcmask 400384
        %v4262 = vsel %vm4261, %v4196, 0.0
        %4263 = vadd.xlane.f32.xlu0 %v4262
        %v4264 = vpop.xlane.xlu0 %4263
        %v4265 = vsel %vm4261, %v4199, 0.0
        %4266 = vadd.xlane.f32.xlu0 %v4265
        %v4267 = vpop.xlane.xlu0 %4266
        %v4268 = vsel %vm4261, %v4202, 0.0
        %4269 = vadd.xlane.f32.xlu0 %v4268
        %v4270 = vpop.xlane.xlu0 %4269
        %v4271 = vsel %vm4261, %v4205, 0.0
        %4272 = vadd.xlane.f32.xlu0 %v4271
        %v4273 = vpop.xlane.xlu0 %4272
        %v4274 = vsel %vm4261, %v4208, 0.0
        %4275 = vadd.xlane.f32.xlu0 %v4274
        %v4276 = vpop.xlane.xlu0 %4275
        %v4277 = vsel %vm4261, %v4211, 0.0
        %4278 = vadd.xlane.f32.xlu0 %v4277
        %v4279 = vpop.xlane.xlu0 %4278
        %v4280 = vsel %vm4261, %v4214, 0.0
        %4281 = vadd.xlane.f32.xlu0 %v4280
        %v4282 = vpop.xlane.xlu0 %4281
        %v4283 = vsel %vm4261, %v4217, 0.0
        %4284 = vadd.xlane.f32.xlu0 %v4283
        %v4285 = vpop.xlane.xlu0 %4284
        %v4286 = vsel %vm4261, %v4220, 0.0
        %4287 = vadd.xlane.f32.xlu0 %v4286
        %v4288 = vpop.xlane.xlu0 %4287
        %v4289 = vsel %vm4261, %v4223, 0.0
        %4290 = vadd.xlane.f32.xlu0 %v4289
        %v4291 = vpop.xlane.xlu0 %4290
        %v4292 = vsel %vm4261, %v4226, 0.0
        %4293 = vadd.xlane.f32.xlu0 %v4292
        %v4294 = vpop.xlane.xlu0 %4293
        %v4295 = vsel %vm4261, %v4229, 0.0
        %4296 = vadd.xlane.f32.xlu0 %v4295
        %v4297 = vpop.xlane.xlu0 %4296
        %v4298 = vsel %vm4261, %v4232, 0.0
        %4299 = vadd.xlane.f32.xlu0 %v4298
        %v4300 = vpop.xlane.xlu0 %4299
        %v4301 = vsel %vm4261, %v4235, 0.0
        %4302 = vadd.xlane.f32.xlu0 %v4301
        %v4303 = vpop.xlane.xlu0 %4302
        %v4304 = vsel %vm4261, %v4238, 0.0
        %4305 = vadd.xlane.f32.xlu0 %v4304
        %v4306 = vpop.xlane.xlu0 %4305
        %v4307 = vsel %vm4261, %v4241, 0.0
        %4308 = vadd.xlane.f32.xlu0 %v4307
        %v4309 = vpop.xlane.xlu0 %4308
        %v4310 = vsel %vm4261, %v4244, 0.0
        %4311 = vadd.xlane.f32.xlu0 %v4310
        %v4312 = vpop.xlane.xlu0 %4311
        %v4313 = vsel %vm4261, %v4247, 0.0
        %4314 = vadd.xlane.f32.xlu0 %v4313
        %v4315 = vpop.xlane.xlu0 %4314
        %v4316 = vsel %vm4261, %v4250, 0.0
        %4317 = vadd.xlane.f32.xlu0 %v4316
        %v4318 = vpop.xlane.xlu0 %4317
        %v4319 = vsel %vm4261, %v4253, 0.0
        %4320 = vadd.xlane.f32.xlu0 %v4319
        %v4321 = vpop.xlane.xlu0 %4320
        %v4322 = vsel %vm4261, %v4256, 0.0
        %4323 = vadd.xlane.f32.xlu0 %v4322
        %v4324 = vpop.xlane.xlu0 %4323
        %v4325 = vsel %vm4261, %v4259, 0.0
        %4326 = vadd.xlane.f32.xlu0 %v4325
        %v4327 = vpop.xlane.xlu0 %4326
        %v4328 = vmul.f32 %v4264, 0.020408163
        %v4329 = vmul.f32 %v4267, 0.020408163
        %v4330 = vmul.f32 %v4270, 0.020408163
        %v4331 = vmul.f32 %v4273, 0.020408163
        %v4332 = vmul.f32 %v4276, 0.020408163
        %v4333 = vmul.f32 %v4279, 0.020408163
        %v4334 = vmul.f32 %v4282, 0.020408163
        %v4335 = vmul.f32 %v4285, 0.020408163
        %v4336 = vmul.f32 %v4288, 0.020408163
        %v4337 = vmul.f32 %v4291, 0.020408163
        %v4338 = vmul.f32 %v4294, 0.020408163
        %v4339 = vmul.f32 %v4297, 0.020408163
        %v4340 = vmul.f32 %v4300, 0.020408163
        %v4341 = vmul.f32 %v4303, 0.020408163
        %v4342 = vmul.f32 %v4306, 0.020408163
        %v4343 = vmul.f32 %v4309, 0.020408163
        %v4344 = vmul.f32 %v4312, 0.020408163
        %v4345 = vmul.f32 %v4315, 0.020408163
        %v4346 = vmul.f32 %v4318, 0.020408163
        %v4347 = vmul.f32 %v4321, 0.020408163
        %v4348 = vmul.f32 %v4324, 0.020408163
        %v4349 = vmul.f32 %v4327, 0.020408163
        %v4350 = vsub.f32 %v4196, %v4328
        %v4351 = vsub.f32 %v4199, %v4329
        %v4352 = vsub.f32 %v4202, %v4330
        %v4353 = vsub.f32 %v4205, %v4331
        %v4354 = vsub.f32 %v4208, %v4332
        %v4355 = vsub.f32 %v4211, %v4333
        %v4356 = vsub.f32 %v4214, %v4334
        %v4357 = vsub.f32 %v4217, %v4335
        %v4358 = vsub.f32 %v4220, %v4336
        %v4359 = vsub.f32 %v4223, %v4337
        %v4360 = vsub.f32 %v4226, %v4338
        %v4361 = vsub.f32 %v4229, %v4339
        %v4362 = vsub.f32 %v4232, %v4340
        %v4363 = vsub.f32 %v4235, %v4341
        %v4364 = vsub.f32 %v4238, %v4342
        %v4365 = vsub.f32 %v4241, %v4343
        %v4366 = vsub.f32 %v4244, %v4344
        %v4367 = vsub.f32 %v4247, %v4345
        %v4368 = vsub.f32 %v4250, %v4346
        %v4369 = vsub.f32 %v4253, %v4347
        %v4370 = vsub.f32 %v4256, %v4348
        %v4371 = vsub.f32 %v4259, %v4349
        %v4372 = vmul.f32 %v4350, %v4350
        %v4373 = vmul.f32 %v4351, %v4351
        %v4374 = vmul.f32 %v4352, %v4352
        %v4375 = vmul.f32 %v4353, %v4353
        %v4376 = vmul.f32 %v4354, %v4354
        %v4377 = vmul.f32 %v4355, %v4355
        %v4378 = vmul.f32 %v4356, %v4356
        %v4379 = vmul.f32 %v4357, %v4357
        %v4380 = vmul.f32 %v4358, %v4358
        %v4381 = vmul.f32 %v4359, %v4359
        %v4382 = vmul.f32 %v4360, %v4360
        %v4383 = vmul.f32 %v4361, %v4361
        %v4384 = vmul.f32 %v4362, %v4362
        %v4385 = vmul.f32 %v4363, %v4363
        %v4386 = vmul.f32 %v4364, %v4364
        %v4387 = vmul.f32 %v4365, %v4365
        %v4388 = vmul.f32 %v4366, %v4366
        %v4389 = vmul.f32 %v4367, %v4367
        %v4390 = vmul.f32 %v4368, %v4368
        %v4391 = vmul.f32 %v4369, %v4369
        %v4392 = vmul.f32 %v4370, %v4370
        %v4393 = vmul.f32 %v4371, %v4371
        %v4394 = vsel %vm4261, %v4372, 0.0
        %4395 = vadd.xlane.f32.xlu0 %v4394
        %v4396 = vpop.xlane.xlu0 %4395
        %v4397 = vsel %vm4261, %v4373, 0.0
        %4398 = vadd.xlane.f32.xlu0 %v4397
        %v4399 = vpop.xlane.xlu0 %4398
        %v4400 = vsel %vm4261, %v4374, 0.0
        %4401 = vadd.xlane.f32.xlu0 %v4400
        %v4402 = vpop.xlane.xlu0 %4401
        %v4403 = vsel %vm4261, %v4375, 0.0
        %4404 = vadd.xlane.f32.xlu0 %v4403
        %v4405 = vpop.xlane.xlu0 %4404
        %v4406 = vsel %vm4261, %v4376, 0.0
        %4407 = vadd.xlane.f32.xlu0 %v4406
        %v4408 = vpop.xlane.xlu0 %4407
        %v4409 = vsel %vm4261, %v4377, 0.0
        %4410 = vadd.xlane.f32.xlu0 %v4409
        %v4411 = vpop.xlane.xlu0 %4410
        %v4412 = vsel %vm4261, %v4378, 0.0
        %4413 = vadd.xlane.f32.xlu0 %v4412
        %v4414 = vpop.xlane.xlu0 %4413
        %v4415 = vsel %vm4261, %v4379, 0.0
        %4416 = vadd.xlane.f32.xlu0 %v4415
        %v4417 = vpop.xlane.xlu0 %4416
        %v4418 = vsel %vm4261, %v4380, 0.0
        %4419 = vadd.xlane.f32.xlu0 %v4418
        %v4420 = vpop.xlane.xlu0 %4419
        %v4421 = vsel %vm4261, %v4381, 0.0
        %4422 = vadd.xlane.f32.xlu0 %v4421
        %v4423 = vpop.xlane.xlu0 %4422
        %v4424 = vsel %vm4261, %v4382, 0.0
        %4425 = vadd.xlane.f32.xlu0 %v4424
        %v4426 = vpop.xlane.xlu0 %4425
        %v4427 = vsel %vm4261, %v4383, 0.0
        %4428 = vadd.xlane.f32.xlu0 %v4427
        %v4429 = vpop.xlane.xlu0 %4428
        %v4430 = vsel %vm4261, %v4384, 0.0
        %4431 = vadd.xlane.f32.xlu0 %v4430
        %v4432 = vpop.xlane.xlu0 %4431
        %v4433 = vsel %vm4261, %v4385, 0.0
        %4434 = vadd.xlane.f32.xlu0 %v4433
        %v4435 = vpop.xlane.xlu0 %4434
        %v4436 = vsel %vm4261, %v4386, 0.0
        %4437 = vadd.xlane.f32.xlu0 %v4436
        %v4438 = vpop.xlane.xlu0 %4437
        %v4439 = vsel %vm4261, %v4387, 0.0
        %4440 = vadd.xlane.f32.xlu0 %v4439
        %v4441 = vpop.xlane.xlu0 %4440
        %v4442 = vsel %vm4261, %v4388, 0.0
        %4443 = vadd.xlane.f32.xlu0 %v4442
        %v4444 = vpop.xlane.xlu0 %4443
        %v4445 = vsel %vm4261, %v4389, 0.0
        %4446 = vadd.xlane.f32.xlu0 %v4445
        %v4447 = vpop.xlane.xlu0 %4446
        %v4448 = vsel %vm4261, %v4390, 0.0
        %4449 = vadd.xlane.f32.xlu0 %v4448
        %v4450 = vpop.xlane.xlu0 %4449
        %v4451 = vsel %vm4261, %v4391, 0.0
        %4452 = vadd.xlane.f32.xlu0 %v4451
        %v4453 = vpop.xlane.xlu0 %4452
        %v4454 = vsel %vm4261, %v4392, 0.0
        %4455 = vadd.xlane.f32.xlu0 %v4454
        %v4456 = vpop.xlane.xlu0 %4455
        %v4457 = vsel %vm4261, %v4393, 0.0
        %4458 = vadd.xlane.f32.xlu0 %v4457
        %v4459 = vpop.xlane.xlu0 %4458
        %v4460 = vmul.f32 %v4396, 0.020408163
        %v4461 = vmul.f32 %v4399, 0.020408163
        %v4462 = vmul.f32 %v4402, 0.020408163
        %v4463 = vmul.f32 %v4405, 0.020408163
        %v4464 = vmul.f32 %v4408, 0.020408163
        %v4465 = vmul.f32 %v4411, 0.020408163
        %v4466 = vmul.f32 %v4414, 0.020408163
        %v4467 = vmul.f32 %v4417, 0.020408163
        %v4468 = vmul.f32 %v4420, 0.020408163
        %v4469 = vmul.f32 %v4423, 0.020408163
        %v4470 = vmul.f32 %v4426, 0.020408163
        %v4471 = vmul.f32 %v4429, 0.020408163
        %v4472 = vmul.f32 %v4432, 0.020408163
        %v4473 = vmul.f32 %v4435, 0.020408163
        %v4474 = vmul.f32 %v4438, 0.020408163
        %v4475 = vmul.f32 %v4441, 0.020408163
        %v4476 = vmul.f32 %v4444, 0.020408163
        %v4477 = vmul.f32 %v4447, 0.020408163
        %v4478 = vmul.f32 %v4450, 0.020408163
        %v4479 = vmul.f32 %v4453, 0.020408163
        %v4480 = vmul.f32 %v4456, 0.020408163
        %v4481 = vmul.f32 %v4459, 0.020408163
        %v4482 = vld [vmem:[%s320] sm:$0xff]
        %v4483 = vld [vmem:[%s320 + $0x8] sm:$0xff]
        %v4484 = vld [vmem:[%s320 + $0x10] sm:$0xff]
        %v4485 = vld [vmem:[%s320 + $0x18] sm:$0xff]
        %v4486 = vld [vmem:[%s320 + $0x20] sm:$0xff]
        %v4487 = vld [vmem:[%s320 + $0x28] sm:$0xff]
        %v4488 = vld [vmem:[%s320 + $0x30] sm:$0xff]
        %v4489 = vld [vmem:[%s320 + $0x38] sm:$0xff]
        %v4490 = vld [vmem:[%s320 + $0x40] sm:$0xff]
        %v4491 = vld [vmem:[%s320 + $0x48] sm:$0xff]
        %v4492 = vld [vmem:[%s320 + $0x50] sm:$0xff]
        %v4493 = vld [vmem:[%s320 + $0x58] sm:$0xff]
        %v4494 = vld [vmem:[%s320 + $0x60] sm:$0xff]
        %v4495 = vld [vmem:[%s320 + $0x68] sm:$0xff]
        %v4496 = vld [vmem:[%s320 + $0x70] sm:$0xff]
        %v4497 = vld [vmem:[%s320 + $0x78] sm:$0xff]
        %v4498 = vld [vmem:[%s320 + $0x80] sm:$0xff]
        %v4499 = vld [vmem:[%s320 + $0x88] sm:$0xff]
        %v4500 = vld [vmem:[%s320 + $0x90] sm:$0xff]
        %v4501 = vld [vmem:[%s320 + $0x98] sm:$0xff]
        %v4502 = vld [vmem:[%s320 + $0xa0] sm:$0xff]
        %v4503 = vld [vmem:[%s320 + $0xa8] sm:$0xff]
        %v4504 = vadd.f32 %v4460, 0.001
        %v4505 = vadd.f32 %v4461, 0.001
        %v4506 = vadd.f32 %v4462, 0.001
        %v4507 = vadd.f32 %v4463, 0.001
        %v4508 = vadd.f32 %v4464, 0.001
        %v4509 = vadd.f32 %v4465, 0.001
        %v4510 = vadd.f32 %v4466, 0.001
        %v4511 = vadd.f32 %v4467, 0.001
        %v4512 = vadd.f32 %v4468, 0.001
        %v4513 = vadd.f32 %v4469, 0.001
        %v4514 = vadd.f32 %v4470, 0.001
        %v4515 = vadd.f32 %v4471, 0.001
        %v4516 = vadd.f32 %v4472, 0.001
        %v4517 = vadd.f32 %v4473, 0.001
        %v4518 = vadd.f32 %v4474, 0.001
        %v4519 = vadd.f32 %v4475, 0.001
        %v4520 = vadd.f32 %v4476, 0.001
        %v4521 = vadd.f32 %v4477, 0.001
        %v4522 = vadd.f32 %v4478, 0.001
        %v4523 = vadd.f32 %v4479, 0.001
        %v4524 = vadd.f32 %v4480, 0.001
        %v4525 = vadd.f32 %v4481, 0.001
        %v4526 = vrsqrt.pop %v4504
        %v4527 = vmul.f32 %v4526, %v4504
        %v4528 = vmul.f32 %v4527, %v4526
        %v4529 = vmul.f32 0.5, %v4528
        %v4530 = vsub.f32 1.5, %v4529
        %v4531 = vmul.f32 %v4526, %v4530
        %vm4532 = vweird.f32 %v4504
        %vm4533 = vweird.f32 %v4526
        %vm4534 = vmor %vm4532, %vm4533
        %v4535 = vsel %vm4534, %v4526, %v4531
        %v4536 = vrsqrt.pop %v4505
        %v4537 = vmul.f32 %v4536, %v4505
        %v4538 = vmul.f32 %v4537, %v4536
        %v4539 = vmul.f32 0.5, %v4538
        %v4540 = vsub.f32 1.5, %v4539
        %v4541 = vmul.f32 %v4536, %v4540
        %vm4542 = vweird.f32 %v4505
        %vm4543 = vweird.f32 %v4536
        %vm4544 = vmor %vm4542, %vm4543
        %v4545 = vsel %vm4544, %v4536, %v4541
        %v4546 = vrsqrt.pop %v4506
        %v4547 = vmul.f32 %v4546, %v4506
        %v4548 = vmul.f32 %v4547, %v4546
        %v4549 = vmul.f32 0.5, %v4548
        %v4550 = vsub.f32 1.5, %v4549
        %v4551 = vmul.f32 %v4546, %v4550
        %vm4552 = vweird.f32 %v4506
        %vm4553 = vweird.f32 %v4546
        %vm4554 = vmor %vm4552, %vm4553
        %v4555 = vsel %vm4554, %v4546, %v4551
        %v4556 = vrsqrt.pop %v4507
        %v4557 = vmul.f32 %v4556, %v4507
        %v4558 = vmul.f32 %v4557, %v4556
        %v4559 = vmul.f32 0.5, %v4558
        %v4560 = vsub.f32 1.5, %v4559
        %v4561 = vmul.f32 %v4556, %v4560
        %vm4562 = vweird.f32 %v4507
        %vm4563 = vweird.f32 %v4556
        %vm4564 = vmor %vm4562, %vm4563
        %v4565 = vsel %vm4564, %v4556, %v4561
        %v4566 = vrsqrt.pop %v4508
        %v4567 = vmul.f32 %v4566, %v4508
        %v4568 = vmul.f32 %v4567, %v4566
        %v4569 = vmul.f32 0.5, %v4568
        %v4570 = vsub.f32 1.5, %v4569
        %v4571 = vmul.f32 %v4566, %v4570
        %vm4572 = vweird.f32 %v4508
        %vm4573 = vweird.f32 %v4566
        %vm4574 = vmor %vm4572, %vm4573
        %v4575 = vsel %vm4574, %v4566, %v4571
        %v4576 = vrsqrt.pop %v4509
        %v4577 = vmul.f32 %v4576, %v4509
        %v4578 = vmul.f32 %v4577, %v4576
        %v4579 = vmul.f32 0.5, %v4578
        %v4580 = vsub.f32 1.5, %v4579
        %v4581 = vmul.f32 %v4576, %v4580
        %vm4582 = vweird.f32 %v4509
        %vm4583 = vweird.f32 %v4576
        %vm4584 = vmor %vm4582, %vm4583
        %v4585 = vsel %vm4584, %v4576, %v4581
        %v4586 = vrsqrt.pop %v4510
        %v4587 = vmul.f32 %v4586, %v4510
        %v4588 = vmul.f32 %v4587, %v4586
        %v4589 = vmul.f32 0.5, %v4588
        %v4590 = vsub.f32 1.5, %v4589
        %v4591 = vmul.f32 %v4586, %v4590
        %vm4592 = vweird.f32 %v4510
        %vm4593 = vweird.f32 %v4586
        %vm4594 = vmor %vm4592, %vm4593
        %v4595 = vsel %vm4594, %v4586, %v4591
        %v4596 = vrsqrt.pop %v4511
        %v4597 = vmul.f32 %v4596, %v4511
        %v4598 = vmul.f32 %v4597, %v4596
        %v4599 = vmul.f32 0.5, %v4598
        %v4600 = vsub.f32 1.5, %v4599
        %v4601 = vmul.f32 %v4596, %v4600
        %vm4602 = vweird.f32 %v4511
        %vm4603 = vweird.f32 %v4596
        %vm4604 = vmor %vm4602, %vm4603
        %v4605 = vsel %vm4604, %v4596, %v4601
        %v4606 = vrsqrt.pop %v4512
        %v4607 = vmul.f32 %v4606, %v4512
        %v4608 = vmul.f32 %v4607, %v4606
        %v4609 = vmul.f32 0.5, %v4608
        %v4610 = vsub.f32 1.5, %v4609
        %v4611 = vmul.f32 %v4606, %v4610
        %vm4612 = vweird.f32 %v4512
        %vm4613 = vweird.f32 %v4606
        %vm4614 = vmor %vm4612, %vm4613
        %v4615 = vsel %vm4614, %v4606, %v4611
        %v4616 = vrsqrt.pop %v4513
        %v4617 = vmul.f32 %v4616, %v4513
        %v4618 = vmul.f32 %v4617, %v4616
        %v4619 = vmul.f32 0.5, %v4618
        %v4620 = vsub.f32 1.5, %v4619
        %v4621 = vmul.f32 %v4616, %v4620
        %vm4622 = vweird.f32 %v4513
        %vm4623 = vweird.f32 %v4616
        %vm4624 = vmor %vm4622, %vm4623
        %v4625 = vsel %vm4624, %v4616, %v4621
        %v4626 = vrsqrt.pop %v4514
        %v4627 = vmul.f32 %v4626, %v4514
        %v4628 = vmul.f32 %v4627, %v4626
        %v4629 = vmul.f32 0.5, %v4628
        %v4630 = vsub.f32 1.5, %v4629
        %v4631 = vmul.f32 %v4626, %v4630
        %vm4632 = vweird.f32 %v4514
        %vm4633 = vweird.f32 %v4626
        %vm4634 = vmor %vm4632, %vm4633
        %v4635 = vsel %vm4634, %v4626, %v4631
        %v4636 = vrsqrt.pop %v4515
        %v4637 = vmul.f32 %v4636, %v4515
        %v4638 = vmul.f32 %v4637, %v4636
        %v4639 = vmul.f32 0.5, %v4638
        %v4640 = vsub.f32 1.5, %v4639
        %v4641 = vmul.f32 %v4636, %v4640
        %vm4642 = vweird.f32 %v4515
        %vm4643 = vweird.f32 %v4636
        %vm4644 = vmor %vm4642, %vm4643
        %v4645 = vsel %vm4644, %v4636, %v4641
        %v4646 = vrsqrt.pop %v4516
        %v4647 = vmul.f32 %v4646, %v4516
        %v4648 = vmul.f32 %v4647, %v4646
        %v4649 = vmul.f32 0.5, %v4648
        %v4650 = vsub.f32 1.5, %v4649
        %v4651 = vmul.f32 %v4646, %v4650
        %vm4652 = vweird.f32 %v4516
        %vm4653 = vweird.f32 %v4646
        %vm4654 = vmor %vm4652, %vm4653
        %v4655 = vsel %vm4654, %v4646, %v4651
        %v4656 = vrsqrt.pop %v4517
        %v4657 = vmul.f32 %v4656, %v4517
        %v4658 = vmul.f32 %v4657, %v4656
        %v4659 = vmul.f32 0.5, %v4658
        %v4660 = vsub.f32 1.5, %v4659
        %v4661 = vmul.f32 %v4656, %v4660
        %vm4662 = vweird.f32 %v4517
        %vm4663 = vweird.f32 %v4656
        %vm4664 = vmor %vm4662, %vm4663
        %v4665 = vsel %vm4664, %v4656, %v4661
        %v4666 = vrsqrt.pop %v4518
        %v4667 = vmul.f32 %v4666, %v4518
        %v4668 = vmul.f32 %v4667, %v4666
        %v4669 = vmul.f32 0.5, %v4668
        %v4670 = vsub.f32 1.5, %v4669
        %v4671 = vmul.f32 %v4666, %v4670
        %vm4672 = vweird.f32 %v4518
        %vm4673 = vweird.f32 %v4666
        %vm4674 = vmor %vm4672, %vm4673
        %v4675 = vsel %vm4674, %v4666, %v4671
        %v4676 = vrsqrt.pop %v4519
        %v4677 = vmul.f32 %v4676, %v4519
        %v4678 = vmul.f32 %v4677, %v4676
        %v4679 = vmul.f32 0.5, %v4678
        %v4680 = vsub.f32 1.5, %v4679
        %v4681 = vmul.f32 %v4676, %v4680
        %vm4682 = vweird.f32 %v4519
        %vm4683 = vweird.f32 %v4676
        %vm4684 = vmor %vm4682, %vm4683
        %v4685 = vsel %vm4684, %v4676, %v4681
        %v4686 = vrsqrt.pop %v4520
        %v4687 = vmul.f32 %v4686, %v4520
        %v4688 = vmul.f32 %v4687, %v4686
        %v4689 = vmul.f32 0.5, %v4688
        %v4690 = vsub.f32 1.5, %v4689
        %v4691 = vmul.f32 %v4686, %v4690
        %vm4692 = vweird.f32 %v4520
        %vm4693 = vweird.f32 %v4686
        %vm4694 = vmor %vm4692, %vm4693
        %v4695 = vsel %vm4694, %v4686, %v4691
        %v4696 = vrsqrt.pop %v4521
        %v4697 = vmul.f32 %v4696, %v4521
        %v4698 = vmul.f32 %v4697, %v4696
        %v4699 = vmul.f32 0.5, %v4698
        %v4700 = vsub.f32 1.5, %v4699
        %v4701 = vmul.f32 %v4696, %v4700
        %vm4702 = vweird.f32 %v4521
        %vm4703 = vweird.f32 %v4696
        %vm4704 = vmor %vm4702, %vm4703
        %v4705 = vsel %vm4704, %v4696, %v4701
        %v4706 = vrsqrt.pop %v4522
        %v4707 = vmul.f32 %v4706, %v4522
        %v4708 = vmul.f32 %v4707, %v4706
        %v4709 = vmul.f32 0.5, %v4708
        %v4710 = vsub.f32 1.5, %v4709
        %v4711 = vmul.f32 %v4706, %v4710
        %vm4712 = vweird.f32 %v4522
        %vm4713 = vweird.f32 %v4706
        %vm4714 = vmor %vm4712, %vm4713
        %v4715 = vsel %vm4714, %v4706, %v4711
        %v4716 = vrsqrt.pop %v4523
        %v4717 = vmul.f32 %v4716, %v4523
        %v4718 = vmul.f32 %v4717, %v4716
        %v4719 = vmul.f32 0.5, %v4718
        %v4720 = vsub.f32 1.5, %v4719
        %v4721 = vmul.f32 %v4716, %v4720
        %vm4722 = vweird.f32 %v4523
        %vm4723 = vweird.f32 %v4716
        %vm4724 = vmor %vm4722, %vm4723
        %v4725 = vsel %vm4724, %v4716, %v4721
        %v4726 = vrsqrt.pop %v4524
        %v4727 = vmul.f32 %v4726, %v4524
        %v4728 = vmul.f32 %v4727, %v4726
        %v4729 = vmul.f32 0.5, %v4728
        %v4730 = vsub.f32 1.5, %v4729
        %v4731 = vmul.f32 %v4726, %v4730
        %vm4732 = vweird.f32 %v4524
        %vm4733 = vweird.f32 %v4726
        %vm4734 = vmor %vm4732, %vm4733
        %v4735 = vsel %vm4734, %v4726, %v4731
        %v4736 = vrsqrt.pop %v4525
        %v4737 = vmul.f32 %v4736, %v4525
        %v4738 = vmul.f32 %v4737, %v4736
        %v4739 = vmul.f32 0.5, %v4738
        %v4740 = vsub.f32 1.5, %v4739
        %v4741 = vmul.f32 %v4736, %v4740
        %vm4742 = vweird.f32 %v4525
        %vm4743 = vweird.f32 %v4736
        %vm4744 = vmor %vm4742, %vm4743
        %v4745 = vsel %vm4744, %v4736, %v4741
        %v4746 = vmul.f32 %v4482, %v4535
        %v4747 = vmul.f32 %v4483, %v4545
        %v4748 = vmul.f32 %v4484, %v4555
        %v4749 = vmul.f32 %v4485, %v4565
        %v4750 = vmul.f32 %v4486, %v4575
        %v4751 = vmul.f32 %v4487, %v4585
        %v4752 = vmul.f32 %v4488, %v4595
        %v4753 = vmul.f32 %v4489, %v4605
        %v4754 = vmul.f32 %v4490, %v4615
        %v4755 = vmul.f32 %v4491, %v4625
        %v4756 = vmul.f32 %v4492, %v4635
        %v4757 = vmul.f32 %v4493, %v4645
        %v4758 = vmul.f32 %v4494, %v4655
        %v4759 = vmul.f32 %v4495, %v4665
        %v4760 = vmul.f32 %v4496, %v4675
        %v4761 = vmul.f32 %v4497, %v4685
        %v4762 = vmul.f32 %v4498, %v4695
        %v4763 = vmul.f32 %v4499, %v4705
        %v4764 = vmul.f32 %v4500, %v4715
        %v4765 = vmul.f32 %v4501, %v4725
        %v4766 = vmul.f32 %v4502, %v4735
        %v4767 = vmul.f32 %v4503, %v4745
        %4769 = vset.pattern.permute.xlu0 0
        %4770 = vperm.xlu0 %4769, %v4746
        %v4771 = vpop.permute.xlu0 %4770
        %4774 = vset.pattern.permute.xlu0 0
        %4775 = vperm.xlu0 %4774, %v4747
        %v4776 = vpop.permute.xlu0 %4775
        %4779 = vset.pattern.permute.xlu0 0
        %4780 = vperm.xlu0 %4779, %v4748
        %v4781 = vpop.permute.xlu0 %4780
        %4784 = vset.pattern.permute.xlu0 0
        %4785 = vperm.xlu0 %4784, %v4749
        %v4786 = vpop.permute.xlu0 %4785
        %4789 = vset.pattern.permute.xlu0 0
        %4790 = vperm.xlu0 %4789, %v4750
        %v4791 = vpop.permute.xlu0 %4790
        %4794 = vset.pattern.permute.xlu0 0
        %4795 = vperm.xlu0 %4794, %v4751
        %v4796 = vpop.permute.xlu0 %4795
        %4799 = vset.pattern.permute.xlu0 0
        %4800 = vperm.xlu0 %4799, %v4752
        %v4801 = vpop.permute.xlu0 %4800
        %4804 = vset.pattern.permute.xlu0 0
        %4805 = vperm.xlu0 %4804, %v4753
        %v4806 = vpop.permute.xlu0 %4805
        %4809 = vset.pattern.permute.xlu0 0
        %4810 = vperm.xlu0 %4809, %v4754
        %v4811 = vpop.permute.xlu0 %4810
        %4814 = vset.pattern.permute.xlu0 0
        %4815 = vperm.xlu0 %4814, %v4755
        %v4816 = vpop.permute.xlu0 %4815
        %4819 = vset.pattern.permute.xlu0 0
        %4820 = vperm.xlu0 %4819, %v4756
        %v4821 = vpop.permute.xlu0 %4820
        %4824 = vset.pattern.permute.xlu0 0
        %4825 = vperm.xlu0 %4824, %v4757
        %v4826 = vpop.permute.xlu0 %4825
        %4829 = vset.pattern.permute.xlu0 0
        %4830 = vperm.xlu0 %4829, %v4758
        %v4831 = vpop.permute.xlu0 %4830
        %4834 = vset.pattern.permute.xlu0 0
        %4835 = vperm.xlu0 %4834, %v4759
        %v4836 = vpop.permute.xlu0 %4835
        %4839 = vset.pattern.permute.xlu0 0
        %4840 = vperm.xlu0 %4839, %v4760
        %v4841 = vpop.permute.xlu0 %4840
        %4844 = vset.pattern.permute.xlu0 0
        %4845 = vperm.xlu0 %4844, %v4761
        %v4846 = vpop.permute.xlu0 %4845
        %4849 = vset.pattern.permute.xlu0 0
        %4850 = vperm.xlu0 %4849, %v4762
        %v4851 = vpop.permute.xlu0 %4850
        %4854 = vset.pattern.permute.xlu0 0
        %4855 = vperm.xlu0 %4854, %v4763
        %v4856 = vpop.permute.xlu0 %4855
        %4859 = vset.pattern.permute.xlu0 0
        %4860 = vperm.xlu0 %4859, %v4764
        %v4861 = vpop.permute.xlu0 %4860
        %4864 = vset.pattern.permute.xlu0 0
        %4865 = vperm.xlu0 %4864, %v4765
        %v4866 = vpop.permute.xlu0 %4865
        %4869 = vset.pattern.permute.xlu0 0
        %4870 = vperm.xlu0 %4869, %v4766
        %v4871 = vpop.permute.xlu0 %4870
        %4874 = vset.pattern.permute.xlu0 0
        %4875 = vperm.xlu0 %4874, %v4767
        %v4876 = vpop.permute.xlu0 %4875
        %v4878 = vmul.f32 %v4350, %v4771
        %v4879 = vmul.f32 %v4351, %v4776
        %v4880 = vmul.f32 %v4352, %v4781
        %v4881 = vmul.f32 %v4353, %v4786
        %v4882 = vmul.f32 %v4354, %v4791
        %v4883 = vmul.f32 %v4355, %v4796
        %v4884 = vmul.f32 %v4356, %v4801
        %v4885 = vmul.f32 %v4357, %v4806
        %v4886 = vmul.f32 %v4358, %v4811
        %v4887 = vmul.f32 %v4359, %v4816
        %v4888 = vmul.f32 %v4360, %v4821
        %v4889 = vmul.f32 %v4361, %v4826
        %v4890 = vmul.f32 %v4362, %v4831
        %v4891 = vmul.f32 %v4363, %v4836
        %v4892 = vmul.f32 %v4364, %v4841
        %v4893 = vmul.f32 %v4365, %v4846
        %v4894 = vmul.f32 %v4366, %v4851
        %v4895 = vmul.f32 %v4367, %v4856
        %v4896 = vmul.f32 %v4368, %v4861
        %v4897 = vmul.f32 %v4369, %v4866
        %v4898 = vmul.f32 %v4370, %v4871
        %v4899 = vmul.f32 %v4371, %v4876
        %v4900 = vld [vmem:[%s334] sm:$0xff]
        %v4901 = vld [vmem:[%s334 + $0x8] sm:$0xff]
        %v4902 = vld [vmem:[%s334 + $0x10] sm:$0xff]
        %v4903 = vld [vmem:[%s334 + $0x18] sm:$0xff]
        %v4904 = vld [vmem:[%s334 + $0x20] sm:$0xff]
        %v4905 = vld [vmem:[%s334 + $0x28] sm:$0xff]
        %v4906 = vld [vmem:[%s334 + $0x30] sm:$0xff]
        %v4907 = vld [vmem:[%s334 + $0x38] sm:$0xff]
        %v4908 = vld [vmem:[%s334 + $0x40] sm:$0xff]
        %v4909 = vld [vmem:[%s334 + $0x48] sm:$0xff]
        %v4910 = vld [vmem:[%s334 + $0x50] sm:$0xff]
        %v4911 = vld [vmem:[%s334 + $0x58] sm:$0xff]
        %v4912 = vld [vmem:[%s334 + $0x60] sm:$0xff]
        %v4913 = vld [vmem:[%s334 + $0x68] sm:$0xff]
        %v4914 = vld [vmem:[%s334 + $0x70] sm:$0xff]
        %v4915 = vld [vmem:[%s334 + $0x78] sm:$0xff]
        %v4916 = vld [vmem:[%s334 + $0x80] sm:$0xff]
        %v4917 = vld [vmem:[%s334 + $0x88] sm:$0xff]
        %v4918 = vld [vmem:[%s334 + $0x90] sm:$0xff]
        %v4919 = vld [vmem:[%s334 + $0x98] sm:$0xff]
        %v4920 = vld [vmem:[%s334 + $0xa0] sm:$0xff]
        %v4921 = vld [vmem:[%s334 + $0xa8] sm:$0xff]
        %4923 = vset.pattern.permute.xlu0 0
        %4924 = vperm.xlu0 %4923, %v4900
        %v4925 = vpop.permute.xlu0 %4924
        %4928 = vset.pattern.permute.xlu0 0
        %4929 = vperm.xlu0 %4928, %v4901
        %v4930 = vpop.permute.xlu0 %4929
        %4933 = vset.pattern.permute.xlu0 0
        %4934 = vperm.xlu0 %4933, %v4902
        %v4935 = vpop.permute.xlu0 %4934
        %4938 = vset.pattern.permute.xlu0 0
        %4939 = vperm.xlu0 %4938, %v4903
        %v4940 = vpop.permute.xlu0 %4939
        %4943 = vset.pattern.permute.xlu0 0
        %4944 = vperm.xlu0 %4943, %v4904
        %v4945 = vpop.permute.xlu0 %4944
        %4948 = vset.pattern.permute.xlu0 0
        %4949 = vperm.xlu0 %4948, %v4905
        %v4950 = vpop.permute.xlu0 %4949
        %4953 = vset.pattern.permute.xlu0 0
        %4954 = vperm.xlu0 %4953, %v4906
        %v4955 = vpop.permute.xlu0 %4954
        %4958 = vset.pattern.permute.xlu0 0
        %4959 = vperm.xlu0 %4958, %v4907
        %v4960 = vpop.permute.xlu0 %4959
        %4963 = vset.pattern.permute.xlu0 0
        %4964 = vperm.xlu0 %4963, %v4908
        %v4965 = vpop.permute.xlu0 %4964
        %4968 = vset.pattern.permute.xlu0 0
        %4969 = vperm.xlu0 %4968, %v4909
        %v4970 = vpop.permute.xlu0 %4969
        %4973 = vset.pattern.permute.xlu0 0
        %4974 = vperm.xlu0 %4973, %v4910
        %v4975 = vpop.permute.xlu0 %4974
        %4978 = vset.pattern.permute.xlu0 0
        %4979 = vperm.xlu0 %4978, %v4911
        %v4980 = vpop.permute.xlu0 %4979
        %4983 = vset.pattern.permute.xlu0 0
        %4984 = vperm.xlu0 %4983, %v4912
        %v4985 = vpop.permute.xlu0 %4984
        %4988 = vset.pattern.permute.xlu0 0
        %4989 = vperm.xlu0 %4988, %v4913
        %v4990 = vpop.permute.xlu0 %4989
        %4993 = vset.pattern.permute.xlu0 0
        %4994 = vperm.xlu0 %4993, %v4914
        %v4995 = vpop.permute.xlu0 %4994
        %4998 = vset.pattern.permute.xlu0 0
        %4999 = vperm.xlu0 %4998, %v4915
        %v5000 = vpop.permute.xlu0 %4999
        %5003 = vset.pattern.permute.xlu0 0
        %5004 = vperm.xlu0 %5003, %v4916
        %v5005 = vpop.permute.xlu0 %5004
        %5008 = vset.pattern.permute.xlu0 0
        %5009 = vperm.xlu0 %5008, %v4917
        %v5010 = vpop.permute.xlu0 %5009
        %5013 = vset.pattern.permute.xlu0 0
        %5014 = vperm.xlu0 %5013, %v4918
        %v5015 = vpop.permute.xlu0 %5014
        %5018 = vset.pattern.permute.xlu0 0
        %5019 = vperm.xlu0 %5018, %v4919
        %v5020 = vpop.permute.xlu0 %5019
        %5023 = vset.pattern.permute.xlu0 0
        %5024 = vperm.xlu0 %5023, %v4920
        %v5025 = vpop.permute.xlu0 %5024
        %5028 = vset.pattern.permute.xlu0 0
        %5029 = vperm.xlu0 %5028, %v4921
        %v5030 = vpop.permute.xlu0 %5029
        %v5032 = vadd.f32 %v4878, %v4925
        %v5033 = vadd.f32 %v4879, %v4930
        %v5034 = vadd.f32 %v4880, %v4935
        %v5035 = vadd.f32 %v4881, %v4940
        %v5036 = vadd.f32 %v4882, %v4945
        %v5037 = vadd.f32 %v4883, %v4950
        %v5038 = vadd.f32 %v4884, %v4955
        %v5039 = vadd.f32 %v4885, %v4960
        %v5040 = vadd.f32 %v4886, %v4965
        %v5041 = vadd.f32 %v4887, %v4970
        %v5042 = vadd.f32 %v4888, %v4975
        %v5043 = vadd.f32 %v4889, %v4980
        %v5044 = vadd.f32 %v4890, %v4985
        %v5045 = vadd.f32 %v4891, %v4990
        %v5046 = vadd.f32 %v4892, %v4995
        %v5047 = vadd.f32 %v4893, %v5000
        %v5048 = vadd.f32 %v4894, %v5005
        %v5049 = vadd.f32 %v4895, %v5010
        %v5050 = vadd.f32 %v4896, %v5015
        %v5051 = vadd.f32 %v4897, %v5020
        %v5052 = vadd.f32 %v4898, %v5025
        %v5053 = vadd.f32 %v4899, %v5030
        %5054 = vst.msk [vmem:[%s305] sm:$0xff] %vm4261, %v5032
        %5055 = vst.msk [vmem:[%s305 + $0x8] sm:$0xff] %vm4261, %v5033
        %5056 = vst.msk [vmem:[%s305 + $0x10] sm:$0xff] %vm4261, %v5034
        %5057 = vst.msk [vmem:[%s305 + $0x18] sm:$0xff] %vm4261, %v5035
        %5058 = vst.msk [vmem:[%s305 + $0x20] sm:$0xff] %vm4261, %v5036
        %5059 = vst.msk [vmem:[%s305 + $0x28] sm:$0xff] %vm4261, %v5037
        %5060 = vst.msk [vmem:[%s305 + $0x30] sm:$0xff] %vm4261, %v5038
        %5061 = vst.msk [vmem:[%s305 + $0x38] sm:$0xff] %vm4261, %v5039
        %5062 = vst.msk [vmem:[%s305 + $0x40] sm:$0xff] %vm4261, %v5040
        %5063 = vst.msk [vmem:[%s305 + $0x48] sm:$0xff] %vm4261, %v5041
        %5064 = vst.msk [vmem:[%s305 + $0x50] sm:$0xff] %vm4261, %v5042
        %5065 = vst.msk [vmem:[%s305 + $0x58] sm:$0xff] %vm4261, %v5043
        %5066 = vst.msk [vmem:[%s305 + $0x60] sm:$0xff] %vm4261, %v5044
        %5067 = vst.msk [vmem:[%s305 + $0x68] sm:$0xff] %vm4261, %v5045
        %5068 = vst.msk [vmem:[%s305 + $0x70] sm:$0xff] %vm4261, %v5046
        %5069 = vst.msk [vmem:[%s305 + $0x78] sm:$0xff] %vm4261, %v5047
        %5070 = vst.msk [vmem:[%s305 + $0x80] sm:$0xff] %vm4261, %v5048
        %5071 = vst.msk [vmem:[%s305 + $0x88] sm:$0xff] %vm4261, %v5049
        %5072 = vst.msk [vmem:[%s305 + $0x90] sm:$0xff] %vm4261, %v5050
        %5073 = vst.msk [vmem:[%s305 + $0x98] sm:$0xff] %vm4261, %v5051
        %5074 = vst.msk [vmem:[%s305 + $0xa0] sm:$0xff] %vm4261, %v5052
        %5075 = vst.msk [vmem:[%s305 + $0xa8] sm:$0xff] %vm4261, %v5053
        %s5076 = sand.u32 %s147, 1
        %s5077 = sand.u32 %s147, 1
        %s5078 = smul.addr %s5077, 176
        %s5079 = scalar_lea.vmem [#allocation4], %s5078
        // Predicated region
        $region45: #{tpu_custom_call.1} parent=39 // pred_check
          %p5080 = pneg %p157
        $region46: #{tpu_custom_call.1} parent=39 // pred_check_branch
          %5082 = sbr.rel (%p5080) target = $region48
        $region47: #{tpu_custom_call.1} parent=39 // pred_region
          %s5083 = smul.u32 22, %s19
          %s5084 = ssub.s32 43, %s5083
          %p5085 = scmp.lt.s32.totalorder %s5084, 22
          %s5086 = scalar_select %p5085, %s5084, 22
          %s5087 = smul.u32 8, %s5086
          %p5088 = scmp.ne.s32.totalorder 0, %s5087
          %s5089 = smul.addr %s5083, 8
          %s5090 = scalar_lea.vmem %s5, %s5089
          // Predicated region
          $region49: #{tpu_custom_call.1} parent=47 // pred_check
            %p5091 = pneg %p5088
          $region50: #{tpu_custom_call.1} parent=47 // pred_check_branch
            %5093 = sbr.rel (%p5091) target = $region52
          $region51: #{tpu_custom_call.1} parent=47 // pred_region
            // Predicated region
            $region53: #{tpu_custom_call.1} parent=51 // pred_check
              _
            $region54: #{tpu_custom_call.1} parent=51 // pred_check_branch
              %5095 = sbr.rel (0) target = $region56
            $region55: #{tpu_custom_call.1} parent=51 // pred_region
              // Predicated region
              $region75: #{tpu_custom_call.1} parent=55 // pred_check
                _
              $region76: #{tpu_custom_call.1} parent=55 // pred_check_branch
                %5188 = sbr.rel (0) target = $region78
              $region77: #{tpu_custom_call.1} parent=55 // pred_region
                %s5189 = sdiv.u32.pop %s5086, 22
                %s5190 = srem.u32.pop %s5086, 22
                // While loop
                $region79: #{tpu_custom_call.1} parent=77 // loop_pre_header
                  _
                $region80: #{tpu_custom_call.1} parent=77 // loop_header
                  %s5192 = sphi 0, %s5194
                  %p5193 = scmp.ge.s32.totalorder %s5192, %s5189
                  %s5197 = sphi 0, %s5246
                  %s5198 = sphi %s5079, %s5249
                  %s5199 = sphi %s5090, %s5250
                $region81: #{tpu_custom_call.1} parent=77 // loop_header_branch
                  %5196 = sbr.rel (%p5193) target = $region85
                $region82: #{tpu_custom_call.1} parent=77 // loop_body
                  %v5200 = vld [vmem:[%s5198] sm:$0xff]
                  %5201 = vst [vmem:[%s5199] sm:$0xff] %v5200
                  %v5202 = vld [vmem:[%s5198 + $0x8] sm:$0xff]
                  %5203 = vst [vmem:[%s5199 + $0x8] sm:$0xff] %v5202
                  %v5204 = vld [vmem:[%s5198 + $0x10] sm:$0xff]
                  %5205 = vst [vmem:[%s5199 + $0x10] sm:$0xff] %v5204
                  %v5206 = vld [vmem:[%s5198 + $0x18] sm:$0xff]
                  %5207 = vst [vmem:[%s5199 + $0x18] sm:$0xff] %v5206
                  %v5208 = vld [vmem:[%s5198 + $0x20] sm:$0xff]
                  %5209 = vst [vmem:[%s5199 + $0x20] sm:$0xff] %v5208
                  %v5210 = vld [vmem:[%s5198 + $0x28] sm:$0xff]
                  %5211 = vst [vmem:[%s5199 + $0x28] sm:$0xff] %v5210
                  %v5212 = vld [vmem:[%s5198 + $0x30] sm:$0xff]
                  %5213 = vst [vmem:[%s5199 + $0x30] sm:$0xff] %v5212
                  %v5214 = vld [vmem:[%s5198 + $0x38] sm:$0xff]
                  %5215 = vst [vmem:[%s5199 + $0x38] sm:$0xff] %v5214
                  %v5216 = vld [vmem:[%s5198 + $0x40] sm:$0xff]
                  %5217 = vst [vmem:[%s5199 + $0x40] sm:$0xff] %v5216
                  %v5218 = vld [vmem:[%s5198 + $0x48] sm:$0xff]
                  %5219 = vst [vmem:[%s5199 + $0x48] sm:$0xff] %v5218
                  %v5220 = vld [vmem:[%s5198 + $0x50] sm:$0xff]
                  %5221 = vst [vmem:[%s5199 + $0x50] sm:$0xff] %v5220
                  %v5222 = vld [vmem:[%s5198 + $0x58] sm:$0xff]
                  %5223 = vst [vmem:[%s5199 + $0x58] sm:$0xff] %v5222
                  %v5224 = vld [vmem:[%s5198 + $0x60] sm:$0xff]
                  %5225 = vst [vmem:[%s5199 + $0x60] sm:$0xff] %v5224
                  %v5226 = vld [vmem:[%s5198 + $0x68] sm:$0xff]
                  %5227 = vst [vmem:[%s5199 + $0x68] sm:$0xff] %v5226
                  %v5228 = vld [vmem:[%s5198 + $0x70] sm:$0xff]
                  %5229 = vst [vmem:[%s5199 + $0x70] sm:$0xff] %v5228
                  %v5230 = vld [vmem:[%s5198 + $0x78] sm:$0xff]
                  %5231 = vst [vmem:[%s5199 + $0x78] sm:$0xff] %v5230
                  %v5232 = vld [vmem:[%s5198 + $0x80] sm:$0xff]
                  %5233 = vst [vmem:[%s5199 + $0x80] sm:$0xff] %v5232
                  %v5234 = vld [vmem:[%s5198 + $0x88] sm:$0xff]
                  %5235 = vst [vmem:[%s5199 + $0x88] sm:$0xff] %v5234
                  %v5236 = vld [vmem:[%s5198 + $0x90] sm:$0xff]
                  %5237 = vst [vmem:[%s5199 + $0x90] sm:$0xff] %v5236
                  %v5238 = vld [vmem:[%s5198 + $0x98] sm:$0xff]
                  %5239 = vst [vmem:[%s5199 + $0x98] sm:$0xff] %v5238
                  %v5240 = vld [vmem:[%s5198 + $0xa0] sm:$0xff]
                  %5241 = vst [vmem:[%s5199 + $0xa0] sm:$0xff] %v5240
                  %v5242 = vld [vmem:[%s5198 + $0xa8] sm:$0xff]
                  %5243 = vst [vmem:[%s5199 + $0xa8] sm:$0xff] %v5242
                  %s5244 = sadd.s32 1, %s5197
                  %p5245 = scmp.ge.s32.totalorder %s5244, %s5189
                  %s5246 = scalar_select %p5245, 0, %s5244
                  %s5247 = smul.u32 %s5246, 176
                  %s5248 = smul.u32 %s5246, 176
                  %s5249 = scalar_lea.vmem %s5079, %s5247 [#allocation4]
                  %s5250 = scalar_lea.vmem %s5090, %s5248
                $region83: #{tpu_custom_call.1} parent=77 // loop_footer
                  %s5194 = sadd.s32 %s5192, 1
                $region84: #{tpu_custom_call.1} parent=77 // loop_footer_branch
                  %5191 = sbr.rel target = $region80
                $region85: #{tpu_custom_call.1} parent=77 // loop_exit
                  _
                %s5251 = sdiv.u32.pop %s5086, 22
                %s5252 = srem.u32.pop %s5086, 22
                %s5253 = smul.u32 %s5251, 22
                %s5254 = smul.u32 8, %s5253
                %s5255 = scalar_lea.vmem %s5079, %s5254 [#allocation4]
                %s5256 = smul.u32 8, %s5253
                %s5257 = scalar_lea.vmem %s5090, %s5256
                // While loop
                $region86: #{tpu_custom_call.1} parent=77 // loop_pre_header
                  _
                $region87: #{tpu_custom_call.1} parent=77 // loop_header
                  %s5259 = sphi 0, %s5261
                  %p5260 = scmp.ge.s32.totalorder %s5259, %s5252
                  %s5264 = sphi 0, %s5271
                  %s5265 = sphi %s5255, %s5274
                  %s5266 = sphi %s5257, %s5275
                $region88: #{tpu_custom_call.1} parent=77 // loop_header_branch
                  %5263 = sbr.rel (%p5260) target = $region92
                $region89: #{tpu_custom_call.1} parent=77 // loop_body
                  %v5267 = vld [vmem:[%s5265] sm:$0xff]
                  %5268 = vst [vmem:[%s5266] sm:$0xff] %v5267
                  %s5269 = sadd.s32 1, %s5264
                  %p5270 = scmp.ge.s32.totalorder %s5269, %s5252
                  %s5271 = scalar_select %p5270, 0, %s5269
                  %s5272 = smul.u32 %s5271, 8
                  %s5273 = smul.u32 %s5271, 8
                  %s5274 = scalar_lea.vmem %s5255, %s5272 [#allocation4]
                  %s5275 = scalar_lea.vmem %s5257, %s5273
                $region90: #{tpu_custom_call.1} parent=77 // loop_footer
                  %s5261 = sadd.s32 %s5259, 1
                $region91: #{tpu_custom_call.1} parent=77 // loop_footer_branch
                  %5258 = sbr.rel target = $region87
                $region92: #{tpu_custom_call.1} parent=77 // loop_exit
                  _
              $region78: #{tpu_custom_call.1} parent=55 // pred_fallthru
                _
              // Predicated region
              $region93: #{tpu_custom_call.1} parent=55 // pred_check
                _
              $region94: #{tpu_custom_call.1} parent=55 // pred_check_branch
                %5277 = sbr.rel target = $region96
              $region95: #{tpu_custom_call.1} parent=55 // pred_region
                _
              $region96: #{tpu_custom_call.1} parent=55 // pred_fallthru
                _
            $region56: #{tpu_custom_call.1} parent=51 // pred_fallthru
              _
            // Predicated region
            $region57: #{tpu_custom_call.1} parent=51 // pred_check
              _
            $region58: #{tpu_custom_call.1} parent=51 // pred_check_branch
              %5097 = sbr.rel target = $region60
            $region59: #{tpu_custom_call.1} parent=51 // pred_region
              %s5099 = ssub.s32 256, 1
              %s5100 = sdiv.u32.pop %s5086, 22
              %s5101 = srem.u32.pop %s5086, 22
              // While loop
              $region61: #{tpu_custom_call.1} parent=59 // loop_pre_header
                _
              $region62: #{tpu_custom_call.1} parent=59 // loop_header
                %s5103 = sphi 0, %s5105
                %p5104 = scmp.ge.s32.totalorder %s5103, %s5100
                %s5108 = sphi 0, %s5157
                %s5109 = sphi %s5079, %s5160
                %s5110 = sphi %s5090, %s5161
              $region63: #{tpu_custom_call.1} parent=59 // loop_header_branch
                %5107 = sbr.rel (%p5104) target = $region67
              $region64: #{tpu_custom_call.1} parent=59 // loop_body
                %v5111 = vld [vmem:[%s5109] sm:%s5099]
                %5112 = vst [vmem:[%s5110] sm:%s5099] %v5111
                %v5113 = vld [vmem:[%s5109 + $0x8] sm:%s5099]
                %5114 = vst [vmem:[%s5110 + $0x8] sm:%s5099] %v5113
                %v5115 = vld [vmem:[%s5109 + $0x10] sm:%s5099]
                %5116 = vst [vmem:[%s5110 + $0x10] sm:%s5099] %v5115
                %v5117 = vld [vmem:[%s5109 + $0x18] sm:%s5099]
                %5118 = vst [vmem:[%s5110 + $0x18] sm:%s5099] %v5117
                %v5119 = vld [vmem:[%s5109 + $0x20] sm:%s5099]
                %5120 = vst [vmem:[%s5110 + $0x20] sm:%s5099] %v5119
                %v5121 = vld [vmem:[%s5109 + $0x28] sm:%s5099]
                %5122 = vst [vmem:[%s5110 + $0x28] sm:%s5099] %v5121
                %v5123 = vld [vmem:[%s5109 + $0x30] sm:%s5099]
                %5124 = vst [vmem:[%s5110 + $0x30] sm:%s5099] %v5123
                %v5125 = vld [vmem:[%s5109 + $0x38] sm:%s5099]
                %5126 = vst [vmem:[%s5110 + $0x38] sm:%s5099] %v5125
                %v5127 = vld [vmem:[%s5109 + $0x40] sm:%s5099]
                %5128 = vst [vmem:[%s5110 + $0x40] sm:%s5099] %v5127
                %v5129 = vld [vmem:[%s5109 + $0x48] sm:%s5099]
                %5130 = vst [vmem:[%s5110 + $0x48] sm:%s5099] %v5129
                %v5131 = vld [vmem:[%s5109 + $0x50] sm:%s5099]
                %5132 = vst [vmem:[%s5110 + $0x50] sm:%s5099] %v5131
                %v5133 = vld [vmem:[%s5109 + $0x58] sm:%s5099]
                %5134 = vst [vmem:[%s5110 + $0x58] sm:%s5099] %v5133
                %v5135 = vld [vmem:[%s5109 + $0x60] sm:%s5099]
                %5136 = vst [vmem:[%s5110 + $0x60] sm:%s5099] %v5135
                %v5137 = vld [vmem:[%s5109 + $0x68] sm:%s5099]
                %5138 = vst [vmem:[%s5110 + $0x68] sm:%s5099] %v5137
                %v5139 = vld [vmem:[%s5109 + $0x70] sm:%s5099]
                %5140 = vst [vmem:[%s5110 + $0x70] sm:%s5099] %v5139
                %v5141 = vld [vmem:[%s5109 + $0x78] sm:%s5099]
                %5142 = vst [vmem:[%s5110 + $0x78] sm:%s5099] %v5141
                %v5143 = vld [vmem:[%s5109 + $0x80] sm:%s5099]
                %5144 = vst [vmem:[%s5110 + $0x80] sm:%s5099] %v5143
                %v5145 = vld [vmem:[%s5109 + $0x88] sm:%s5099]
                %5146 = vst [vmem:[%s5110 + $0x88] sm:%s5099] %v5145
                %v5147 = vld [vmem:[%s5109 + $0x90] sm:%s5099]
                %5148 = vst [vmem:[%s5110 + $0x90] sm:%s5099] %v5147
                %v5149 = vld [vmem:[%s5109 + $0x98] sm:%s5099]
                %5150 = vst [vmem:[%s5110 + $0x98] sm:%s5099] %v5149
                %v5151 = vld [vmem:[%s5109 + $0xa0] sm:%s5099]
                %5152 = vst [vmem:[%s5110 + $0xa0] sm:%s5099] %v5151
                %v5153 = vld [vmem:[%s5109 + $0xa8] sm:%s5099]
                %5154 = vst [vmem:[%s5110 + $0xa8] sm:%s5099] %v5153
                %s5155 = sadd.s32 1, %s5108
                %p5156 = scmp.ge.s32.totalorder %s5155, %s5100
                %s5157 = scalar_select %p5156, 0, %s5155
                %s5158 = smul.u32 %s5157, 176
                %s5159 = smul.u32 %s5157, 176
                %s5160 = scalar_lea.vmem %s5079, %s5158 [#allocation4]
                %s5161 = scalar_lea.vmem %s5090, %s5159
              $region65: #{tpu_custom_call.1} parent=59 // loop_footer
                %s5105 = sadd.s32 %s5103, 1
              $region66: #{tpu_custom_call.1} parent=59 // loop_footer_branch
                %5102 = sbr.rel target = $region62
              $region67: #{tpu_custom_call.1} parent=59 // loop_exit
                _
              %s5162 = sdiv.u32.pop %s5086, 22
              %s5163 = srem.u32.pop %s5086, 22
              %s5164 = smul.u32 %s5162, 22
              %s5165 = smul.u32 8, %s5164
              %s5166 = scalar_lea.vmem %s5079, %s5165 [#allocation4]
              %s5167 = smul.u32 8, %s5164
              %s5168 = scalar_lea.vmem %s5090, %s5167
              // While loop
              $region68: #{tpu_custom_call.1} parent=59 // loop_pre_header
                _
              $region69: #{tpu_custom_call.1} parent=59 // loop_header
                %s5170 = sphi 0, %s5172
                %p5171 = scmp.ge.s32.totalorder %s5170, %s5163
                %s5175 = sphi 0, %s5182
                %s5176 = sphi %s5166, %s5185
                %s5177 = sphi %s5168, %s5186
              $region70: #{tpu_custom_call.1} parent=59 // loop_header_branch
                %5174 = sbr.rel (%p5171) target = $region74
              $region71: #{tpu_custom_call.1} parent=59 // loop_body
                %v5178 = vld [vmem:[%s5176] sm:%s5099]
                %5179 = vst [vmem:[%s5177] sm:%s5099] %v5178
                %s5180 = sadd.s32 1, %s5175
                %p5181 = scmp.ge.s32.totalorder %s5180, %s5163
                %s5182 = scalar_select %p5181, 0, %s5180
                %s5183 = smul.u32 %s5182, 8
                %s5184 = smul.u32 %s5182, 8
                %s5185 = scalar_lea.vmem %s5166, %s5183 [#allocation4]
                %s5186 = scalar_lea.vmem %s5168, %s5184
              $region72: #{tpu_custom_call.1} parent=59 // loop_footer
                %s5172 = sadd.s32 %s5170, 1
              $region73: #{tpu_custom_call.1} parent=59 // loop_footer_branch
                %5169 = sbr.rel target = $region69
              $region74: #{tpu_custom_call.1} parent=59 // loop_exit
                _
            $region60: #{tpu_custom_call.1} parent=51 // pred_fallthru
              _
          $region52: #{tpu_custom_call.1} parent=47 // pred_fallthru
            _
          %5278 = vnop
        $region48: #{tpu_custom_call.1} parent=39 // pred_fallthru
          _
      $region40: #{tpu_custom_call.1} parent=5 // pred_fallthru
        _
      %p5279 = scmp.le.s32.totalorder 2, %s14
      // Predicated region
      $region97: #{tpu_custom_call.1} parent=5 // pred_check
        %p5280 = pneg %p5279
      $region98: #{tpu_custom_call.1} parent=5 // pred_check_branch
        %5282 = sbr.rel (%p5280) target = $region100
      $region99: #{tpu_custom_call.1} parent=5 // pred_region
        %s5283 = ssub.s32 %s14, 2
        // Predicated region
        $region101: #{tpu_custom_call.1} parent=99 // pred_check
          %p5284 = pneg %p163
        $region102: #{tpu_custom_call.1} parent=99 // pred_check_branch
          %5286 = sbr.rel (%p5284) target = $region104
        $region103: #{tpu_custom_call.1} parent=99 // pred_region
          %s5287 = sand.u32 %s148, 1
          %s5288 = sand.u32 %s148, 1
          %s5289 = smul.addr %s5288, 176
          %s5290 = scalar_lea.vmem [#allocation4], %s5289
        $region104: #{tpu_custom_call.1} parent=99 // pred_fallthru
          _
      $region100: #{tpu_custom_call.1} parent=5 // pred_fallthru
        _
    $region6: #{tpu_custom_call.1} parent=1 // loop_footer
      %s18 = sadd.s32 1, %s14
    $region7: #{tpu_custom_call.1} parent=1 // loop_footer_branch
      %13 = sbr.rel target = $region3
    $region8: #{tpu_custom_call.1} parent=1 // loop_exit
      _
    %5291 = vsyncpa [#allocation3], 1
    %s5292 = scalar_lea.sflag [#allocation3], 1
    %5293 = vsyncpa %s5292, 1

</llo_original>
